<compile_context>
chip_gen: v5e
topology: v5e:2x2
jax: 0.10.0
libtpu: 0.0.40
codegen_flags: <defaults>
</compile_context>

<pallas_src>
import functools

import jax
import jax.numpy as jnp
import numpy as np
from jax.experimental import pallas as pl
from jax.experimental.pallas import tpu as pltpu


# --------------------------------------------------------------------------
# Generation-aware VMEM budgets
# --------------------------------------------------------------------------
def _vmem_budget():
    """Return (hidden-block budget bytes, vmem_limit_bytes) per TPU generation."""
    cap = None
    try:
        cap = getattr(pltpu.get_tpu_info(), "vmem_capacity_bytes", None)
    except Exception:
        cap = None  # detection failure -> conservative (v7x-safe) defaults
    if cap is not None and cap >= 100 * 1024 * 1024:        # v5e / v6e: 128 MiB
        return 28 * 1024 * 1024, 96 * 1024 * 1024
    return 14 * 1024 * 1024, 40 * 1024 * 1024               # v7x: 64 MiB / TC


def _pick_tiles(B, S, H, hid_itemsize, block_budget):
    """Pick (b_chunk, h_chunk).

    h_chunk: the full H whenever the double-buffered hidden block plus the f32
    accumulator fits the budget; otherwise the largest multiple-of-128 divisor
    of H that does.  b_chunk: grown over divisors of B (keeping >=2 grid steps
    on the pair axis for v7x megacore when B >= 2) until each step moves
    ~2 MiB of hidden bytes, amortizing the fixed per-step overhead.
    """
    def cost(bc, hk):
        hid_block = 2 * bc * S * hk * hid_itemsize           # one [2,bc,S,hk] block
        acc_block = 2 * bc * S * hk * 4                      # persistent f32 accumulator
        return 2 * hid_block + acc_block                     # input double-buffered

    if H % 128 != 0 or cost(1, H) <= block_budget:
        h_chunk = H
    else:
        h_chunk = 128
        for hk in range(128, H, 128):
            if H % hk == 0 and cost(1, hk) <= block_budget:
                h_chunk = hk

    b_chunk = 1
    target_hidden_bytes = 2 * 1024 * 1024
    for bc in range(1, B + 1):
        if B % bc != 0:
            continue
        if cost(bc, h_chunk) > block_budget:
            break
        if bc > 1 and B // bc < 2:
            break
        b_chunk = bc
        if 2 * bc * S * h_chunk * hid_itemsize >= target_hidden_bytes:
            break
    return b_chunk, h_chunk


# --------------------------------------------------------------------------
# Pallas kernel: streamed v_head projection + pad/divergence/loss epilogue
# --------------------------------------------------------------------------
def _reward_kernel(hid_ref, w_ref, cid_ref, rid_ref, out_ref, acc_ref,
                   *, pad_id, npad, S, nk):
    k = pl.program_id(1)

    # Fully resident v_head weight; select this H chunk via leading-dim index.
    w = w_ref[0] if nk == 1 else w_ref[k]                    # [1, Hk]
    wb = w.reshape(1, 1, 1, w.shape[-1])                     # [1, 1, 1, Hk]

    # Hot loop: pure VPU cast+mul+add into the persistent f32 accumulator.
    # The cross-lane reduce is deferred to the finalize (once per pair-block).
    part = hid_ref[...].astype(jnp.float32) * wb             # [2, bc, S, Hk]

    @pl.when(k == 0)
    def _init():
        acc_ref[...] = part

    if nk > 1:
        @pl.when(k > 0)
        def _accumulate():
            acc_ref[...] += part

    @pl.when(k == nk - 1)
    def _finalize():
        bc = cid_ref.shape[0]
        rew = jnp.sum(acc_ref[...], axis=3)                  # [2, bc, S] f32
        c_rew = rew[0]                                       # [bc, S]
        r_rew = rew[1]                                       # [bc, S]
        cid = cid_ref[:, 0, :]                               # [bc, S] int32
        rid = rid_ref[:, 0, :]

        idx = jax.lax.broadcasted_iota(jnp.int32, (bc, S), 1)

        def kth_pad_index(ids):
            # index of the npad-th (0-based) PAD token, or S if < npad+1 pads
            avail = ids == pad_id
            kidx = jnp.min(jnp.where(avail, idx, S), axis=1, keepdims=True)
            for _ in range(npad):                            # npad is a static int
                avail = jnp.logical_and(avail, idx != kidx)
                kidx = jnp.min(jnp.where(avail, idx, S), axis=1, keepdims=True)
            return kidx                                      # [bc, 1] int32

        c_ind = kth_pad_index(cid)                           # [bc, 1]
        r_ind_pad = kth_pad_index(rid)                       # [bc, 1]

        div = cid != rid
        has_div = jnp.max(div.astype(jnp.int32), axis=1, keepdims=True) > 0
        first_div = jnp.min(jnp.where(div, idx, S), axis=1, keepdims=True)

        r_ind = jnp.where(has_div, r_ind_pad, c_ind)
        end_ind = jnp.where(has_div, jnp.maximum(c_ind, r_ind_pad), S)
        div_ind = jnp.where(has_div, first_div, S - 1)

        # end scores (replicate torch negative-index wraparound for ind == 0)
        c_sel = jnp.where(c_ind - 1 < 0, c_ind - 1 + S, c_ind - 1)
        r_sel = jnp.where(r_ind - 1 < 0, r_ind - 1 + S, r_ind - 1)
        cms = jnp.sum(jnp.where(idx == c_sel, c_rew, 0.0), axis=1, keepdims=True)
        rms = jnp.sum(jnp.where(idx == r_sel, r_rew, 0.0), axis=1, keepdims=True)

        # pairwise loss: mean over [div_ind, end_ind) of softplus(rejected - chosen).
        # (cnt == 0 -> NaN, mirroring the torch reference's empty-slice .mean())
        trunc = jnp.logical_and(idx >= div_ind, idx < end_ind)
        diff = r_rew - c_rew
        sp = jnp.where(diff > 0,
                       diff + jnp.log1p(jnp.exp(-diff)),
                       jnp.log1p(jnp.exp(diff)))             # stable softplus
        cnt = jnp.sum(trunc.astype(jnp.float32), axis=1, keepdims=True)
        loss_b = jnp.sum(jnp.where(trunc, sp, 0.0), axis=1, keepdims=True) / cnt

        # lane-dense packed output rows: [loss, chosen_end, rejected_end, 0, ...]
        row = jax.lax.broadcasted_iota(jnp.int32, (bc, 8, 128), 1)
        lane = jax.lax.broadcasted_iota(jnp.int32, (bc, 8, 128), 2)
        zeros = jnp.zeros((bc, 8, 128), jnp.float32)
        packed = (jnp.where(jnp.logical_and(row == 0, lane == 0), loss_b[:, :, None], zeros)
                  + jnp.where(jnp.logical_and(row == 0, lane == 1), cms[:, :, None], zeros)
                  + jnp.where(jnp.logical_and(row == 0, lane == 2), rms[:, :, None], zeros))
        out_ref[...] = packed


def reward_model_head(hidden, v_head_w, chosen_ids, rejected_ids, pad_id,
                      num_padding_at_beginning, b_chunk=None, h_chunk=None):
    """hidden: [2*bs, S, H] (bf16/f32); v_head_w: [1, H]; ids: [bs, S] int."""
    TB, S, H = hidden.shape
    B = TB // 2
    assert TB == 2 * B

    block_budget, vmem_limit = _vmem_budget()
    auto_b, auto_h = _pick_tiles(B, S, H, jnp.dtype(hidden.dtype).itemsize,
                                 block_budget)
    if h_chunk is None:
        h_chunk = auto_h
    if b_chunk is None:
        b_chunk = auto_b
    assert H % h_chunk == 0 and B % b_chunk == 0
    nk = H // h_chunk
    nb = B // b_chunk

    hid4 = hidden.reshape(2, B, S, H)              # free view: [0]=chosen, [1]=rejected
    cid3 = chosen_ids.astype(jnp.int32).reshape(B, 1, S)
    rid3 = rejected_ids.astype(jnp.int32).reshape(B, 1, S)
    w3 = v_head_w.astype(jnp.float32).reshape(nk, 1, h_chunk)   # resident chunk table

    kernel = functools.partial(_reward_kernel, pad_id=int(pad_id),
                               npad=int(num_padding_at_beginning), S=S, nk=nk)

    out = pl.pallas_call(
        kernel,
        out_shape=jax.ShapeDtypeStruct((B, 8, 128), jnp.float32),
        grid_spec=pltpu.PrefetchScalarGridSpec(
            num_scalar_prefetch=0,
            grid=(nb, nk),
            in_specs=[
                # hidden pair block: chosen+rejected rows for b_chunk pairs, one H chunk
                pl.BlockSpec((2, b_chunk, S, h_chunk), lambda b, k: (0, b, 0, k)),
                # fully resident v_head weight chunk table (fetched once)
                pl.BlockSpec((nk, 1, h_chunk), lambda b, k: (0, 0, 0)),
                # token ids for the b_chunk pairs (re-fetched only when b changes)
                pl.BlockSpec((b_chunk, 1, S), lambda b, k: (b, 0, 0)),
                pl.BlockSpec((b_chunk, 1, S), lambda b, k: (b, 0, 0)),
            ],
            out_specs=pl.BlockSpec((b_chunk, 8, 128), lambda b, k: (b, 0, 0)),
            scratch_shapes=[pltpu.VMEM((2, b_chunk, S, h_chunk), jnp.float32)],
        ),
        compiler_params=pltpu.CompilerParams(
            dimension_semantics=("parallel", "arbitrary"),
            vmem_limit_bytes=vmem_limit,
        ),
    )(hid4, w3, cid3, rid3)

    return {
        "loss": jnp.mean(out[:, 0, 0]),
        "chosen_mean_scores": out[:, 0, 1],
        "rejected_mean_scores": out[:, 0, 2],
    }


# --------------------------------------------------------------------------
# Synthetic deterministic "base model" (glue, plain JAX) — emits bf16 hidden
# --------------------------------------------------------------------------
def synthetic_base_model(input_ids, emb, w1, b1):
    x = emb[input_ids]                               # [2B, S, H]
    return jnp.tanh(x @ w1 + b1).astype(jnp.bfloat16)


# --------------------------------------------------------------------------
# Plain-numpy reference (mirrors the torch forward exactly)
# --------------------------------------------------------------------------
def reference(hidden_f64, v_head_w, chosen, rejected, pad_id, npad):
    rewards = hidden_f64 @ np.asarray(v_head_w, np.float64).reshape(-1)
    chosen = np.asarray(chosen)
    rejected = np.asarray(rejected)
    B, S = chosen.shape
    c_rew, r_rew = rewards[:B], rewards[B:]
    loss = 0.0
    cms, rms = [], []
    for i in range(B):
        cid, rid = chosen[i], rejected[i]
        cr, rr = c_rew[i], r_rew[i]
        c_inds = np.nonzero(cid == pad_id)[0]
        c_ind = int(c_inds[npad]) if len(c_inds) > npad else S
        divs = np.nonzero(cid != rid)[0]
        if len(divs) == 0:
            end_ind, div_ind, r_ind = S, S - 1, c_ind
        else:
            r_inds = np.nonzero(rid == pad_id)[0]
            r_ind = int(r_inds[npad]) if len(r_inds) > npad else S
            end_ind, div_ind = max(c_ind, r_ind), int(divs[0])
        x = rr[div_ind:end_ind] - cr[div_ind:end_ind]
        loss += np.mean(np.log1p(np.exp(-np.abs(x))) + np.maximum(x, 0.0))
        cms.append(cr[c_ind - 1])
        rms.append(rr[r_ind - 1])
    return loss / B, np.array(cms), np.array(rms)


if __name__ == "__main__":
    V, H, S, B = 32, 512, 128, 4
    PAD_ID = 0
    NUM_PADDING_AT_BEGINNING = 0

    key = jax.random.PRNGKey(0)
    k1, k2, k3 = jax.random.split(key, 3)
    emb = 0.1 * jax.random.normal(k1, (V, H), jnp.float32)
    w1 = 0.05 * jax.random.normal(k2, (H, H), jnp.float32)
    b1 = jnp.zeros((H,), jnp.float32)
    v_head_w = 0.1 * jax.random.normal(k3, (1, H), jnp.float32)   # nn.Linear(H,1,bias=False)

    # Deterministic chosen/rejected pairs exercising pads, divergence,
    # an un-padded rejected row, and a no-divergence pair.
    rng = np.random.RandomState(0)
    chosen_np = np.zeros((B, S), np.int32)
    rejected_np = np.zeros((B, S), np.int32)
    p = rng.randint(1, V, 10)                     # pair 0: shared prompt, both padded
    chosen_np[0, :10] = p; chosen_np[0, 10:50] = rng.randint(1, V, 40)
    rejected_np[0, :10] = p; rejected_np[0, 10:35] = rng.randint(1, V, 25)
    p = rng.randint(1, V, 20)                     # pair 1: rejected has no pad
    chosen_np[1, :20] = p; chosen_np[1, 20:80] = rng.randint(1, V, 60)
    rejected_np[1, :20] = p; rejected_np[1, 20:] = rng.randint(1, V, S - 20)
    p = rng.randint(1, V, 30)                     # pair 2: chosen == rejected
    chosen_np[2, :30] = p
    rejected_np[2, :30] = p
    p = rng.randint(1, V, 16)                     # pair 3: ordinary divergent pair
    chosen_np[3, :16] = p; chosen_np[3, 16:70] = rng.randint(1, V, 54)
    rejected_np[3, :16] = p; rejected_np[3, 16:45] = rng.randint(1, V, 29)

    chosen_ids = jnp.asarray(chosen_np)
    rejected_ids = jnp.asarray(rejected_np)
    input_ids = jnp.concatenate([chosen_ids, rejected_ids], axis=0)   # [2B, S]

    hidden = synthetic_base_model(input_ids, emb, w1, b1)             # [2B, S, H] bf16

    out = reward_model_head(hidden, v_head_w, chosen_ids, rejected_ids,
                            PAD_ID, NUM_PADDING_AT_BEGINNING)
    jax.block_until_ready(out)

    hid_f64 = np.array(hidden.astype(jnp.float32), dtype=np.float64)
    ref_loss, ref_cms, ref_rms = reference(hid_f64, np.array(v_head_w),
                                           chosen_np, rejected_np, PAD_ID,
                                           NUM_PADDING_AT_BEGINNING)

    assert np.allclose(np.asarray(out["loss"]), ref_loss,
                       atol=1e-4, rtol=1e-4), (out["loss"], ref_loss)
    assert np.allclose(np.asarray(out["chosen_mean_scores"]), ref_cms,
                       atol=1e-4, rtol=1e-4), (out["chosen_mean_scores"], ref_cms)
    assert np.allclose(np.asarray(out["rejected_mean_scores"]), ref_rms,
                       atol=1e-4, rtol=1e-4), (out["rejected_mean_scores"], ref_rms)

    print("KERNEL_OK")
</pallas_src>

<mosaic_0001>
module attributes {stable_mosaic.version = 11 : i64} {
  func.func @_reward_kernel(%arg0: i32, %arg1: i32, %arg2: memref<2x2x128x512xbf16, #tpu.memory_space<vmem>>, %arg3: memref<1x1x512xf32, #tpu.memory_space<vmem>>, %arg4: memref<2x1x128xi32, #tpu.memory_space<vmem>>, %arg5: memref<2x1x128xi32, #tpu.memory_space<vmem>>, %arg6: memref<2x8x128xf32, #tpu.memory_space<vmem>>, %arg7: memref<2x2x128x512xf32, #tpu.memory_space<vmem>>) attributes {dimension_semantics = [#tpu.dimension_semantics<parallel>, #tpu.dimension_semantics<arbitrary>], iteration_bounds = array<i64: 2, 1>, scalar_prefetch = 0 : i64, scratch_operands = 1 : i64, tpu.core_type = #tpu.core_type<tc>, window_params = [{transform_indices = @transform_0, window_bounds = array<i64: 2, 2, 128, 512>}, {pipeline_mode = #tpu.pipeline_mode<synchronous>, transform_indices = @transform_1, window_bounds = array<i64: 1, 1, 512>}, {transform_indices = @transform_2, window_bounds = array<i64: 2, 1, 128>}, {transform_indices = @transform_3, window_bounds = array<i64: 2, 1, 128>}, {transform_indices = @transform_4, window_bounds = array<i64: 2, 8, 128>}]} {
    %c0 = arith.constant 0 : index
    %c0_0 = arith.constant 0 : index
    %c0_1 = arith.constant 0 : index
    %0 = vector.load %arg3[%c0, %c0_0, %c0_1] : memref<1x1x512xf32, #tpu.memory_space<vmem>>, vector<1x1x512xf32>
    %1 = vector.shape_cast %0 : vector<1x1x512xf32> to vector<1x512xf32>
    %2 = vector.shape_cast %1 : vector<1x512xf32> to vector<1x1x1x512xf32>
    %c0_2 = arith.constant 0 : index
    %c0_3 = arith.constant 0 : index
    %c0_4 = arith.constant 0 : index
    %c0_5 = arith.constant 0 : index
    %3 = vector.load %arg2[%c0_2, %c0_3, %c0_4, %c0_5] : memref<2x2x128x512xbf16, #tpu.memory_space<vmem>>, vector<2x2x128x512xbf16>
    %4 = arith.extf %3 : vector<2x2x128x512xbf16> to vector<2x2x128x512xf32>
    %5 = vector.broadcast %2 : vector<1x1x1x512xf32> to vector<2x2x128x512xf32>
    %6 = arith.mulf %4, %5 : vector<2x2x128x512xf32>
    %c0_i32 = arith.constant 0 : i32
    %7 = arith.cmpi eq, %arg1, %c0_i32 : i32
    %8 = arith.extui %7 : i1 to i32
    %c0_i32_6 = arith.constant 0 : i32
    %9 = arith.cmpi ne, %8, %c0_i32_6 : i32
    scf.if %9 {
      %c0_9 = arith.constant 0 : index
      %c0_10 = arith.constant 0 : index
      %c0_11 = arith.constant 0 : index
      %c0_12 = arith.constant 0 : index
      %13 = vector.load %arg7[%c0_9, %c0_10, %c0_11, %c0_12] : memref<2x2x128x512xf32, #tpu.memory_space<vmem>>, vector<2x2x128x512xf32>
      tpu.vector_store %arg7[%c0_9, %c0_10, %c0_11, %c0_12], %6 {strides = array<i32>} : memref<2x2x128x512xf32, #tpu.memory_space<vmem>>, vector<2x2x128x512xf32>,
    } else {
    }
    %c0_i32_7 = arith.constant 0 : i32
    %10 = arith.cmpi eq, %arg1, %c0_i32_7 : i32
    %11 = arith.extui %10 : i1 to i32
    %c0_i32_8 = arith.constant 0 : i32
    %12 = arith.cmpi ne, %11, %c0_i32_8 : i32
    scf.if %12 {
      %c0_9 = arith.constant 0 : index
      %c0_10 = arith.constant 0 : index
      %c0_11 = arith.constant 0 : index
      %c0_12 = arith.constant 0 : index
      %13 = vector.load %arg7[%c0_9, %c0_10, %c0_11, %c0_12] : memref<2x2x128x512xf32, #tpu.memory_space<vmem>>, vector<2x2x128x512xf32>
      %cst = arith.constant dense<0.000000e+00> : vector<2x2x128xf32>
      %14 = vector.multi_reduction <add>, %13, %cst [3] : vector<2x2x128x512xf32> to vector<2x2x128xf32>
      %15 = vector.extract_strided_slice %14 {offsets = [0, 0, 0], sizes = [1, 2, 128], strides = [1, 1, 1]} : vector<2x2x128xf32> to vector<1x2x128xf32>
      %16 = vector.shape_cast %15 : vector<1x2x128xf32> to vector<2x128xf32>
      %17 = vector.extract_strided_slice %14 {offsets = [1, 0, 0], sizes = [1, 2, 128], strides = [1, 1, 1]} : vector<2x2x128xf32> to vector<1x2x128xf32>
      %18 = vector.shape_cast %17 : vector<1x2x128xf32> to vector<2x128xf32>
      %c0_13 = arith.constant 0 : index
      %c0_14 = arith.constant 0 : index
      %c0_15 = arith.constant 0 : index
      %19 = vector.load %arg4[%c0_13, %c0_14, %c0_15] : memref<2x1x128xi32, #tpu.memory_space<vmem>>, vector<2x1x128xi32>
      %20 = vector.shape_cast %19 : vector<2x1x128xi32> to vector<2x128xi32>
      %c0_16 = arith.constant 0 : index
      %c0_17 = arith.constant 0 : index
      %c0_18 = arith.constant 0 : index
      %21 = vector.load %arg5[%c0_16, %c0_17, %c0_18] : memref<2x1x128xi32, #tpu.memory_space<vmem>>, vector<2x1x128xi32>
      %22 = vector.shape_cast %21 : vector<2x1x128xi32> to vector<2x128xi32>
      %23 = tpu.iota {dimensions = array<i32: 1>} : vector<2x128xi32>
      %c0_i32_19 = arith.constant 0 : i32
      %24 = vector.broadcast %c0_i32_19 : i32 to vector<2x128xi32>
      %25 = arith.cmpi eq, %20, %24 : vector<2x128xi32>
      %c128_i32 = arith.constant 128 : i32
      %26 = vector.broadcast %c128_i32 : i32 to vector<2x128xi32>
      %27 = arith.select %25, %23, %26 : vector<2x128xi1>, vector<2x128xi32>
      %cst_20 = arith.constant dense<2147483647> : vector<2xi32>
      %28 = vector.multi_reduction <minsi>, %27, %cst_20 [1] : vector<2x128xi32> to vector<2xi32>
      %29 = vector.shape_cast %28 : vector<2xi32> to vector<2x1xi32>
      %c0_i32_21 = arith.constant 0 : i32
      %30 = vector.broadcast %c0_i32_21 : i32 to vector<2x128xi32>
      %31 = arith.cmpi eq, %22, %30 : vector<2x128xi32>
      %c128_i32_22 = arith.constant 128 : i32
      %32 = vector.broadcast %c128_i32_22 : i32 to vector<2x128xi32>
      %33 = arith.select %31, %23, %32 : vector<2x128xi1>, vector<2x128xi32>
      %cst_23 = arith.constant dense<2147483647> : vector<2xi32>
      %34 = vector.multi_reduction <minsi>, %33, %cst_23 [1] : vector<2x128xi32> to vector<2xi32>
      %35 = vector.shape_cast %34 : vector<2xi32> to vector<2x1xi32>
      %36 = arith.cmpi ne, %20, %22 : vector<2x128xi32>
      %37 = arith.extui %36 : vector<2x128xi1> to vector<2x128xi32>
      %cst_24 = arith.constant dense<-2147483648> : vector<2xi32>
      %38 = vector.multi_reduction <maxsi>, %37, %cst_24 [1] : vector<2x128xi32> to vector<2xi32>
      %39 = vector.shape_cast %38 : vector<2xi32> to vector<2x1xi32>
      %c0_i32_25 = arith.constant 0 : i32
      %40 = vector.broadcast %c0_i32_25 : i32 to vector<2x1xi32>
      %41 = arith.cmpi sgt, %39, %40 : vector<2x1xi32>
      %c128_i32_26 = arith.constant 128 : i32
      %42 = vector.broadcast %c128_i32_26 : i32 to vector<2x128xi32>
      %43 = arith.select %36, %23, %42 : vector<2x128xi1>, vector<2x128xi32>
      %cst_27 = arith.constant dense<2147483647> : vector<2xi32>
      %44 = vector.multi_reduction <minsi>, %43, %cst_27 [1] : vector<2x128xi32> to vector<2xi32>
      %45 = vector.shape_cast %44 : vector<2xi32> to vector<2x1xi32>
      %46 = arith.select %41, %35, %29 : vector<2x1xi1>, vector<2x1xi32>
      %47 = arith.maxsi %29, %35 : vector<2x1xi32>
      %c128_i32_28 = arith.constant 128 : i32
      %48 = vector.broadcast %c128_i32_28 : i32 to vector<2x1xi32>
      %49 = arith.select %41, %47, %48 : vector<2x1xi1>, vector<2x1xi32>
      %c127_i32 = arith.constant 127 : i32
      %50 = vector.broadcast %c127_i32 : i32 to vector<2x1xi32>
      %51 = arith.select %41, %45, %50 : vector<2x1xi1>, vector<2x1xi32>
      %c1_i32 = arith.constant 1 : i32
      %52 = vector.broadcast %c1_i32 : i32 to vector<2x1xi32>
      %53 = arith.subi %29, %52 : vector<2x1xi32>
      %c0_i32_29 = arith.constant 0 : i32
      %54 = vector.broadcast %c0_i32_29 : i32 to vector<2x1xi32>
      %55 = arith.cmpi slt, %53, %54 : vector<2x1xi32>
      %c1_i32_30 = arith.constant 1 : i32
      %56 = vector.broadcast %c1_i32_30 : i32 to vector<2x1xi32>
      %57 = arith.subi %29, %56 : vector<2x1xi32>
      %c128_i32_31 = arith.constant 128 : i32
      %58 = vector.broadcast %c128_i32_31 : i32 to vector<2x1xi32>
      %59 = arith.addi %57, %58 : vector<2x1xi32>
      %c1_i32_32 = arith.constant 1 : i32
      %60 = vector.broadcast %c1_i32_32 : i32 to vector<2x1xi32>
      %61 = arith.subi %29, %60 : vector<2x1xi32>
      %62 = arith.select %55, %59, %61 : vector<2x1xi1>, vector<2x1xi32>
      %c1_i32_33 = arith.constant 1 : i32
      %63 = vector.broadcast %c1_i32_33 : i32 to vector<2x1xi32>
      %64 = arith.subi %46, %63 : vector<2x1xi32>
      %c0_i32_34 = arith.constant 0 : i32
      %65 = vector.broadcast %c0_i32_34 : i32 to vector<2x1xi32>
      %66 = arith.cmpi slt, %64, %65 : vector<2x1xi32>
      %c1_i32_35 = arith.constant 1 : i32
      %67 = vector.broadcast %c1_i32_35 : i32 to vector<2x1xi32>
      %68 = arith.subi %46, %67 : vector<2x1xi32>
      %c128_i32_36 = arith.constant 128 : i32
      %69 = vector.broadcast %c128_i32_36 : i32 to vector<2x1xi32>
      %70 = arith.addi %68, %69 : vector<2x1xi32>
      %c1_i32_37 = arith.constant 1 : i32
      %71 = vector.broadcast %c1_i32_37 : i32 to vector<2x1xi32>
      %72 = arith.subi %46, %71 : vector<2x1xi32>
      %73 = arith.select %66, %70, %72 : vector<2x1xi1>, vector<2x1xi32>
      %74 = vector.broadcast %62 : vector<2x1xi32> to vector<2x128xi32>
      %75 = arith.cmpi eq, %23, %74 : vector<2x128xi32>
      %cst_38 = arith.constant 0.000000e+00 : f32
      %76 = vector.broadcast %cst_38 : f32 to vector<2x128xf32>
      %77 = arith.select %75, %16, %76 : vector<2x128xi1>, vector<2x128xf32>
      %cst_39 = arith.constant dense<0.000000e+00> : vector<2xf32>
      %78 = vector.multi_reduction <add>, %77, %cst_39 [1] : vector<2x128xf32> to vector<2xf32>
      %79 = vector.shape_cast %78 : vector<2xf32> to vector<2x1xf32>
      %80 = vector.broadcast %73 : vector<2x1xi32> to vector<2x128xi32>
      %81 = arith.cmpi eq, %23, %80 : vector<2x128xi32>
      %cst_40 = arith.constant 0.000000e+00 : f32
      %82 = vector.broadcast %cst_40 : f32 to vector<2x128xf32>
      %83 = arith.select %81, %18, %82 : vector<2x128xi1>, vector<2x128xf32>
      %cst_41 = arith.constant dense<0.000000e+00> : vector<2xf32>
      %84 = vector.multi_reduction <add>, %83, %cst_41 [1] : vector<2x128xf32> to vector<2xf32>
      %85 = vector.shape_cast %84 : vector<2xf32> to vector<2x1xf32>
      %86 = vector.broadcast %51 : vector<2x1xi32> to vector<2x128xi32>
      %87 = arith.cmpi sge, %23, %86 : vector<2x128xi32>
      %88 = vector.broadcast %49 : vector<2x1xi32> to vector<2x128xi32>
      %89 = arith.cmpi slt, %23, %88 : vector<2x128xi32>
      %90 = arith.andi %87, %89 : vector<2x128xi1>
      %91 = arith.subf %18, %16 : vector<2x128xf32>
      %cst_42 = arith.constant 0.000000e+00 : f32
      %92 = vector.broadcast %cst_42 : f32 to vector<2x128xf32>
      %93 = arith.cmpf ogt, %91, %92 : vector<2x128xf32>
      %cst_43 = arith.constant 0.000000e+00 : f32
      %94 = vector.broadcast %cst_43 : f32 to vector<2x128xf32>
      %95 = arith.subf %94, %91 : vector<2x128xf32>
      %96 = math.exp %95 : vector<2x128xf32>
      %97 = math.log1p %96 : vector<2x128xf32>
      %98 = arith.addf %91, %97 : vector<2x128xf32>
      %99 = math.exp %91 : vector<2x128xf32>
      %100 = math.log1p %99 : vector<2x128xf32>
      %101 = arith.select %93, %98, %100 : vector<2x128xi1>, vector<2x128xf32>
      %102 = arith.extui %90 : vector<2x128xi1> to vector<2x128xi32>
      %103 = arith.sitofp %102 : vector<2x128xi32> to vector<2x128xf32>
      %cst_44 = arith.constant dense<0.000000e+00> : vector<2xf32>
      %104 = vector.multi_reduction <add>, %103, %cst_44 [1] : vector<2x128xf32> to vector<2xf32>
      %105 = vector.shape_cast %104 : vector<2xf32> to vector<2x1xf32>
      %cst_45 = arith.constant 0.000000e+00 : f32
      %106 = vector.broadcast %cst_45 : f32 to vector<2x128xf32>
      %107 = arith.select %90, %101, %106 : vector<2x128xi1>, vector<2x128xf32>
      %cst_46 = arith.constant dense<0.000000e+00> : vector<2xf32>
      %108 = vector.multi_reduction <add>, %107, %cst_46 [1] : vector<2x128xf32> to vector<2xf32>
      %109 = vector.shape_cast %108 : vector<2xf32> to vector<2x1xf32>
      %110 = arith.divf %109, %105 : vector<2x1xf32>
      %111 = tpu.iota {dimensions = array<i32: 1>} : vector<2x8x128xi32>
      %112 = tpu.iota {dimensions = array<i32: 2>} : vector<2x8x128xi32>
      %cst_47 = arith.constant 0.000000e+00 : f32
      %113 = vector.broadcast %cst_47 : f32 to vector<2x8x128xf32>
      %c0_i32_48 = arith.constant 0 : i32
      %114 = vector.broadcast %c0_i32_48 : i32 to vector<2x8x128xi32>
      %115 = arith.cmpi eq, %111, %114 : vector<2x8x128xi32>
      %c0_i32_49 = arith.constant 0 : i32
      %116 = vector.broadcast %c0_i32_49 : i32 to vector<2x8x128xi32>
      %117 = arith.cmpi eq, %112, %116 : vector<2x8x128xi32>
      %118 = arith.andi %115, %117 : vector<2x8x128xi1>
      %119 = vector.shape_cast %110 : vector<2x1xf32> to vector<2x1x1xf32>
      %120 = vector.shape_cast %119 : vector<2x1x1xf32> to vector<2x1x1xf32>
      %121 = vector.broadcast %120 : vector<2x1x1xf32> to vector<2x8x128xf32>
      %122 = arith.select %118, %121, %113 : vector<2x8x128xi1>, vector<2x8x128xf32>
      %c0_i32_50 = arith.constant 0 : i32
      %123 = vector.broadcast %c0_i32_50 : i32 to vector<2x8x128xi32>
      %124 = arith.cmpi eq, %111, %123 : vector<2x8x128xi32>
      %c1_i32_51 = arith.constant 1 : i32
      %125 = vector.broadcast %c1_i32_51 : i32 to vector<2x8x128xi32>
      %126 = arith.cmpi eq, %112, %125 : vector<2x8x128xi32>
      %127 = arith.andi %124, %126 : vector<2x8x128xi1>
      %128 = vector.shape_cast %79 : vector<2x1xf32> to vector<2x1x1xf32>
      %129 = vector.shape_cast %128 : vector<2x1x1xf32> to vector<2x1x1xf32>
      %130 = vector.broadcast %129 : vector<2x1x1xf32> to vector<2x8x128xf32>
      %131 = arith.select %127, %130, %113 : vector<2x8x128xi1>, vector<2x8x128xf32>
      %132 = arith.addf %122, %131 : vector<2x8x128xf32>
      %c0_i32_52 = arith.constant 0 : i32
      %133 = vector.broadcast %c0_i32_52 : i32 to vector<2x8x128xi32>
      %134 = arith.cmpi eq, %111, %133 : vector<2x8x128xi32>
      %c2_i32 = arith.constant 2 : i32
      %135 = vector.broadcast %c2_i32 : i32 to vector<2x8x128xi32>
      %136 = arith.cmpi eq, %112, %135 : vector<2x8x128xi32>
      %137 = arith.andi %134, %136 : vector<2x8x128xi1>
      %138 = vector.shape_cast %85 : vector<2x1xf32> to vector<2x1x1xf32>
      %139 = vector.shape_cast %138 : vector<2x1x1xf32> to vector<2x1x1xf32>
      %140 = vector.broadcast %139 : vector<2x1x1xf32> to vector<2x8x128xf32>
      %141 = arith.select %137, %140, %113 : vector<2x8x128xi1>, vector<2x8x128xf32>
      %142 = arith.addf %132, %141 : vector<2x8x128xf32>
      %c0_53 = arith.constant 0 : index
      %c0_54 = arith.constant 0 : index
      %c0_55 = arith.constant 0 : index
      %143 = vector.load %arg6[%c0_53, %c0_54, %c0_55] : memref<2x8x128xf32, #tpu.memory_space<vmem>>, vector<2x8x128xf32>
      tpu.vector_store %arg6[%c0_53, %c0_54, %c0_55], %142 {strides = array<i32>} : memref<2x8x128xf32, #tpu.memory_space<vmem>>, vector<2x8x128xf32>,
    } else {
    }
    return
  }
  func.func @transform_0(%arg0: i32, %arg1: i32) -> (i32, i32, i32, i32) {
    %c0_i32 = arith.constant 0 : i32
    %c0_i32_0 = arith.constant 0 : i32
    %c0_i32_1 = arith.constant 0 : i32
    return %c0_i32, %arg0, %c0_i32_0, %arg1 : i32, i32, i32, i32
  }
  func.func @transform_1(%arg0: i32, %arg1: i32) -> (i32, i32, i32) {
    %c0_i32 = arith.constant 0 : i32
    %c0_i32_0 = arith.constant 0 : i32
    %c0_i32_1 = arith.constant 0 : i32
    %c0_i32_2 = arith.constant 0 : i32
    return %c0_i32, %c0_i32_0, %c0_i32_1 : i32, i32, i32
  }
  func.func @transform_2(%arg0: i32, %arg1: i32) -> (i32, i32, i32) {
    %c0_i32 = arith.constant 0 : i32
    %c0_i32_0 = arith.constant 0 : i32
    %c0_i32_1 = arith.constant 0 : i32
    return %arg0, %c0_i32, %c0_i32_0 : i32, i32, i32
  }
  func.func @transform_3(%arg0: i32, %arg1: i32) -> (i32, i32, i32) {
    %c0_i32 = arith.constant 0 : i32
    %c0_i32_0 = arith.constant 0 : i32
    %c0_i32_1 = arith.constant 0 : i32
    return %arg0, %c0_i32, %c0_i32_0 : i32, i32, i32
  }
  func.func @transform_4(%arg0: i32, %arg1: i32) -> (i32, i32, i32) {
    %c0_i32 = arith.constant 0 : i32
    %c0_i32_0 = arith.constant 0 : i32
    %c0_i32_1 = arith.constant 0 : i32
    return %arg0, %c0_i32, %c0_i32_0 : i32, i32, i32
  }
}

</mosaic_0001>

<llo_original>
// kernel: tpu_custom_call.1
$region0: #{tpu_custom_call.1}
  #allocation0 [shape = 'u32[]', space=smem, size = 0x4, offset = 0x4, fixed_abs, tag = 'smem constant byte address 0x4 - core index']
  #allocation1 [shape = 'u32[72,128]{1,0:T(1,128)}', space=vmem, size = 0x9000, scoped, tag = 'internal scratch']
  #allocation2 [shape = 'f32[2,2,128,512]{3,2,1,0:T(8,128)}', space=vmem, size = 0x100000, scoped, tag = 'scratch operand']
  #allocation11 [shape = 's32[]', space=sflag, size = 0x4, offset = 0, fixed_abs, tag = 'sflag constant byte address 0x0 - dummy sync flag']
  %s0 = inlined_call_operand.hbm [shape: bf16[2,4,128,512], index: 0, kind: input, shape index: {}]
  %s1 = inlined_call_operand.hbm [shape: f32[1,1,512], index: 1, kind: input, shape index: {}]
  %s2 = inlined_call_operand.hbm [shape: s32[4,1,128], index: 2, kind: input, shape index: {}]
  %s3 = inlined_call_operand.hbm [shape: s32[4,1,128], index: 3, kind: input, shape index: {}]
  %s4 = inlined_call_operand.hbm [shape: f32[4,8,128], index: 4, kind: output, shape index: {}]
  %s5 = sld [smem:[#allocation0]]
  $region69: #{tpu_custom_call.1} parent=0
    _
  %s7 = ssub.s32 1, %s5
  %s8 = scalar_select 0, %s7, %s5
  $region1: #{tpu_custom_call.1} parent=0
    #allocation3 [shape = 'u8[1048576]{0}', space=vmem, size = 0x100000, scoped, tag = 'input window, operand 0']
    #allocation4 [shape = 's32[2]{0}', space=sflag, size = 0x8, scoped, tag = 'scoped memory for tpu_custom_call.1']
    #allocation5 [shape = 's32[2]{0}', space=sflag, size = 0x8, scoped, tag = 'scoped memory for tpu_custom_call.1']
    #allocation6 [shape = 'u8[2048]{0}', space=vmem, size = 0x800, scoped, tag = 'input window, operand 1, single buffered']
    #allocation7 [shape = 's32[1]{0}', space=sflag, size = 0x4, scoped, tag = 'scoped memory for tpu_custom_call.1']
    #allocation8 [shape = 'u8[2048]{0}', space=vmem, size = 0x800, scoped, tag = 'input window, operand 2']
    #allocation9 [shape = 'u8[2048]{0}', space=vmem, size = 0x800, scoped, tag = 'input window, operand 3']
    #allocation10 [shape = 'u8[16384]{0}', space=vmem, size = 0x4000, scoped, tag = 'output window, operand 0']
    %9 = vsyncpa [#allocation4], 0
    %s10 = scalar_lea.sflag [#allocation4], 1
    %11 = vsyncpa %s10, 0
    %12 = vsyncpa [#allocation7], 0
    %13 = vsyncpa [#allocation5], 0
    %s14 = scalar_lea.sflag [#allocation5], 1
    %15 = vsyncpa %s14, 0
    loop: start=0, step=1, limit=4
    $region2: #{tpu_custom_call.1} parent=1 // loop_pre_header
      _
    $region3: #{tpu_custom_call.1} parent=1 // loop_header
      %s17 = sphi 0, %s21
      %p18 = scmp.ge.s32.totalorder %s17, 4
      %s24 = sphi 0, %s36
      %s25 = sphi 0, %s32
      %s26 = sphi 0, %s24
      %s27 = sphi 0, %s25
      %s28 = sphi 0, %s26
      %s29 = sphi 0, %s27
      %s41 = sphi 0, %s43
      %s44 = sphi 0, %s41
      %s45 = sphi 0, %s44
      %s61 = sphi 0, %s45
      %s65 = sphi 0, %s65
      %s67 = sphi 0, %s65
      %s68 = sphi 0, %s67
      %s82 = sphi 0, %s68
      %s88 = sphi 0, %s90
      %s91 = sphi 0, %s88
      %s92 = sphi 0, %s91
      %s108 = sphi 0, %s92
      %s114 = sphi 0, %s116
      %s117 = sphi 0, %s114
      %s118 = sphi 0, %s117
      %s134 = sphi 0, %s118
      %s140 = sphi 0, %s142
      %s143 = sphi 0, %s140
      %s144 = sphi 0, %s143
      %s160 = sphi 0, %s144
    $region4: #{tpu_custom_call.1} parent=1 // loop_header_branch
      %20 = sbr.rel (%p18) target = $region8
    $region5: #{tpu_custom_call.1} parent=1 // loop_body
      %s22 = ssub.s32 %s17, 1
      %s23 = ssub.s32 %s17, 2
      %s30 = sadd.s32 1, %s25
      %p31 = scmp.ge.s32.totalorder %s30, 1
      %s32 = scalar_select %p31, 0, %s30
      %s33 = sadd.s32 1, %s24
      %s34 = scalar_select %p31, %s33, %s24
      %p35 = scmp.ge.s32.totalorder %s34, 2
      %s36 = scalar_select %p35, 0, %s34
      %s37 = ssub.s32 %s24, %s36
      %s38 = ssub.s32 %s25, %s32
      %s39 = sor.u32 %s37, %s38
      %p40 = scmp.eq.s32.totalorder %s39, 0
      %s42 = sadd.s32 %s41, 1
      %s43 = scalar_select %p40, %s41, %s42
      %p46 = pneg %p40
      %p47 = scmp.eq.s32.totalorder %s17, 1
      %p48 = por %p46, %p47
      %p49 = scmp.ne.s32.totalorder %s41, %s44
      %p50 = scmp.eq.s32.totalorder %s17, 0
      %p51 = por %p49, %p50
      %p52 = scmp.ne.s32.totalorder %s41, %s44
      %p53 = scmp.eq.s32.totalorder %s22, 1
      %p54 = por %p52, %p53
      %p55 = scmp.ne.s32.totalorder %s44, %s45
      %p56 = scmp.eq.s32.totalorder %s22, 0
      %p57 = por %p55, %p56
      %p58 = scmp.ne.s32.totalorder %s44, %s45
      %p59 = scmp.eq.s32.totalorder %s23, 1
      %p60 = por %p58, %p59
      %p62 = scmp.ne.s32.totalorder %s45, %s61
      %p63 = scmp.eq.s32.totalorder %s23, 0
      %p64 = por %p62, %p63
      %s66 = sadd.s32 %s65, 1
      %p69 = scmp.eq.s32.totalorder %s17, 1
      %p70 = scmp.ne.s32.totalorder %s65, %s67
      %p71 = scmp.eq.s32.totalorder %s17, 0
      %p72 = por %p70, %p71
      %p73 = scmp.ne.s32.totalorder %s65, %s67
      %p74 = scmp.eq.s32.totalorder %s22, 1
      %p75 = por %p73, %p74
      %p76 = scmp.ne.s32.totalorder %s67, %s68
      %p77 = scmp.eq.s32.totalorder %s22, 0
      %p78 = por %p76, %p77
      %p79 = scmp.ne.s32.totalorder %s67, %s68
      %p80 = scmp.eq.s32.totalorder %s23, 1
      %p81 = por %p79, %p80
      %p83 = scmp.ne.s32.totalorder %s68, %s82
      %p84 = scmp.eq.s32.totalorder %s23, 0
      %p85 = por %p83, %p84
      %s86 = ssub.s32 %s24, %s36
      %p87 = scmp.eq.s32.totalorder %s86, 0
      %s89 = sadd.s32 %s88, 1
      %s90 = scalar_select %p87, %s88, %s89
      %p93 = pneg %p87
      %p94 = scmp.eq.s32.totalorder %s17, 1
      %p95 = por %p93, %p94
      %p96 = scmp.ne.s32.totalorder %s88, %s91
      %p97 = scmp.eq.s32.totalorder %s17, 0
      %p98 = por %p96, %p97
      %p99 = scmp.ne.s32.totalorder %s88, %s91
      %p100 = scmp.eq.s32.totalorder %s22, 1
      %p101 = por %p99, %p100
      %p102 = scmp.ne.s32.totalorder %s91, %s92
      %p103 = scmp.eq.s32.totalorder %s22, 0
      %p104 = por %p102, %p103
      %p105 = scmp.ne.s32.totalorder %s91, %s92
      %p106 = scmp.eq.s32.totalorder %s23, 1
      %p107 = por %p105, %p106
      %p109 = scmp.ne.s32.totalorder %s92, %s108
      %p110 = scmp.eq.s32.totalorder %s23, 0
      %p111 = por %p109, %p110
      %s112 = ssub.s32 %s24, %s36
      %p113 = scmp.eq.s32.totalorder %s112, 0
      %s115 = sadd.s32 %s114, 1
      %s116 = scalar_select %p113, %s114, %s115
      %p119 = pneg %p113
      %p120 = scmp.eq.s32.totalorder %s17, 1
      %p121 = por %p119, %p120
      %p122 = scmp.ne.s32.totalorder %s114, %s117
      %p123 = scmp.eq.s32.totalorder %s17, 0
      %p124 = por %p122, %p123
      %p125 = scmp.ne.s32.totalorder %s114, %s117
      %p126 = scmp.eq.s32.totalorder %s22, 1
      %p127 = por %p125, %p126
      %p128 = scmp.ne.s32.totalorder %s117, %s118
      %p129 = scmp.eq.s32.totalorder %s22, 0
      %p130 = por %p128, %p129
      %p131 = scmp.ne.s32.totalorder %s117, %s118
      %p132 = scmp.eq.s32.totalorder %s23, 1
      %p133 = por %p131, %p132
      %p135 = scmp.ne.s32.totalorder %s118, %s134
      %p136 = scmp.eq.s32.totalorder %s23, 0
      %p137 = por %p135, %p136
      %s138 = ssub.s32 %s24, %s36
      %p139 = scmp.eq.s32.totalorder %s138, 0
      %s141 = sadd.s32 %s140, 1
      %s142 = scalar_select %p139, %s140, %s141
      %p145 = pneg %p139
      %p146 = scmp.eq.s32.totalorder %s17, 1
      %p147 = por %p145, %p146
      %p148 = scmp.ne.s32.totalorder %s140, %s143
      %p149 = scmp.eq.s32.totalorder %s17, 0
      %p150 = por %p148, %p149
      %p151 = scmp.ne.s32.totalorder %s140, %s143
      %p152 = scmp.eq.s32.totalorder %s22, 1
      %p153 = por %p151, %p152
      %p154 = scmp.ne.s32.totalorder %s143, %s144
      %p155 = scmp.eq.s32.totalorder %s22, 0
      %p156 = por %p154, %p155
      %p157 = scmp.ne.s32.totalorder %s143, %s144
      %p158 = scmp.eq.s32.totalorder %s23, 1
      %p159 = por %p157, %p158
      %p161 = scmp.ne.s32.totalorder %s144, %s160
      %p162 = scmp.eq.s32.totalorder %s23, 0
      %p163 = por %p161, %p162
      %p164 = scmp.le.s32.totalorder 1, %s17
      %p165 = scmp.lt.s32.totalorder %s17, 3
      %p166 = pnand %p164, %p165
      %p167 = pneg %p166
      // Predicated region
      $region9: #{tpu_custom_call.1} parent=5 // pred_check
        _
      $region10: #{tpu_custom_call.1} parent=5 // pred_check_branch
        %169 = sbr.rel (%p166) target = $region12
      $region11: #{tpu_custom_call.1} parent=5 // pred_region
        %s170 = ssub.s32 %s17, 1
        // Predicated region
        $region13: #{tpu_custom_call.1} parent=11 // pred_check
          %p171 = pneg %p78
        $region14: #{tpu_custom_call.1} parent=11 // pred_check_branch
          %173 = sbr.rel (%p171) target = $region16
        $region15: #{tpu_custom_call.1} parent=11 // pred_region
          %175 = vsyncadd [#allocation7], 0
          %s177 = sshll.u32 %s1, 4
          %s178 = int_to_ptr.hbm [resolvable:$true] %s177
          %s179 = sshll.u32 [#allocation6], 4
          %s180 = int_to_ptr.vmem [resolvable:$true] %s179
          %182 = dma.hbm_to_vmem [thread:$0]  %s178, 64, %s180, [#allocation7]
        $region16: #{tpu_custom_call.1} parent=11 // pred_fallthru
          _
      $region12: #{tpu_custom_call.1} parent=5 // pred_fallthru
        _
      %p183 = scmp.lt.s32.totalorder %s17, 2
      // Predicated region
      $region17: #{tpu_custom_call.1} parent=5 // pred_check
        %p184 = pneg %p183
      $region18: #{tpu_custom_call.1} parent=5 // pred_check_branch
        %186 = sbr.rel (%p184) target = $region20
      $region19: #{tpu_custom_call.1} parent=5 // pred_region
        // Predicated region
        $region21: #{tpu_custom_call.1} parent=19 // pred_check
          %p187 = pneg %p51
        $region22: #{tpu_custom_call.1} parent=19 // pred_check_branch
          %189 = sbr.rel (%p187) target = $region24
        $region23: #{tpu_custom_call.1} parent=19 // pred_region
          #allocation12 [shape = 'u32[6]{0}', space=smem, size = 0x18, scoped, tag = 'DMA stride descriptor']
          %s190 = sand.u32 %s17, 1
          %s191 = scalar_lea.sflag [#allocation4], %s190
          %s192 = sand.u32 %s41, 1
          %s193 = smul.addr %s192, 1024
          %s194 = scalar_lea.vmem [#allocation3], %s193
          %s195 = smul.u32 2, %s24
          %s196 = smul.u32 4, %s25
          %198 = vsyncadd %s191, 0
          %s199 = smul.addr %s195, 64
          %s200 = sadd.s32 %s196, %s199
          %s201 = smul.addr %s200, 4
          %s202 = scalar_lea.hbm %s0, %s201
          %s204 = sshll.u32 1, 14
          %s205 = sxor.u32 4294967295, %s204
          %s207 = sld [smem:[#allocation0]]
          %s208 = sadd.s32 2, %s207
          %s210 = sshll.u32 7, 26
          %s211 = sxor.u32 4294967295, %s210
          %s212 = sand.u32 0, %s211
          %s213 = sshll.u32 %s208, 26
          %s214 = sor.u32 %s212, %s213
          %s215 = sshll.u32 %s202, 4
          %s216 = int_to_ptr.hbm [resolvable:$true] %s215
          %s217 = sshll.u32 %s194, 4
          %s218 = int_to_ptr.vmem [resolvable:$true] %s217
          %224 = sst [smem:[#allocation12]] 16384
          %s225 = scalar_lea.smem [#allocation12], 1
          %226 = sst [smem:[%s225]] 8192
          %s227 = scalar_lea.smem [#allocation12], 2
          %228 = sst [smem:[%s227]] 32
          %s229 = scalar_lea.smem [#allocation12], 3
          %230 = sst [smem:[%s229]] 256
          %s231 = scalar_lea.smem [#allocation12], 4
          %232 = sst [smem:[%s231]] 256
          %s233 = scalar_lea.smem [#allocation12], 5
          %234 = sst [smem:[%s233]] 16
          %236 = dma.general %s216, 16384, %s218, %s191, [#allocation11], [#allocation12], %s214, 0
        $region24: #{tpu_custom_call.1} parent=19 // pred_fallthru
          _
        // Predicated region
        $region25: #{tpu_custom_call.1} parent=19 // pred_check
          %p237 = pneg %p98
        $region26: #{tpu_custom_call.1} parent=19 // pred_check_branch
          %239 = sbr.rel (%p237) target = $region28
        $region27: #{tpu_custom_call.1} parent=19 // pred_region
          %s240 = sand.u32 %s17, 1
          %s241 = scalar_lea.sflag [#allocation4], %s240
          %s242 = sand.u32 %s88, 1
          %s243 = smul.addr %s242, 2
          %s244 = scalar_lea.vmem [#allocation8], %s243
          %s245 = smul.u32 2, %s24
          %247 = vsyncadd %s241, 0
          %s248 = scalar_lea.hbm %s2, %s245
          %s249 = sshll.u32 %s248, 4
          %s250 = int_to_ptr.hbm [resolvable:$true] %s249
          %s251 = sshll.u32 %s244, 4
          %s252 = int_to_ptr.vmem [resolvable:$true] %s251
          %257 = dma.hbm_to_vmem [thread:$0]  %s250, 32, %s252, %s241, 16, 16, 1
        $region28: #{tpu_custom_call.1} parent=19 // pred_fallthru
          _
        // Predicated region
        $region29: #{tpu_custom_call.1} parent=19 // pred_check
          %p258 = pneg %p124
        $region30: #{tpu_custom_call.1} parent=19 // pred_check_branch
          %260 = sbr.rel (%p258) target = $region32
        $region31: #{tpu_custom_call.1} parent=19 // pred_region
          %s261 = sand.u32 %s17, 1
          %s262 = scalar_lea.sflag [#allocation4], %s261
          %s263 = sand.u32 %s114, 1
          %s264 = smul.addr %s263, 2
          %s265 = scalar_lea.vmem [#allocation9], %s264
          %s266 = smul.u32 2, %s24
          %268 = vsyncadd %s262, 0
          %s269 = scalar_lea.hbm %s3, %s266
          %s270 = sshll.u32 %s269, 4
          %s271 = int_to_ptr.hbm [resolvable:$true] %s270
          %s272 = sshll.u32 %s265, 4
          %s273 = int_to_ptr.vmem [resolvable:$true] %s272
          %278 = dma.hbm_to_vmem [thread:$0]  %s271, 32, %s273, %s262, 16, 16, 1
        $region32: #{tpu_custom_call.1} parent=19 // pred_fallthru
          _
      $region20: #{tpu_custom_call.1} parent=5 // pred_fallthru
        _
      %p279 = scmp.le.s32.totalorder 1, %s17
      %p280 = scmp.lt.s32.totalorder %s17, 3
      %p281 = pnand %p279, %p280
      %p282 = pneg %p281
      // Predicated region
      $region33: #{tpu_custom_call.1} parent=5 // pred_check
        _
      $region34: #{tpu_custom_call.1} parent=5 // pred_check_branch
        %284 = sbr.rel (%p281) target = $region36
      $region35: #{tpu_custom_call.1} parent=5 // pred_region
        %s285 = ssub.s32 %s17, 1
        %s286 = sand.u32 %s22, 1
        %s287 = scalar_lea.sflag [#allocation4], %s286
        %s288 = sand.u32 %s44, 1
        %s289 = smul.addr %s288, 1024
        %s290 = scalar_lea.vmem [#allocation3], %s289
        // Predicated region
        $region37: #{tpu_custom_call.1} parent=35 // pred_check
          %p291 = pneg %p57
        $region38: #{tpu_custom_call.1} parent=35 // pred_check_branch
          %293 = sbr.rel (%p291) target = $region40
        $region39: #{tpu_custom_call.1} parent=35 // pred_region
          %295 = dma.done %s287, 16384
        $region40: #{tpu_custom_call.1} parent=35 // pred_fallthru
          _
        // Predicated region
        $region41: #{tpu_custom_call.1} parent=35 // pred_check
          %p296 = pneg %p78
        $region42: #{tpu_custom_call.1} parent=35 // pred_check_branch
          %298 = sbr.rel (%p296) target = $region44
        $region43: #{tpu_custom_call.1} parent=35 // pred_region
          %300 = dma.done [#allocation7], 64
        $region44: #{tpu_custom_call.1} parent=35 // pred_fallthru
          _
        %s301 = sand.u32 %s22, 1
        %s302 = scalar_lea.sflag [#allocation4], %s301
        %s303 = sand.u32 %s91, 1
        %s304 = smul.addr %s303, 2
        %s305 = scalar_lea.vmem [#allocation8], %s304
        // Predicated region
        $region45: #{tpu_custom_call.1} parent=35 // pred_check
          %p306 = pneg %p104
        $region46: #{tpu_custom_call.1} parent=35 // pred_check_branch
          %308 = sbr.rel (%p306) target = $region48
        $region47: #{tpu_custom_call.1} parent=35 // pred_region
          %310 = dma.done %s302, 32
        $region48: #{tpu_custom_call.1} parent=35 // pred_fallthru
          _
        %s311 = sand.u32 %s22, 1
        %s312 = scalar_lea.sflag [#allocation4], %s311
        %s313 = sand.u32 %s117, 1
        %s314 = smul.addr %s313, 2
        %s315 = scalar_lea.vmem [#allocation9], %s314
        // Predicated region
        $region49: #{tpu_custom_call.1} parent=35 // pred_check
          %p316 = pneg %p130
        $region50: #{tpu_custom_call.1} parent=35 // pred_check_branch
          %318 = sbr.rel (%p316) target = $region52
        $region51: #{tpu_custom_call.1} parent=35 // pred_region
          %320 = dma.done %s312, 32
        $region52: #{tpu_custom_call.1} parent=35 // pred_fallthru
          _
        %s321 = sand.u32 %s22, 1
        %s322 = scalar_lea.sflag [#allocation4], %s321
        %s323 = sand.u32 %s44, 1
        %s324 = smul.addr %s323, 1024
        %s325 = scalar_lea.vmem [#allocation3], %s324
        %p326 = pneg %p57
        %p327 = pneg %p54
        %p328 = pneg %p78
        %p329 = pneg %p75
        %s330 = sand.u32 %s22, 1
        %s331 = scalar_lea.sflag [#allocation4], %s330
        %s332 = sand.u32 %s91, 1
        %s333 = smul.addr %s332, 2
        %s334 = scalar_lea.vmem [#allocation8], %s333
        %p335 = pneg %p104
        %p336 = pneg %p101
        %s337 = sand.u32 %s22, 1
        %s338 = scalar_lea.sflag [#allocation4], %s337
        %s339 = sand.u32 %s117, 1
        %s340 = smul.addr %s339, 2
        %s341 = scalar_lea.vmem [#allocation9], %s340
        %p342 = pneg %p130
        %p343 = pneg %p127
        %p344 = pneg %p156
        %p345 = pneg %p153
        %s346 = sand.u32 %s143, 1
        %s347 = scalar_lea.sflag [#allocation5], %s346
        %s348 = sand.u32 %s143, 1
        %s349 = smul.addr %s348, 16
        %s350 = scalar_lea.vmem [#allocation10], %s349
        %s351 = smul.u32 2, %s26
        %s352 = smul.u32 4, %s27
        %s353 = smul.u32 2, %s26
        %s354 = smul.u32 2, %s26
        %s355 = smul.u32 2, %s26
        %v356 = vld [vmem:[#allocation6] sm:$0xf]
        %v357 = vld [vmem:[%s290] sm:$0xff]
        %v358 = vld [vmem:[%s290 + $0x8] sm:$0xff]
        %v359 = vld [vmem:[%s290 + $0x10] sm:$0xff]
        %v360 = vld [vmem:[%s290 + $0x18] sm:$0xff]
        %v361 = vld [vmem:[%s290 + $0x20] sm:$0xff]
        %v362 = vld [vmem:[%s290 + $0x28] sm:$0xff]
        %v363 = vld [vmem:[%s290 + $0x30] sm:$0xff]
        %v364 = vld [vmem:[%s290 + $0x38] sm:$0xff]
        %v365 = vld [vmem:[%s290 + $0x40] sm:$0xff]
        %v366 = vld [vmem:[%s290 + $0x48] sm:$0xff]
        %v367 = vld [vmem:[%s290 + $0x50] sm:$0xff]
        %v368 = vld [vmem:[%s290 + $0x58] sm:$0xff]
        %v369 = vld [vmem:[%s290 + $0x60] sm:$0xff]
        %v370 = vld [vmem:[%s290 + $0x68] sm:$0xff]
        %v371 = vld [vmem:[%s290 + $0x70] sm:$0xff]
        %v372 = vld [vmem:[%s290 + $0x78] sm:$0xff]
        %v373 = vld [vmem:[%s290 + $0x80] sm:$0xff]
        %v374 = vld [vmem:[%s290 + $0x88] sm:$0xff]
        %v375 = vld [vmem:[%s290 + $0x90] sm:$0xff]
        %v376 = vld [vmem:[%s290 + $0x98] sm:$0xff]
        %v377 = vld [vmem:[%s290 + $0xa0] sm:$0xff]
        %v378 = vld [vmem:[%s290 + $0xa8] sm:$0xff]
        %v379 = vld [vmem:[%s290 + $0xb0] sm:$0xff]
        %v380 = vld [vmem:[%s290 + $0xb8] sm:$0xff]
        %v381 = vld [vmem:[%s290 + $0xc0] sm:$0xff]
        %v382 = vld [vmem:[%s290 + $0xc8] sm:$0xff]
        %v383 = vld [vmem:[%s290 + $0xd0] sm:$0xff]
        %v384 = vld [vmem:[%s290 + $0xd8] sm:$0xff]
        %v385 = vld [vmem:[%s290 + $0xe0] sm:$0xff]
        %v386 = vld [vmem:[%s290 + $0xe8] sm:$0xff]
        %v387 = vld [vmem:[%s290 + $0xf0] sm:$0xff]
        %v388 = vld [vmem:[%s290 + $0xf8] sm:$0xff]
        %v389 = vld [vmem:[%s290 + $0x100] sm:$0xff]
        %v390 = vld [vmem:[%s290 + $0x108] sm:$0xff]
        %v391 = vld [vmem:[%s290 + $0x110] sm:$0xff]
        %v392 = vld [vmem:[%s290 + $0x118] sm:$0xff]
        %v393 = vld [vmem:[%s290 + $0x120] sm:$0xff]
        %v394 = vld [vmem:[%s290 + $0x128] sm:$0xff]
        %v395 = vld [vmem:[%s290 + $0x130] sm:$0xff]
        %v396 = vld [vmem:[%s290 + $0x138] sm:$0xff]
        %v397 = vld [vmem:[%s290 + $0x140] sm:$0xff]
        %v398 = vld [vmem:[%s290 + $0x148] sm:$0xff]
        %v399 = vld [vmem:[%s290 + $0x150] sm:$0xff]
        %v400 = vld [vmem:[%s290 + $0x158] sm:$0xff]
        %v401 = vld [vmem:[%s290 + $0x160] sm:$0xff]
        %v402 = vld [vmem:[%s290 + $0x168] sm:$0xff]
        %v403 = vld [vmem:[%s290 + $0x170] sm:$0xff]
        %v404 = vld [vmem:[%s290 + $0x178] sm:$0xff]
        %v405 = vld [vmem:[%s290 + $0x180] sm:$0xff]
        %v406 = vld [vmem:[%s290 + $0x188] sm:$0xff]
        %v407 = vld [vmem:[%s290 + $0x190] sm:$0xff]
        %v408 = vld [vmem:[%s290 + $0x198] sm:$0xff]
        %v409 = vld [vmem:[%s290 + $0x1a0] sm:$0xff]
        %v410 = vld [vmem:[%s290 + $0x1a8] sm:$0xff]
        %v411 = vld [vmem:[%s290 + $0x1b0] sm:$0xff]
        %v412 = vld [vmem:[%s290 + $0x1b8] sm:$0xff]
        %v413 = vld [vmem:[%s290 + $0x1c0] sm:$0xff]
        %v414 = vld [vmem:[%s290 + $0x1c8] sm:$0xff]
        %v415 = vld [vmem:[%s290 + $0x1d0] sm:$0xff]
        %v416 = vld [vmem:[%s290 + $0x1d8] sm:$0xff]
        %v417 = vld [vmem:[%s290 + $0x1e0] sm:$0xff]
        %v418 = vld [vmem:[%s290 + $0x1e8] sm:$0xff]
        %v419 = vld [vmem:[%s290 + $0x1f0] sm:$0xff]
        %v420 = vld [vmem:[%s290 + $0x1f8] sm:$0xff]
        %v421 = vld [vmem:[%s290 + $0x200] sm:$0xff]
        %v422 = vld [vmem:[%s290 + $0x208] sm:$0xff]
        %v423 = vld [vmem:[%s290 + $0x210] sm:$0xff]
        %v424 = vld [vmem:[%s290 + $0x218] sm:$0xff]
        %v425 = vld [vmem:[%s290 + $0x220] sm:$0xff]
        %v426 = vld [vmem:[%s290 + $0x228] sm:$0xff]
        %v427 = vld [vmem:[%s290 + $0x230] sm:$0xff]
        %v428 = vld [vmem:[%s290 + $0x238] sm:$0xff]
        %v429 = vld [vmem:[%s290 + $0x240] sm:$0xff]
        %v430 = vld [vmem:[%s290 + $0x248] sm:$0xff]
        %v431 = vld [vmem:[%s290 + $0x250] sm:$0xff]
        %v432 = vld [vmem:[%s290 + $0x258] sm:$0xff]
        %v433 = vld [vmem:[%s290 + $0x260] sm:$0xff]
        %v434 = vld [vmem:[%s290 + $0x268] sm:$0xff]
        %v435 = vld [vmem:[%s290 + $0x270] sm:$0xff]
        %v436 = vld [vmem:[%s290 + $0x278] sm:$0xff]
        %v437 = vld [vmem:[%s290 + $0x280] sm:$0xff]
        %v438 = vld [vmem:[%s290 + $0x288] sm:$0xff]
        %v439 = vld [vmem:[%s290 + $0x290] sm:$0xff]
        %v440 = vld [vmem:[%s290 + $0x298] sm:$0xff]
        %v441 = vld [vmem:[%s290 + $0x2a0] sm:$0xff]
        %v442 = vld [vmem:[%s290 + $0x2a8] sm:$0xff]
        %v443 = vld [vmem:[%s290 + $0x2b0] sm:$0xff]
        %v444 = vld [vmem:[%s290 + $0x2b8] sm:$0xff]
        %v445 = vld [vmem:[%s290 + $0x2c0] sm:$0xff]
        %v446 = vld [vmem:[%s290 + $0x2c8] sm:$0xff]
        %v447 = vld [vmem:[%s290 + $0x2d0] sm:$0xff]
        %v448 = vld [vmem:[%s290 + $0x2d8] sm:$0xff]
        %v449 = vld [vmem:[%s290 + $0x2e0] sm:$0xff]
        %v450 = vld [vmem:[%s290 + $0x2e8] sm:$0xff]
        %v451 = vld [vmem:[%s290 + $0x2f0] sm:$0xff]
        %v452 = vld [vmem:[%s290 + $0x2f8] sm:$0xff]
        %v453 = vld [vmem:[%s290 + $0x300] sm:$0xff]
        %v454 = vld [vmem:[%s290 + $0x308] sm:$0xff]
        %v455 = vld [vmem:[%s290 + $0x310] sm:$0xff]
        %v456 = vld [vmem:[%s290 + $0x318] sm:$0xff]
        %v457 = vld [vmem:[%s290 + $0x320] sm:$0xff]
        %v458 = vld [vmem:[%s290 + $0x328] sm:$0xff]
        %v459 = vld [vmem:[%s290 + $0x330] sm:$0xff]
        %v460 = vld [vmem:[%s290 + $0x338] sm:$0xff]
        %v461 = vld [vmem:[%s290 + $0x340] sm:$0xff]
        %v462 = vld [vmem:[%s290 + $0x348] sm:$0xff]
        %v463 = vld [vmem:[%s290 + $0x350] sm:$0xff]
        %v464 = vld [vmem:[%s290 + $0x358] sm:$0xff]
        %v465 = vld [vmem:[%s290 + $0x360] sm:$0xff]
        %v466 = vld [vmem:[%s290 + $0x368] sm:$0xff]
        %v467 = vld [vmem:[%s290 + $0x370] sm:$0xff]
        %v468 = vld [vmem:[%s290 + $0x378] sm:$0xff]
        %v469 = vld [vmem:[%s290 + $0x380] sm:$0xff]
        %v470 = vld [vmem:[%s290 + $0x388] sm:$0xff]
        %v471 = vld [vmem:[%s290 + $0x390] sm:$0xff]
        %v472 = vld [vmem:[%s290 + $0x398] sm:$0xff]
        %v473 = vld [vmem:[%s290 + $0x3a0] sm:$0xff]
        %v474 = vld [vmem:[%s290 + $0x3a8] sm:$0xff]
        %v475 = vld [vmem:[%s290 + $0x3b0] sm:$0xff]
        %v476 = vld [vmem:[%s290 + $0x3b8] sm:$0xff]
        %v477 = vld [vmem:[%s290 + $0x3c0] sm:$0xff]
        %v478 = vld [vmem:[%s290 + $0x3c8] sm:$0xff]
        %v479 = vld [vmem:[%s290 + $0x3d0] sm:$0xff]
        %v480 = vld [vmem:[%s290 + $0x3d8] sm:$0xff]
        %v481 = vld [vmem:[%s290 + $0x3e0] sm:$0xff]
        %v482 = vld [vmem:[%s290 + $0x3e8] sm:$0xff]
        %v483 = vld [vmem:[%s290 + $0x3f0] sm:$0xff]
        %v484 = vld [vmem:[%s290 + $0x3f8] sm:$0xff]
        %v485 = vunpack.c.l.bf16 %v357
        %v486 = vunpack.c.h.bf16 %v357
        %v487 = vunpack.c.l.bf16 %v358
        %v488 = vunpack.c.h.bf16 %v358
        %v489 = vunpack.c.l.bf16 %v359
        %v490 = vunpack.c.h.bf16 %v359
        %v491 = vunpack.c.l.bf16 %v360
        %v492 = vunpack.c.h.bf16 %v360
        %v493 = vunpack.c.l.bf16 %v361
        %v494 = vunpack.c.h.bf16 %v361
        %v495 = vunpack.c.l.bf16 %v362
        %v496 = vunpack.c.h.bf16 %v362
        %v497 = vunpack.c.l.bf16 %v363
        %v498 = vunpack.c.h.bf16 %v363
        %v499 = vunpack.c.l.bf16 %v364
        %v500 = vunpack.c.h.bf16 %v364
        %v501 = vunpack.c.l.bf16 %v365
        %v502 = vunpack.c.h.bf16 %v365
        %v503 = vunpack.c.l.bf16 %v366
        %v504 = vunpack.c.h.bf16 %v366
        %v505 = vunpack.c.l.bf16 %v367
        %v506 = vunpack.c.h.bf16 %v367
        %v507 = vunpack.c.l.bf16 %v368
        %v508 = vunpack.c.h.bf16 %v368
        %v509 = vunpack.c.l.bf16 %v369
        %v510 = vunpack.c.h.bf16 %v369
        %v511 = vunpack.c.l.bf16 %v370
        %v512 = vunpack.c.h.bf16 %v370
        %v513 = vunpack.c.l.bf16 %v371
        %v514 = vunpack.c.h.bf16 %v371
        %v515 = vunpack.c.l.bf16 %v372
        %v516 = vunpack.c.h.bf16 %v372
        %v517 = vunpack.c.l.bf16 %v373
        %v518 = vunpack.c.h.bf16 %v373
        %v519 = vunpack.c.l.bf16 %v374
        %v520 = vunpack.c.h.bf16 %v374
        %v521 = vunpack.c.l.bf16 %v375
        %v522 = vunpack.c.h.bf16 %v375
        %v523 = vunpack.c.l.bf16 %v376
        %v524 = vunpack.c.h.bf16 %v376
        %v525 = vunpack.c.l.bf16 %v377
        %v526 = vunpack.c.h.bf16 %v377
        %v527 = vunpack.c.l.bf16 %v378
        %v528 = vunpack.c.h.bf16 %v378
        %v529 = vunpack.c.l.bf16 %v379
        %v530 = vunpack.c.h.bf16 %v379
        %v531 = vunpack.c.l.bf16 %v380
        %v532 = vunpack.c.h.bf16 %v380
        %v533 = vunpack.c.l.bf16 %v381
        %v534 = vunpack.c.h.bf16 %v381
        %v535 = vunpack.c.l.bf16 %v382
        %v536 = vunpack.c.h.bf16 %v382
        %v537 = vunpack.c.l.bf16 %v383
        %v538 = vunpack.c.h.bf16 %v383
        %v539 = vunpack.c.l.bf16 %v384
        %v540 = vunpack.c.h.bf16 %v384
        %v541 = vunpack.c.l.bf16 %v385
        %v542 = vunpack.c.h.bf16 %v385
        %v543 = vunpack.c.l.bf16 %v386
        %v544 = vunpack.c.h.bf16 %v386
        %v545 = vunpack.c.l.bf16 %v387
        %v546 = vunpack.c.h.bf16 %v387
        %v547 = vunpack.c.l.bf16 %v388
        %v548 = vunpack.c.h.bf16 %v388
        %v549 = vunpack.c.l.bf16 %v389
        %v550 = vunpack.c.h.bf16 %v389
        %v551 = vunpack.c.l.bf16 %v390
        %v552 = vunpack.c.h.bf16 %v390
        %v553 = vunpack.c.l.bf16 %v391
        %v554 = vunpack.c.h.bf16 %v391
        %v555 = vunpack.c.l.bf16 %v392
        %v556 = vunpack.c.h.bf16 %v392
        %v557 = vunpack.c.l.bf16 %v393
        %v558 = vunpack.c.h.bf16 %v393
        %v559 = vunpack.c.l.bf16 %v394
        %v560 = vunpack.c.h.bf16 %v394
        %v561 = vunpack.c.l.bf16 %v395
        %v562 = vunpack.c.h.bf16 %v395
        %v563 = vunpack.c.l.bf16 %v396
        %v564 = vunpack.c.h.bf16 %v396
        %v565 = vunpack.c.l.bf16 %v397
        %v566 = vunpack.c.h.bf16 %v397
        %v567 = vunpack.c.l.bf16 %v398
        %v568 = vunpack.c.h.bf16 %v398
        %v569 = vunpack.c.l.bf16 %v399
        %v570 = vunpack.c.h.bf16 %v399
        %v571 = vunpack.c.l.bf16 %v400
        %v572 = vunpack.c.h.bf16 %v400
        %v573 = vunpack.c.l.bf16 %v401
        %v574 = vunpack.c.h.bf16 %v401
        %v575 = vunpack.c.l.bf16 %v402
        %v576 = vunpack.c.h.bf16 %v402
        %v577 = vunpack.c.l.bf16 %v403
        %v578 = vunpack.c.h.bf16 %v403
        %v579 = vunpack.c.l.bf16 %v404
        %v580 = vunpack.c.h.bf16 %v404
        %v581 = vunpack.c.l.bf16 %v405
        %v582 = vunpack.c.h.bf16 %v405
        %v583 = vunpack.c.l.bf16 %v406
        %v584 = vunpack.c.h.bf16 %v406
        %v585 = vunpack.c.l.bf16 %v407
        %v586 = vunpack.c.h.bf16 %v407
        %v587 = vunpack.c.l.bf16 %v408
        %v588 = vunpack.c.h.bf16 %v408
        %v589 = vunpack.c.l.bf16 %v409
        %v590 = vunpack.c.h.bf16 %v409
        %v591 = vunpack.c.l.bf16 %v410
        %v592 = vunpack.c.h.bf16 %v410
        %v593 = vunpack.c.l.bf16 %v411
        %v594 = vunpack.c.h.bf16 %v411
        %v595 = vunpack.c.l.bf16 %v412
        %v596 = vunpack.c.h.bf16 %v412
        %v597 = vunpack.c.l.bf16 %v413
        %v598 = vunpack.c.h.bf16 %v413
        %v599 = vunpack.c.l.bf16 %v414
        %v600 = vunpack.c.h.bf16 %v414
        %v601 = vunpack.c.l.bf16 %v415
        %v602 = vunpack.c.h.bf16 %v415
        %v603 = vunpack.c.l.bf16 %v416
        %v604 = vunpack.c.h.bf16 %v416
        %v605 = vunpack.c.l.bf16 %v417
        %v606 = vunpack.c.h.bf16 %v417
        %v607 = vunpack.c.l.bf16 %v418
        %v608 = vunpack.c.h.bf16 %v418
        %v609 = vunpack.c.l.bf16 %v419
        %v610 = vunpack.c.h.bf16 %v419
        %v611 = vunpack.c.l.bf16 %v420
        %v612 = vunpack.c.h.bf16 %v420
        %v613 = vunpack.c.l.bf16 %v421
        %v614 = vunpack.c.h.bf16 %v421
        %v615 = vunpack.c.l.bf16 %v422
        %v616 = vunpack.c.h.bf16 %v422
        %v617 = vunpack.c.l.bf16 %v423
        %v618 = vunpack.c.h.bf16 %v423
        %v619 = vunpack.c.l.bf16 %v424
        %v620 = vunpack.c.h.bf16 %v424
        %v621 = vunpack.c.l.bf16 %v425
        %v622 = vunpack.c.h.bf16 %v425
        %v623 = vunpack.c.l.bf16 %v426
        %v624 = vunpack.c.h.bf16 %v426
        %v625 = vunpack.c.l.bf16 %v427
        %v626 = vunpack.c.h.bf16 %v427
        %v627 = vunpack.c.l.bf16 %v428
        %v628 = vunpack.c.h.bf16 %v428
        %v629 = vunpack.c.l.bf16 %v429
        %v630 = vunpack.c.h.bf16 %v429
        %v631 = vunpack.c.l.bf16 %v430
        %v632 = vunpack.c.h.bf16 %v430
        %v633 = vunpack.c.l.bf16 %v431
        %v634 = vunpack.c.h.bf16 %v431
        %v635 = vunpack.c.l.bf16 %v432
        %v636 = vunpack.c.h.bf16 %v432
        %v637 = vunpack.c.l.bf16 %v433
        %v638 = vunpack.c.h.bf16 %v433
        %v639 = vunpack.c.l.bf16 %v434
        %v640 = vunpack.c.h.bf16 %v434
        %v641 = vunpack.c.l.bf16 %v435
        %v642 = vunpack.c.h.bf16 %v435
        %v643 = vunpack.c.l.bf16 %v436
        %v644 = vunpack.c.h.bf16 %v436
        %v645 = vunpack.c.l.bf16 %v437
        %v646 = vunpack.c.h.bf16 %v437
        %v647 = vunpack.c.l.bf16 %v438
        %v648 = vunpack.c.h.bf16 %v438
        %v649 = vunpack.c.l.bf16 %v439
        %v650 = vunpack.c.h.bf16 %v439
        %v651 = vunpack.c.l.bf16 %v440
        %v652 = vunpack.c.h.bf16 %v440
        %v653 = vunpack.c.l.bf16 %v441
        %v654 = vunpack.c.h.bf16 %v441
        %v655 = vunpack.c.l.bf16 %v442
        %v656 = vunpack.c.h.bf16 %v442
        %v657 = vunpack.c.l.bf16 %v443
        %v658 = vunpack.c.h.bf16 %v443
        %v659 = vunpack.c.l.bf16 %v444
        %v660 = vunpack.c.h.bf16 %v444
        %v661 = vunpack.c.l.bf16 %v445
        %v662 = vunpack.c.h.bf16 %v445
        %v663 = vunpack.c.l.bf16 %v446
        %v664 = vunpack.c.h.bf16 %v446
        %v665 = vunpack.c.l.bf16 %v447
        %v666 = vunpack.c.h.bf16 %v447
        %v667 = vunpack.c.l.bf16 %v448
        %v668 = vunpack.c.h.bf16 %v448
        %v669 = vunpack.c.l.bf16 %v449
        %v670 = vunpack.c.h.bf16 %v449
        %v671 = vunpack.c.l.bf16 %v450
        %v672 = vunpack.c.h.bf16 %v450
        %v673 = vunpack.c.l.bf16 %v451
        %v674 = vunpack.c.h.bf16 %v451
        %v675 = vunpack.c.l.bf16 %v452
        %v676 = vunpack.c.h.bf16 %v452
        %v677 = vunpack.c.l.bf16 %v453
        %v678 = vunpack.c.h.bf16 %v453
        %v679 = vunpack.c.l.bf16 %v454
        %v680 = vunpack.c.h.bf16 %v454
        %v681 = vunpack.c.l.bf16 %v455
        %v682 = vunpack.c.h.bf16 %v455
        %v683 = vunpack.c.l.bf16 %v456
        %v684 = vunpack.c.h.bf16 %v456
        %v685 = vunpack.c.l.bf16 %v457
        %v686 = vunpack.c.h.bf16 %v457
        %v687 = vunpack.c.l.bf16 %v458
        %v688 = vunpack.c.h.bf16 %v458
        %v689 = vunpack.c.l.bf16 %v459
        %v690 = vunpack.c.h.bf16 %v459
        %v691 = vunpack.c.l.bf16 %v460
        %v692 = vunpack.c.h.bf16 %v460
        %v693 = vunpack.c.l.bf16 %v461
        %v694 = vunpack.c.h.bf16 %v461
        %v695 = vunpack.c.l.bf16 %v462
        %v696 = vunpack.c.h.bf16 %v462
        %v697 = vunpack.c.l.bf16 %v463
        %v698 = vunpack.c.h.bf16 %v463
        %v699 = vunpack.c.l.bf16 %v464
        %v700 = vunpack.c.h.bf16 %v464
        %v701 = vunpack.c.l.bf16 %v465
        %v702 = vunpack.c.h.bf16 %v465
        %v703 = vunpack.c.l.bf16 %v466
        %v704 = vunpack.c.h.bf16 %v466
        %v705 = vunpack.c.l.bf16 %v467
        %v706 = vunpack.c.h.bf16 %v467
        %v707 = vunpack.c.l.bf16 %v468
        %v708 = vunpack.c.h.bf16 %v468
        %v709 = vunpack.c.l.bf16 %v469
        %v710 = vunpack.c.h.bf16 %v469
        %v711 = vunpack.c.l.bf16 %v470
        %v712 = vunpack.c.h.bf16 %v470
        %v713 = vunpack.c.l.bf16 %v471
        %v714 = vunpack.c.h.bf16 %v471
        %v715 = vunpack.c.l.bf16 %v472
        %v716 = vunpack.c.h.bf16 %v472
        %v717 = vunpack.c.l.bf16 %v473
        %v718 = vunpack.c.h.bf16 %v473
        %v719 = vunpack.c.l.bf16 %v474
        %v720 = vunpack.c.h.bf16 %v474
        %v721 = vunpack.c.l.bf16 %v475
        %v722 = vunpack.c.h.bf16 %v475
        %v723 = vunpack.c.l.bf16 %v476
        %v724 = vunpack.c.h.bf16 %v476
        %v725 = vunpack.c.l.bf16 %v477
        %v726 = vunpack.c.h.bf16 %v477
        %v727 = vunpack.c.l.bf16 %v478
        %v728 = vunpack.c.h.bf16 %v478
        %v729 = vunpack.c.l.bf16 %v479
        %v730 = vunpack.c.h.bf16 %v479
        %v731 = vunpack.c.l.bf16 %v480
        %v732 = vunpack.c.h.bf16 %v480
        %v733 = vunpack.c.l.bf16 %v481
        %v734 = vunpack.c.h.bf16 %v481
        %v735 = vunpack.c.l.bf16 %v482
        %v736 = vunpack.c.h.bf16 %v482
        %v737 = vunpack.c.l.bf16 %v483
        %v738 = vunpack.c.h.bf16 %v483
        %v739 = vunpack.c.l.bf16 %v484
        %v740 = vunpack.c.h.bf16 %v484
        %v742 = vperm.slane %v356, 0
        %v743 = vperm.slane %v356, 1
        %v744 = vperm.slane %v356, 2
        %v745 = vperm.slane %v356, 3
        %v750 = vmul.f32 %v485, %v742
        %v751 = vmul.f32 %v486, %v743
        %v752 = vmul.f32 %v487, %v744
        %v753 = vmul.f32 %v488, %v745
        %v754 = vmul.f32 %v489, %v742
        %v755 = vmul.f32 %v490, %v743
        %v756 = vmul.f32 %v491, %v744
        %v757 = vmul.f32 %v492, %v745
        %v758 = vmul.f32 %v493, %v742
        %v759 = vmul.f32 %v494, %v743
        %v760 = vmul.f32 %v495, %v744
        %v761 = vmul.f32 %v496, %v745
        %v762 = vmul.f32 %v497, %v742
        %v763 = vmul.f32 %v498, %v743
        %v764 = vmul.f32 %v499, %v744
        %v765 = vmul.f32 %v500, %v745
        %v766 = vmul.f32 %v501, %v742
        %v767 = vmul.f32 %v502, %v743
        %v768 = vmul.f32 %v503, %v744
        %v769 = vmul.f32 %v504, %v745
        %v770 = vmul.f32 %v505, %v742
        %v771 = vmul.f32 %v506, %v743
        %v772 = vmul.f32 %v507, %v744
        %v773 = vmul.f32 %v508, %v745
        %v774 = vmul.f32 %v509, %v742
        %v775 = vmul.f32 %v510, %v743
        %v776 = vmul.f32 %v511, %v744
        %v777 = vmul.f32 %v512, %v745
        %v778 = vmul.f32 %v513, %v742
        %v779 = vmul.f32 %v514, %v743
        %v780 = vmul.f32 %v515, %v744
        %v781 = vmul.f32 %v516, %v745
        %v782 = vmul.f32 %v517, %v742
        %v783 = vmul.f32 %v518, %v743
        %v784 = vmul.f32 %v519, %v744
        %v785 = vmul.f32 %v520, %v745
        %v786 = vmul.f32 %v521, %v742
        %v787 = vmul.f32 %v522, %v743
        %v788 = vmul.f32 %v523, %v744
        %v789 = vmul.f32 %v524, %v745
        %v790 = vmul.f32 %v525, %v742
        %v791 = vmul.f32 %v526, %v743
        %v792 = vmul.f32 %v527, %v744
        %v793 = vmul.f32 %v528, %v745
        %v794 = vmul.f32 %v529, %v742
        %v795 = vmul.f32 %v530, %v743
        %v796 = vmul.f32 %v531, %v744
        %v797 = vmul.f32 %v532, %v745
        %v798 = vmul.f32 %v533, %v742
        %v799 = vmul.f32 %v534, %v743
        %v800 = vmul.f32 %v535, %v744
        %v801 = vmul.f32 %v536, %v745
        %v802 = vmul.f32 %v537, %v742
        %v803 = vmul.f32 %v538, %v743
        %v804 = vmul.f32 %v539, %v744
        %v805 = vmul.f32 %v540, %v745
        %v806 = vmul.f32 %v541, %v742
        %v807 = vmul.f32 %v542, %v743
        %v808 = vmul.f32 %v543, %v744
        %v809 = vmul.f32 %v544, %v745
        %v810 = vmul.f32 %v545, %v742
        %v811 = vmul.f32 %v546, %v743
        %v812 = vmul.f32 %v547, %v744
        %v813 = vmul.f32 %v548, %v745
        %v814 = vmul.f32 %v549, %v742
        %v815 = vmul.f32 %v550, %v743
        %v816 = vmul.f32 %v551, %v744
        %v817 = vmul.f32 %v552, %v745
        %v818 = vmul.f32 %v553, %v742
        %v819 = vmul.f32 %v554, %v743
        %v820 = vmul.f32 %v555, %v744
        %v821 = vmul.f32 %v556, %v745
        %v822 = vmul.f32 %v557, %v742
        %v823 = vmul.f32 %v558, %v743
        %v824 = vmul.f32 %v559, %v744
        %v825 = vmul.f32 %v560, %v745
        %v826 = vmul.f32 %v561, %v742
        %v827 = vmul.f32 %v562, %v743
        %v828 = vmul.f32 %v563, %v744
        %v829 = vmul.f32 %v564, %v745
        %v830 = vmul.f32 %v565, %v742
        %v831 = vmul.f32 %v566, %v743
        %v832 = vmul.f32 %v567, %v744
        %v833 = vmul.f32 %v568, %v745
        %v834 = vmul.f32 %v569, %v742
        %v835 = vmul.f32 %v570, %v743
        %v836 = vmul.f32 %v571, %v744
        %v837 = vmul.f32 %v572, %v745
        %v838 = vmul.f32 %v573, %v742
        %v839 = vmul.f32 %v574, %v743
        %v840 = vmul.f32 %v575, %v744
        %v841 = vmul.f32 %v576, %v745
        %v842 = vmul.f32 %v577, %v742
        %v843 = vmul.f32 %v578, %v743
        %v844 = vmul.f32 %v579, %v744
        %v845 = vmul.f32 %v580, %v745
        %v846 = vmul.f32 %v581, %v742
        %v847 = vmul.f32 %v582, %v743
        %v848 = vmul.f32 %v583, %v744
        %v849 = vmul.f32 %v584, %v745
        %v850 = vmul.f32 %v585, %v742
        %v851 = vmul.f32 %v586, %v743
        %v852 = vmul.f32 %v587, %v744
        %v853 = vmul.f32 %v588, %v745
        %v854 = vmul.f32 %v589, %v742
        %v855 = vmul.f32 %v590, %v743
        %v856 = vmul.f32 %v591, %v744
        %v857 = vmul.f32 %v592, %v745
        %v858 = vmul.f32 %v593, %v742
        %v859 = vmul.f32 %v594, %v743
        %v860 = vmul.f32 %v595, %v744
        %v861 = vmul.f32 %v596, %v745
        %v862 = vmul.f32 %v597, %v742
        %v863 = vmul.f32 %v598, %v743
        %v864 = vmul.f32 %v599, %v744
        %v865 = vmul.f32 %v600, %v745
        %v866 = vmul.f32 %v601, %v742
        %v867 = vmul.f32 %v602, %v743
        %v868 = vmul.f32 %v603, %v744
        %v869 = vmul.f32 %v604, %v745
        %v870 = vmul.f32 %v605, %v742
        %v871 = vmul.f32 %v606, %v743
        %v872 = vmul.f32 %v607, %v744
        %v873 = vmul.f32 %v608, %v745
        %v874 = vmul.f32 %v609, %v742
        %v875 = vmul.f32 %v610, %v743
        %v876 = vmul.f32 %v611, %v744
        %v877 = vmul.f32 %v612, %v745
        %v878 = vmul.f32 %v613, %v742
        %v879 = vmul.f32 %v614, %v743
        %v880 = vmul.f32 %v615, %v744
        %v881 = vmul.f32 %v616, %v745
        %v882 = vmul.f32 %v617, %v742
        %v883 = vmul.f32 %v618, %v743
        %v884 = vmul.f32 %v619, %v744
        %v885 = vmul.f32 %v620, %v745
        %v886 = vmul.f32 %v621, %v742
        %v887 = vmul.f32 %v622, %v743
        %v888 = vmul.f32 %v623, %v744
        %v889 = vmul.f32 %v624, %v745
        %v890 = vmul.f32 %v625, %v742
        %v891 = vmul.f32 %v626, %v743
        %v892 = vmul.f32 %v627, %v744
        %v893 = vmul.f32 %v628, %v745
        %v894 = vmul.f32 %v629, %v742
        %v895 = vmul.f32 %v630, %v743
        %v896 = vmul.f32 %v631, %v744
        %v897 = vmul.f32 %v632, %v745
        %v898 = vmul.f32 %v633, %v742
        %v899 = vmul.f32 %v634, %v743
        %v900 = vmul.f32 %v635, %v744
        %v901 = vmul.f32 %v636, %v745
        %v902 = vmul.f32 %v637, %v742
        %v903 = vmul.f32 %v638, %v743
        %v904 = vmul.f32 %v639, %v744
        %v905 = vmul.f32 %v640, %v745
        %v906 = vmul.f32 %v641, %v742
        %v907 = vmul.f32 %v642, %v743
        %v908 = vmul.f32 %v643, %v744
        %v909 = vmul.f32 %v644, %v745
        %v910 = vmul.f32 %v645, %v742
        %v911 = vmul.f32 %v646, %v743
        %v912 = vmul.f32 %v647, %v744
        %v913 = vmul.f32 %v648, %v745
        %v914 = vmul.f32 %v649, %v742
        %v915 = vmul.f32 %v650, %v743
        %v916 = vmul.f32 %v651, %v744
        %v917 = vmul.f32 %v652, %v745
        %v918 = vmul.f32 %v653, %v742
        %v919 = vmul.f32 %v654, %v743
        %v920 = vmul.f32 %v655, %v744
        %v921 = vmul.f32 %v656, %v745
        %v922 = vmul.f32 %v657, %v742
        %v923 = vmul.f32 %v658, %v743
        %v924 = vmul.f32 %v659, %v744
        %v925 = vmul.f32 %v660, %v745
        %v926 = vmul.f32 %v661, %v742
        %v927 = vmul.f32 %v662, %v743
        %v928 = vmul.f32 %v663, %v744
        %v929 = vmul.f32 %v664, %v745
        %v930 = vmul.f32 %v665, %v742
        %v931 = vmul.f32 %v666, %v743
        %v932 = vmul.f32 %v667, %v744
        %v933 = vmul.f32 %v668, %v745
        %v934 = vmul.f32 %v669, %v742
        %v935 = vmul.f32 %v670, %v743
        %v936 = vmul.f32 %v671, %v744
        %v937 = vmul.f32 %v672, %v745
        %v938 = vmul.f32 %v673, %v742
        %v939 = vmul.f32 %v674, %v743
        %v940 = vmul.f32 %v675, %v744
        %v941 = vmul.f32 %v676, %v745
        %v942 = vmul.f32 %v677, %v742
        %v943 = vmul.f32 %v678, %v743
        %v944 = vmul.f32 %v679, %v744
        %v945 = vmul.f32 %v680, %v745
        %v946 = vmul.f32 %v681, %v742
        %v947 = vmul.f32 %v682, %v743
        %v948 = vmul.f32 %v683, %v744
        %v949 = vmul.f32 %v684, %v745
        %v950 = vmul.f32 %v685, %v742
        %v951 = vmul.f32 %v686, %v743
        %v952 = vmul.f32 %v687, %v744
        %v953 = vmul.f32 %v688, %v745
        %v954 = vmul.f32 %v689, %v742
        %v955 = vmul.f32 %v690, %v743
        %v956 = vmul.f32 %v691, %v744
        %v957 = vmul.f32 %v692, %v745
        %v958 = vmul.f32 %v693, %v742
        %v959 = vmul.f32 %v694, %v743
        %v960 = vmul.f32 %v695, %v744
        %v961 = vmul.f32 %v696, %v745
        %v962 = vmul.f32 %v697, %v742
        %v963 = vmul.f32 %v698, %v743
        %v964 = vmul.f32 %v699, %v744
        %v965 = vmul.f32 %v700, %v745
        %v966 = vmul.f32 %v701, %v742
        %v967 = vmul.f32 %v702, %v743
        %v968 = vmul.f32 %v703, %v744
        %v969 = vmul.f32 %v704, %v745
        %v970 = vmul.f32 %v705, %v742
        %v971 = vmul.f32 %v706, %v743
        %v972 = vmul.f32 %v707, %v744
        %v973 = vmul.f32 %v708, %v745
        %v974 = vmul.f32 %v709, %v742
        %v975 = vmul.f32 %v710, %v743
        %v976 = vmul.f32 %v711, %v744
        %v977 = vmul.f32 %v712, %v745
        %v978 = vmul.f32 %v713, %v742
        %v979 = vmul.f32 %v714, %v743
        %v980 = vmul.f32 %v715, %v744
        %v981 = vmul.f32 %v716, %v745
        %v982 = vmul.f32 %v717, %v742
        %v983 = vmul.f32 %v718, %v743
        %v984 = vmul.f32 %v719, %v744
        %v985 = vmul.f32 %v720, %v745
        %v986 = vmul.f32 %v721, %v742
        %v987 = vmul.f32 %v722, %v743
        %v988 = vmul.f32 %v723, %v744
        %v989 = vmul.f32 %v724, %v745
        %v990 = vmul.f32 %v725, %v742
        %v991 = vmul.f32 %v726, %v743
        %v992 = vmul.f32 %v727, %v744
        %v993 = vmul.f32 %v728, %v745
        %v994 = vmul.f32 %v729, %v742
        %v995 = vmul.f32 %v730, %v743
        %v996 = vmul.f32 %v731, %v744
        %v997 = vmul.f32 %v732, %v745
        %v998 = vmul.f32 %v733, %v742
        %v999 = vmul.f32 %v734, %v743
        %v1000 = vmul.f32 %v735, %v744
        %v1001 = vmul.f32 %v736, %v745
        %v1002 = vmul.f32 %v737, %v742
        %v1003 = vmul.f32 %v738, %v743
        %v1004 = vmul.f32 %v739, %v744
        %v1005 = vmul.f32 %v740, %v745
        %p1006 = scmp.eq.s32.totalorder %s27, 0
        // Predicated region
        $region53: #{tpu_custom_call.1} parent=35 // pred_check
          %p1007 = pneg %p1006
        $region54: #{tpu_custom_call.1} parent=35 // pred_check_branch
          %1009 = sbr.rel (%p1007) target = $region56
        $region55: #{tpu_custom_call.1} parent=35 // pred_region
          %1010 = vst [vmem:[#allocation2] sm:$0xff] %v750
          %1011 = vst [vmem:[#allocation2 + $0x8] sm:$0xff] %v751
          %1012 = vst [vmem:[#allocation2 + $0x10] sm:$0xff] %v752
          %1013 = vst [vmem:[#allocation2 + $0x18] sm:$0xff] %v753
          %1014 = vst [vmem:[#allocation2 + $0x20] sm:$0xff] %v754
          %1015 = vst [vmem:[#allocation2 + $0x28] sm:$0xff] %v755
          %1016 = vst [vmem:[#allocation2 + $0x30] sm:$0xff] %v756
          %1017 = vst [vmem:[#allocation2 + $0x38] sm:$0xff] %v757
          %1018 = vst [vmem:[#allocation2 + $0x40] sm:$0xff] %v758
          %1019 = vst [vmem:[#allocation2 + $0x48] sm:$0xff] %v759
          %1020 = vst [vmem:[#allocation2 + $0x50] sm:$0xff] %v760
          %1021 = vst [vmem:[#allocation2 + $0x58] sm:$0xff] %v761
          %1022 = vst [vmem:[#allocation2 + $0x60] sm:$0xff] %v762
          %1023 = vst [vmem:[#allocation2 + $0x68] sm:$0xff] %v763
          %1024 = vst [vmem:[#allocation2 + $0x70] sm:$0xff] %v764
          %1025 = vst [vmem:[#allocation2 + $0x78] sm:$0xff] %v765
          %1026 = vst [vmem:[#allocation2 + $0x80] sm:$0xff] %v766
          %1027 = vst [vmem:[#allocation2 + $0x88] sm:$0xff] %v767
          %1028 = vst [vmem:[#allocation2 + $0x90] sm:$0xff] %v768
          %1029 = vst [vmem:[#allocation2 + $0x98] sm:$0xff] %v769
          %1030 = vst [vmem:[#allocation2 + $0xa0] sm:$0xff] %v770
          %1031 = vst [vmem:[#allocation2 + $0xa8] sm:$0xff] %v771
          %1032 = vst [vmem:[#allocation2 + $0xb0] sm:$0xff] %v772
          %1033 = vst [vmem:[#allocation2 + $0xb8] sm:$0xff] %v773
          %1034 = vst [vmem:[#allocation2 + $0xc0] sm:$0xff] %v774
          %1035 = vst [vmem:[#allocation2 + $0xc8] sm:$0xff] %v775
          %1036 = vst [vmem:[#allocation2 + $0xd0] sm:$0xff] %v776
          %1037 = vst [vmem:[#allocation2 + $0xd8] sm:$0xff] %v777
          %1038 = vst [vmem:[#allocation2 + $0xe0] sm:$0xff] %v778
          %1039 = vst [vmem:[#allocation2 + $0xe8] sm:$0xff] %v779
          %1040 = vst [vmem:[#allocation2 + $0xf0] sm:$0xff] %v780
          %1041 = vst [vmem:[#allocation2 + $0xf8] sm:$0xff] %v781
          %1042 = vst [vmem:[#allocation2 + $0x100] sm:$0xff] %v782
          %1043 = vst [vmem:[#allocation2 + $0x108] sm:$0xff] %v783
          %1044 = vst [vmem:[#allocation2 + $0x110] sm:$0xff] %v784
          %1045 = vst [vmem:[#allocation2 + $0x118] sm:$0xff] %v785
          %1046 = vst [vmem:[#allocation2 + $0x120] sm:$0xff] %v786
          %1047 = vst [vmem:[#allocation2 + $0x128] sm:$0xff] %v787
          %1048 = vst [vmem:[#allocation2 + $0x130] sm:$0xff] %v788
          %1049 = vst [vmem:[#allocation2 + $0x138] sm:$0xff] %v789
          %1050 = vst [vmem:[#allocation2 + $0x140] sm:$0xff] %v790
          %1051 = vst [vmem:[#allocation2 + $0x148] sm:$0xff] %v791
          %1052 = vst [vmem:[#allocation2 + $0x150] sm:$0xff] %v792
          %1053 = vst [vmem:[#allocation2 + $0x158] sm:$0xff] %v793
          %1054 = vst [vmem:[#allocation2 + $0x160] sm:$0xff] %v794
          %1055 = vst [vmem:[#allocation2 + $0x168] sm:$0xff] %v795
          %1056 = vst [vmem:[#allocation2 + $0x170] sm:$0xff] %v796
          %1057 = vst [vmem:[#allocation2 + $0x178] sm:$0xff] %v797
          %1058 = vst [vmem:[#allocation2 + $0x180] sm:$0xff] %v798
          %1059 = vst [vmem:[#allocation2 + $0x188] sm:$0xff] %v799
          %1060 = vst [vmem:[#allocation2 + $0x190] sm:$0xff] %v800
          %1061 = vst [vmem:[#allocation2 + $0x198] sm:$0xff] %v801
          %1062 = vst [vmem:[#allocation2 + $0x1a0] sm:$0xff] %v802
          %1063 = vst [vmem:[#allocation2 + $0x1a8] sm:$0xff] %v803
          %1064 = vst [vmem:[#allocation2 + $0x1b0] sm:$0xff] %v804
          %1065 = vst [vmem:[#allocation2 + $0x1b8] sm:$0xff] %v805
          %1066 = vst [vmem:[#allocation2 + $0x1c0] sm:$0xff] %v806
          %1067 = vst [vmem:[#allocation2 + $0x1c8] sm:$0xff] %v807
          %1068 = vst [vmem:[#allocation2 + $0x1d0] sm:$0xff] %v808
          %1069 = vst [vmem:[#allocation2 + $0x1d8] sm:$0xff] %v809
          %1070 = vst [vmem:[#allocation2 + $0x1e0] sm:$0xff] %v810
          %1071 = vst [vmem:[#allocation2 + $0x1e8] sm:$0xff] %v811
          %1072 = vst [vmem:[#allocation2 + $0x1f0] sm:$0xff] %v812
          %1073 = vst [vmem:[#allocation2 + $0x1f8] sm:$0xff] %v813
          %1074 = vst [vmem:[#allocation2 + $0x200] sm:$0xff] %v814
          %1075 = vst [vmem:[#allocation2 + $0x208] sm:$0xff] %v815
          %1076 = vst [vmem:[#allocation2 + $0x210] sm:$0xff] %v816
          %1077 = vst [vmem:[#allocation2 + $0x218] sm:$0xff] %v817
          %1078 = vst [vmem:[#allocation2 + $0x220] sm:$0xff] %v818
          %1079 = vst [vmem:[#allocation2 + $0x228] sm:$0xff] %v819
          %1080 = vst [vmem:[#allocation2 + $0x230] sm:$0xff] %v820
          %1081 = vst [vmem:[#allocation2 + $0x238] sm:$0xff] %v821
          %1082 = vst [vmem:[#allocation2 + $0x240] sm:$0xff] %v822
          %1083 = vst [vmem:[#allocation2 + $0x248] sm:$0xff] %v823
          %1084 = vst [vmem:[#allocation2 + $0x250] sm:$0xff] %v824
          %1085 = vst [vmem:[#allocation2 + $0x258] sm:$0xff] %v825
          %1086 = vst [vmem:[#allocation2 + $0x260] sm:$0xff] %v826
          %1087 = vst [vmem:[#allocation2 + $0x268] sm:$0xff] %v827
          %1088 = vst [vmem:[#allocation2 + $0x270] sm:$0xff] %v828
          %1089 = vst [vmem:[#allocation2 + $0x278] sm:$0xff] %v829
          %1090 = vst [vmem:[#allocation2 + $0x280] sm:$0xff] %v830
          %1091 = vst [vmem:[#allocation2 + $0x288] sm:$0xff] %v831
          %1092 = vst [vmem:[#allocation2 + $0x290] sm:$0xff] %v832
          %1093 = vst [vmem:[#allocation2 + $0x298] sm:$0xff] %v833
          %1094 = vst [vmem:[#allocation2 + $0x2a0] sm:$0xff] %v834
          %1095 = vst [vmem:[#allocation2 + $0x2a8] sm:$0xff] %v835
          %1096 = vst [vmem:[#allocation2 + $0x2b0] sm:$0xff] %v836
          %1097 = vst [vmem:[#allocation2 + $0x2b8] sm:$0xff] %v837
          %1098 = vst [vmem:[#allocation2 + $0x2c0] sm:$0xff] %v838
          %1099 = vst [vmem:[#allocation2 + $0x2c8] sm:$0xff] %v839
          %1100 = vst [vmem:[#allocation2 + $0x2d0] sm:$0xff] %v840
          %1101 = vst [vmem:[#allocation2 + $0x2d8] sm:$0xff] %v841
          %1102 = vst [vmem:[#allocation2 + $0x2e0] sm:$0xff] %v842
          %1103 = vst [vmem:[#allocation2 + $0x2e8] sm:$0xff] %v843
          %1104 = vst [vmem:[#allocation2 + $0x2f0] sm:$0xff] %v844
          %1105 = vst [vmem:[#allocation2 + $0x2f8] sm:$0xff] %v845
          %1106 = vst [vmem:[#allocation2 + $0x300] sm:$0xff] %v846
          %1107 = vst [vmem:[#allocation2 + $0x308] sm:$0xff] %v847
          %1108 = vst [vmem:[#allocation2 + $0x310] sm:$0xff] %v848
          %1109 = vst [vmem:[#allocation2 + $0x318] sm:$0xff] %v849
          %1110 = vst [vmem:[#allocation2 + $0x320] sm:$0xff] %v850
          %1111 = vst [vmem:[#allocation2 + $0x328] sm:$0xff] %v851
          %1112 = vst [vmem:[#allocation2 + $0x330] sm:$0xff] %v852
          %1113 = vst [vmem:[#allocation2 + $0x338] sm:$0xff] %v853
          %1114 = vst [vmem:[#allocation2 + $0x340] sm:$0xff] %v854
          %1115 = vst [vmem:[#allocation2 + $0x348] sm:$0xff] %v855
          %1116 = vst [vmem:[#allocation2 + $0x350] sm:$0xff] %v856
          %1117 = vst [vmem:[#allocation2 + $0x358] sm:$0xff] %v857
          %1118 = vst [vmem:[#allocation2 + $0x360] sm:$0xff] %v858
          %1119 = vst [vmem:[#allocation2 + $0x368] sm:$0xff] %v859
          %1120 = vst [vmem:[#allocation2 + $0x370] sm:$0xff] %v860
          %1121 = vst [vmem:[#allocation2 + $0x378] sm:$0xff] %v861
          %1122 = vst [vmem:[#allocation2 + $0x380] sm:$0xff] %v862
          %1123 = vst [vmem:[#allocation2 + $0x388] sm:$0xff] %v863
          %1124 = vst [vmem:[#allocation2 + $0x390] sm:$0xff] %v864
          %1125 = vst [vmem:[#allocation2 + $0x398] sm:$0xff] %v865
          %1126 = vst [vmem:[#allocation2 + $0x3a0] sm:$0xff] %v866
          %1127 = vst [vmem:[#allocation2 + $0x3a8] sm:$0xff] %v867
          %1128 = vst [vmem:[#allocation2 + $0x3b0] sm:$0xff] %v868
          %1129 = vst [vmem:[#allocation2 + $0x3b8] sm:$0xff] %v869
          %1130 = vst [vmem:[#allocation2 + $0x3c0] sm:$0xff] %v870
          %1131 = vst [vmem:[#allocation2 + $0x3c8] sm:$0xff] %v871
          %1132 = vst [vmem:[#allocation2 + $0x3d0] sm:$0xff] %v872
          %1133 = vst [vmem:[#allocation2 + $0x3d8] sm:$0xff] %v873
          %1134 = vst [vmem:[#allocation2 + $0x3e0] sm:$0xff] %v874
          %1135 = vst [vmem:[#allocation2 + $0x3e8] sm:$0xff] %v875
          %1136 = vst [vmem:[#allocation2 + $0x3f0] sm:$0xff] %v876
          %1137 = vst [vmem:[#allocation2 + $0x3f8] sm:$0xff] %v877
          %1138 = vst [vmem:[#allocation2 + $0x400] sm:$0xff] %v878
          %1139 = vst [vmem:[#allocation2 + $0x408] sm:$0xff] %v879
          %1140 = vst [vmem:[#allocation2 + $0x410] sm:$0xff] %v880
          %1141 = vst [vmem:[#allocation2 + $0x418] sm:$0xff] %v881
          %1142 = vst [vmem:[#allocation2 + $0x420] sm:$0xff] %v882
          %1143 = vst [vmem:[#allocation2 + $0x428] sm:$0xff] %v883
          %1144 = vst [vmem:[#allocation2 + $0x430] sm:$0xff] %v884
          %1145 = vst [vmem:[#allocation2 + $0x438] sm:$0xff] %v885
          %1146 = vst [vmem:[#allocation2 + $0x440] sm:$0xff] %v886
          %1147 = vst [vmem:[#allocation2 + $0x448] sm:$0xff] %v887
          %1148 = vst [vmem:[#allocation2 + $0x450] sm:$0xff] %v888
          %1149 = vst [vmem:[#allocation2 + $0x458] sm:$0xff] %v889
          %1150 = vst [vmem:[#allocation2 + $0x460] sm:$0xff] %v890
          %1151 = vst [vmem:[#allocation2 + $0x468] sm:$0xff] %v891
          %1152 = vst [vmem:[#allocation2 + $0x470] sm:$0xff] %v892
          %1153 = vst [vmem:[#allocation2 + $0x478] sm:$0xff] %v893
          %1154 = vst [vmem:[#allocation2 + $0x480] sm:$0xff] %v894
          %1155 = vst [vmem:[#allocation2 + $0x488] sm:$0xff] %v895
          %1156 = vst [vmem:[#allocation2 + $0x490] sm:$0xff] %v896
          %1157 = vst [vmem:[#allocation2 + $0x498] sm:$0xff] %v897
          %1158 = vst [vmem:[#allocation2 + $0x4a0] sm:$0xff] %v898
          %1159 = vst [vmem:[#allocation2 + $0x4a8] sm:$0xff] %v899
          %1160 = vst [vmem:[#allocation2 + $0x4b0] sm:$0xff] %v900
          %1161 = vst [vmem:[#allocation2 + $0x4b8] sm:$0xff] %v901
          %1162 = vst [vmem:[#allocation2 + $0x4c0] sm:$0xff] %v902
          %1163 = vst [vmem:[#allocation2 + $0x4c8] sm:$0xff] %v903
          %1164 = vst [vmem:[#allocation2 + $0x4d0] sm:$0xff] %v904
          %1165 = vst [vmem:[#allocation2 + $0x4d8] sm:$0xff] %v905
          %1166 = vst [vmem:[#allocation2 + $0x4e0] sm:$0xff] %v906
          %1167 = vst [vmem:[#allocation2 + $0x4e8] sm:$0xff] %v907
          %1168 = vst [vmem:[#allocation2 + $0x4f0] sm:$0xff] %v908
          %1169 = vst [vmem:[#allocation2 + $0x4f8] sm:$0xff] %v909
          %1170 = vst [vmem:[#allocation2 + $0x500] sm:$0xff] %v910
          %1171 = vst [vmem:[#allocation2 + $0x508] sm:$0xff] %v911
          %1172 = vst [vmem:[#allocation2 + $0x510] sm:$0xff] %v912
          %1173 = vst [vmem:[#allocation2 + $0x518] sm:$0xff] %v913
          %1174 = vst [vmem:[#allocation2 + $0x520] sm:$0xff] %v914
          %1175 = vst [vmem:[#allocation2 + $0x528] sm:$0xff] %v915
          %1176 = vst [vmem:[#allocation2 + $0x530] sm:$0xff] %v916
          %1177 = vst [vmem:[#allocation2 + $0x538] sm:$0xff] %v917
          %1178 = vst [vmem:[#allocation2 + $0x540] sm:$0xff] %v918
          %1179 = vst [vmem:[#allocation2 + $0x548] sm:$0xff] %v919
          %1180 = vst [vmem:[#allocation2 + $0x550] sm:$0xff] %v920
          %1181 = vst [vmem:[#allocation2 + $0x558] sm:$0xff] %v921
          %1182 = vst [vmem:[#allocation2 + $0x560] sm:$0xff] %v922
          %1183 = vst [vmem:[#allocation2 + $0x568] sm:$0xff] %v923
          %1184 = vst [vmem:[#allocation2 + $0x570] sm:$0xff] %v924
          %1185 = vst [vmem:[#allocation2 + $0x578] sm:$0xff] %v925
          %1186 = vst [vmem:[#allocation2 + $0x580] sm:$0xff] %v926
          %1187 = vst [vmem:[#allocation2 + $0x588] sm:$0xff] %v927
          %1188 = vst [vmem:[#allocation2 + $0x590] sm:$0xff] %v928
          %1189 = vst [vmem:[#allocation2 + $0x598] sm:$0xff] %v929
          %1190 = vst [vmem:[#allocation2 + $0x5a0] sm:$0xff] %v930
          %1191 = vst [vmem:[#allocation2 + $0x5a8] sm:$0xff] %v931
          %1192 = vst [vmem:[#allocation2 + $0x5b0] sm:$0xff] %v932
          %1193 = vst [vmem:[#allocation2 + $0x5b8] sm:$0xff] %v933
          %1194 = vst [vmem:[#allocation2 + $0x5c0] sm:$0xff] %v934
          %1195 = vst [vmem:[#allocation2 + $0x5c8] sm:$0xff] %v935
          %1196 = vst [vmem:[#allocation2 + $0x5d0] sm:$0xff] %v936
          %1197 = vst [vmem:[#allocation2 + $0x5d8] sm:$0xff] %v937
          %1198 = vst [vmem:[#allocation2 + $0x5e0] sm:$0xff] %v938
          %1199 = vst [vmem:[#allocation2 + $0x5e8] sm:$0xff] %v939
          %1200 = vst [vmem:[#allocation2 + $0x5f0] sm:$0xff] %v940
          %1201 = vst [vmem:[#allocation2 + $0x5f8] sm:$0xff] %v941
          %1202 = vst [vmem:[#allocation2 + $0x600] sm:$0xff] %v942
          %1203 = vst [vmem:[#allocation2 + $0x608] sm:$0xff] %v943
          %1204 = vst [vmem:[#allocation2 + $0x610] sm:$0xff] %v944
          %1205 = vst [vmem:[#allocation2 + $0x618] sm:$0xff] %v945
          %1206 = vst [vmem:[#allocation2 + $0x620] sm:$0xff] %v946
          %1207 = vst [vmem:[#allocation2 + $0x628] sm:$0xff] %v947
          %1208 = vst [vmem:[#allocation2 + $0x630] sm:$0xff] %v948
          %1209 = vst [vmem:[#allocation2 + $0x638] sm:$0xff] %v949
          %1210 = vst [vmem:[#allocation2 + $0x640] sm:$0xff] %v950
          %1211 = vst [vmem:[#allocation2 + $0x648] sm:$0xff] %v951
          %1212 = vst [vmem:[#allocation2 + $0x650] sm:$0xff] %v952
          %1213 = vst [vmem:[#allocation2 + $0x658] sm:$0xff] %v953
          %1214 = vst [vmem:[#allocation2 + $0x660] sm:$0xff] %v954
          %1215 = vst [vmem:[#allocation2 + $0x668] sm:$0xff] %v955
          %1216 = vst [vmem:[#allocation2 + $0x670] sm:$0xff] %v956
          %1217 = vst [vmem:[#allocation2 + $0x678] sm:$0xff] %v957
          %1218 = vst [vmem:[#allocation2 + $0x680] sm:$0xff] %v958
          %1219 = vst [vmem:[#allocation2 + $0x688] sm:$0xff] %v959
          %1220 = vst [vmem:[#allocation2 + $0x690] sm:$0xff] %v960
          %1221 = vst [vmem:[#allocation2 + $0x698] sm:$0xff] %v961
          %1222 = vst [vmem:[#allocation2 + $0x6a0] sm:$0xff] %v962
          %1223 = vst [vmem:[#allocation2 + $0x6a8] sm:$0xff] %v963
          %1224 = vst [vmem:[#allocation2 + $0x6b0] sm:$0xff] %v964
          %1225 = vst [vmem:[#allocation2 + $0x6b8] sm:$0xff] %v965
          %1226 = vst [vmem:[#allocation2 + $0x6c0] sm:$0xff] %v966
          %1227 = vst [vmem:[#allocation2 + $0x6c8] sm:$0xff] %v967
          %1228 = vst [vmem:[#allocation2 + $0x6d0] sm:$0xff] %v968
          %1229 = vst [vmem:[#allocation2 + $0x6d8] sm:$0xff] %v969
          %1230 = vst [vmem:[#allocation2 + $0x6e0] sm:$0xff] %v970
          %1231 = vst [vmem:[#allocation2 + $0x6e8] sm:$0xff] %v971
          %1232 = vst [vmem:[#allocation2 + $0x6f0] sm:$0xff] %v972
          %1233 = vst [vmem:[#allocation2 + $0x6f8] sm:$0xff] %v973
          %1234 = vst [vmem:[#allocation2 + $0x700] sm:$0xff] %v974
          %1235 = vst [vmem:[#allocation2 + $0x708] sm:$0xff] %v975
          %1236 = vst [vmem:[#allocation2 + $0x710] sm:$0xff] %v976
          %1237 = vst [vmem:[#allocation2 + $0x718] sm:$0xff] %v977
          %1238 = vst [vmem:[#allocation2 + $0x720] sm:$0xff] %v978
          %1239 = vst [vmem:[#allocation2 + $0x728] sm:$0xff] %v979
          %1240 = vst [vmem:[#allocation2 + $0x730] sm:$0xff] %v980
          %1241 = vst [vmem:[#allocation2 + $0x738] sm:$0xff] %v981
          %1242 = vst [vmem:[#allocation2 + $0x740] sm:$0xff] %v982
          %1243 = vst [vmem:[#allocation2 + $0x748] sm:$0xff] %v983
          %1244 = vst [vmem:[#allocation2 + $0x750] sm:$0xff] %v984
          %1245 = vst [vmem:[#allocation2 + $0x758] sm:$0xff] %v985
          %1246 = vst [vmem:[#allocation2 + $0x760] sm:$0xff] %v986
          %1247 = vst [vmem:[#allocation2 + $0x768] sm:$0xff] %v987
          %1248 = vst [vmem:[#allocation2 + $0x770] sm:$0xff] %v988
          %1249 = vst [vmem:[#allocation2 + $0x778] sm:$0xff] %v989
          %1250 = vst [vmem:[#allocation2 + $0x780] sm:$0xff] %v990
          %1251 = vst [vmem:[#allocation2 + $0x788] sm:$0xff] %v991
          %1252 = vst [vmem:[#allocation2 + $0x790] sm:$0xff] %v992
          %1253 = vst [vmem:[#allocation2 + $0x798] sm:$0xff] %v993
          %1254 = vst [vmem:[#allocation2 + $0x7a0] sm:$0xff] %v994
          %1255 = vst [vmem:[#allocation2 + $0x7a8] sm:$0xff] %v995
          %1256 = vst [vmem:[#allocation2 + $0x7b0] sm:$0xff] %v996
          %1257 = vst [vmem:[#allocation2 + $0x7b8] sm:$0xff] %v997
          %1258 = vst [vmem:[#allocation2 + $0x7c0] sm:$0xff] %v998
          %1259 = vst [vmem:[#allocation2 + $0x7c8] sm:$0xff] %v999
          %1260 = vst [vmem:[#allocation2 + $0x7d0] sm:$0xff] %v1000
          %1261 = vst [vmem:[#allocation2 + $0x7d8] sm:$0xff] %v1001
          %1262 = vst [vmem:[#allocation2 + $0x7e0] sm:$0xff] %v1002
          %1263 = vst [vmem:[#allocation2 + $0x7e8] sm:$0xff] %v1003
          %1264 = vst [vmem:[#allocation2 + $0x7f0] sm:$0xff] %v1004
          %1265 = vst [vmem:[#allocation2 + $0x7f8] sm:$0xff] %v1005
          %v1266 = vld [vmem:[#allocation2] sm:$0xff]
          %v1267 = vld [vmem:[#allocation2 + $0x8] sm:$0xff]
          %v1268 = vld [vmem:[#allocation2 + $0x10] sm:$0xff]
          %v1269 = vld [vmem:[#allocation2 + $0x18] sm:$0xff]
          %v1270 = vld [vmem:[#allocation2 + $0x20] sm:$0xff]
          %v1271 = vld [vmem:[#allocation2 + $0x28] sm:$0xff]
          %v1272 = vld [vmem:[#allocation2 + $0x30] sm:$0xff]
          %v1273 = vld [vmem:[#allocation2 + $0x38] sm:$0xff]
          %v1274 = vld [vmem:[#allocation2 + $0x40] sm:$0xff]
          %v1275 = vld [vmem:[#allocation2 + $0x48] sm:$0xff]
          %v1276 = vld [vmem:[#allocation2 + $0x50] sm:$0xff]
          %v1277 = vld [vmem:[#allocation2 + $0x58] sm:$0xff]
          %v1278 = vld [vmem:[#allocation2 + $0x60] sm:$0xff]
          %v1279 = vld [vmem:[#allocation2 + $0x68] sm:$0xff]
          %v1280 = vld [vmem:[#allocation2 + $0x70] sm:$0xff]
          %v1281 = vld [vmem:[#allocation2 + $0x78] sm:$0xff]
          %v1282 = vld [vmem:[#allocation2 + $0x80] sm:$0xff]
          %v1283 = vld [vmem:[#allocation2 + $0x88] sm:$0xff]
          %v1284 = vld [vmem:[#allocation2 + $0x90] sm:$0xff]
          %v1285 = vld [vmem:[#allocation2 + $0x98] sm:$0xff]
          %v1286 = vld [vmem:[#allocation2 + $0xa0] sm:$0xff]
          %v1287 = vld [vmem:[#allocation2 + $0xa8] sm:$0xff]
          %v1288 = vld [vmem:[#allocation2 + $0xb0] sm:$0xff]
          %v1289 = vld [vmem:[#allocation2 + $0xb8] sm:$0xff]
          %v1290 = vld [vmem:[#allocation2 + $0xc0] sm:$0xff]
          %v1291 = vld [vmem:[#allocation2 + $0xc8] sm:$0xff]
          %v1292 = vld [vmem:[#allocation2 + $0xd0] sm:$0xff]
          %v1293 = vld [vmem:[#allocation2 + $0xd8] sm:$0xff]
          %v1294 = vld [vmem:[#allocation2 + $0xe0] sm:$0xff]
          %v1295 = vld [vmem:[#allocation2 + $0xe8] sm:$0xff]
          %v1296 = vld [vmem:[#allocation2 + $0xf0] sm:$0xff]
          %v1297 = vld [vmem:[#allocation2 + $0xf8] sm:$0xff]
          %v1298 = vld [vmem:[#allocation2 + $0x100] sm:$0xff]
          %v1299 = vld [vmem:[#allocation2 + $0x108] sm:$0xff]
          %v1300 = vld [vmem:[#allocation2 + $0x110] sm:$0xff]
          %v1301 = vld [vmem:[#allocation2 + $0x118] sm:$0xff]
          %v1302 = vld [vmem:[#allocation2 + $0x120] sm:$0xff]
          %v1303 = vld [vmem:[#allocation2 + $0x128] sm:$0xff]
          %v1304 = vld [vmem:[#allocation2 + $0x130] sm:$0xff]
          %v1305 = vld [vmem:[#allocation2 + $0x138] sm:$0xff]
          %v1306 = vld [vmem:[#allocation2 + $0x140] sm:$0xff]
          %v1307 = vld [vmem:[#allocation2 + $0x148] sm:$0xff]
          %v1308 = vld [vmem:[#allocation2 + $0x150] sm:$0xff]
          %v1309 = vld [vmem:[#allocation2 + $0x158] sm:$0xff]
          %v1310 = vld [vmem:[#allocation2 + $0x160] sm:$0xff]
          %v1311 = vld [vmem:[#allocation2 + $0x168] sm:$0xff]
          %v1312 = vld [vmem:[#allocation2 + $0x170] sm:$0xff]
          %v1313 = vld [vmem:[#allocation2 + $0x178] sm:$0xff]
          %v1314 = vld [vmem:[#allocation2 + $0x180] sm:$0xff]
          %v1315 = vld [vmem:[#allocation2 + $0x188] sm:$0xff]
          %v1316 = vld [vmem:[#allocation2 + $0x190] sm:$0xff]
          %v1317 = vld [vmem:[#allocation2 + $0x198] sm:$0xff]
          %v1318 = vld [vmem:[#allocation2 + $0x1a0] sm:$0xff]
          %v1319 = vld [vmem:[#allocation2 + $0x1a8] sm:$0xff]
          %v1320 = vld [vmem:[#allocation2 + $0x1b0] sm:$0xff]
          %v1321 = vld [vmem:[#allocation2 + $0x1b8] sm:$0xff]
          %v1322 = vld [vmem:[#allocation2 + $0x1c0] sm:$0xff]
          %v1323 = vld [vmem:[#allocation2 + $0x1c8] sm:$0xff]
          %v1324 = vld [vmem:[#allocation2 + $0x1d0] sm:$0xff]
          %v1325 = vld [vmem:[#allocation2 + $0x1d8] sm:$0xff]
          %v1326 = vld [vmem:[#allocation2 + $0x1e0] sm:$0xff]
          %v1327 = vld [vmem:[#allocation2 + $0x1e8] sm:$0xff]
          %v1328 = vld [vmem:[#allocation2 + $0x1f0] sm:$0xff]
          %v1329 = vld [vmem:[#allocation2 + $0x1f8] sm:$0xff]
          %v1330 = vld [vmem:[#allocation2 + $0x200] sm:$0xff]
          %v1331 = vld [vmem:[#allocation2 + $0x208] sm:$0xff]
          %v1332 = vld [vmem:[#allocation2 + $0x210] sm:$0xff]
          %v1333 = vld [vmem:[#allocation2 + $0x218] sm:$0xff]
          %v1334 = vld [vmem:[#allocation2 + $0x220] sm:$0xff]
          %v1335 = vld [vmem:[#allocation2 + $0x228] sm:$0xff]
          %v1336 = vld [vmem:[#allocation2 + $0x230] sm:$0xff]
          %v1337 = vld [vmem:[#allocation2 + $0x238] sm:$0xff]
          %v1338 = vld [vmem:[#allocation2 + $0x240] sm:$0xff]
          %v1339 = vld [vmem:[#allocation2 + $0x248] sm:$0xff]
          %v1340 = vld [vmem:[#allocation2 + $0x250] sm:$0xff]
          %v1341 = vld [vmem:[#allocation2 + $0x258] sm:$0xff]
          %v1342 = vld [vmem:[#allocation2 + $0x260] sm:$0xff]
          %v1343 = vld [vmem:[#allocation2 + $0x268] sm:$0xff]
          %v1344 = vld [vmem:[#allocation2 + $0x270] sm:$0xff]
          %v1345 = vld [vmem:[#allocation2 + $0x278] sm:$0xff]
          %v1346 = vld [vmem:[#allocation2 + $0x280] sm:$0xff]
          %v1347 = vld [vmem:[#allocation2 + $0x288] sm:$0xff]
          %v1348 = vld [vmem:[#allocation2 + $0x290] sm:$0xff]
          %v1349 = vld [vmem:[#allocation2 + $0x298] sm:$0xff]
          %v1350 = vld [vmem:[#allocation2 + $0x2a0] sm:$0xff]
          %v1351 = vld [vmem:[#allocation2 + $0x2a8] sm:$0xff]
          %v1352 = vld [vmem:[#allocation2 + $0x2b0] sm:$0xff]
          %v1353 = vld [vmem:[#allocation2 + $0x2b8] sm:$0xff]
          %v1354 = vld [vmem:[#allocation2 + $0x2c0] sm:$0xff]
          %v1355 = vld [vmem:[#allocation2 + $0x2c8] sm:$0xff]
          %v1356 = vld [vmem:[#allocation2 + $0x2d0] sm:$0xff]
          %v1357 = vld [vmem:[#allocation2 + $0x2d8] sm:$0xff]
          %v1358 = vld [vmem:[#allocation2 + $0x2e0] sm:$0xff]
          %v1359 = vld [vmem:[#allocation2 + $0x2e8] sm:$0xff]
          %v1360 = vld [vmem:[#allocation2 + $0x2f0] sm:$0xff]
          %v1361 = vld [vmem:[#allocation2 + $0x2f8] sm:$0xff]
          %v1362 = vld [vmem:[#allocation2 + $0x300] sm:$0xff]
          %v1363 = vld [vmem:[#allocation2 + $0x308] sm:$0xff]
          %v1364 = vld [vmem:[#allocation2 + $0x310] sm:$0xff]
          %v1365 = vld [vmem:[#allocation2 + $0x318] sm:$0xff]
          %v1366 = vld [vmem:[#allocation2 + $0x320] sm:$0xff]
          %v1367 = vld [vmem:[#allocation2 + $0x328] sm:$0xff]
          %v1368 = vld [vmem:[#allocation2 + $0x330] sm:$0xff]
          %v1369 = vld [vmem:[#allocation2 + $0x338] sm:$0xff]
          %v1370 = vld [vmem:[#allocation2 + $0x340] sm:$0xff]
          %v1371 = vld [vmem:[#allocation2 + $0x348] sm:$0xff]
          %v1372 = vld [vmem:[#allocation2 + $0x350] sm:$0xff]
          %v1373 = vld [vmem:[#allocation2 + $0x358] sm:$0xff]
          %v1374 = vld [vmem:[#allocation2 + $0x360] sm:$0xff]
          %v1375 = vld [vmem:[#allocation2 + $0x368] sm:$0xff]
          %v1376 = vld [vmem:[#allocation2 + $0x370] sm:$0xff]
          %v1377 = vld [vmem:[#allocation2 + $0x378] sm:$0xff]
          %v1378 = vld [vmem:[#allocation2 + $0x380] sm:$0xff]
          %v1379 = vld [vmem:[#allocation2 + $0x388] sm:$0xff]
          %v1380 = vld [vmem:[#allocation2 + $0x390] sm:$0xff]
          %v1381 = vld [vmem:[#allocation2 + $0x398] sm:$0xff]
          %v1382 = vld [vmem:[#allocation2 + $0x3a0] sm:$0xff]
          %v1383 = vld [vmem:[#allocation2 + $0x3a8] sm:$0xff]
          %v1384 = vld [vmem:[#allocation2 + $0x3b0] sm:$0xff]
          %v1385 = vld [vmem:[#allocation2 + $0x3b8] sm:$0xff]
          %v1386 = vld [vmem:[#allocation2 + $0x3c0] sm:$0xff]
          %v1387 = vld [vmem:[#allocation2 + $0x3c8] sm:$0xff]
          %v1388 = vld [vmem:[#allocation2 + $0x3d0] sm:$0xff]
          %v1389 = vld [vmem:[#allocation2 + $0x3d8] sm:$0xff]
          %v1390 = vld [vmem:[#allocation2 + $0x3e0] sm:$0xff]
          %v1391 = vld [vmem:[#allocation2 + $0x3e8] sm:$0xff]
          %v1392 = vld [vmem:[#allocation2 + $0x3f0] sm:$0xff]
          %v1393 = vld [vmem:[#allocation2 + $0x3f8] sm:$0xff]
          %v1394 = vld [vmem:[#allocation2 + $0x400] sm:$0xff]
          %v1395 = vld [vmem:[#allocation2 + $0x408] sm:$0xff]
          %v1396 = vld [vmem:[#allocation2 + $0x410] sm:$0xff]
          %v1397 = vld [vmem:[#allocation2 + $0x418] sm:$0xff]
          %v1398 = vld [vmem:[#allocation2 + $0x420] sm:$0xff]
          %v1399 = vld [vmem:[#allocation2 + $0x428] sm:$0xff]
          %v1400 = vld [vmem:[#allocation2 + $0x430] sm:$0xff]
          %v1401 = vld [vmem:[#allocation2 + $0x438] sm:$0xff]
          %v1402 = vld [vmem:[#allocation2 + $0x440] sm:$0xff]
          %v1403 = vld [vmem:[#allocation2 + $0x448] sm:$0xff]
          %v1404 = vld [vmem:[#allocation2 + $0x450] sm:$0xff]
          %v1405 = vld [vmem:[#allocation2 + $0x458] sm:$0xff]
          %v1406 = vld [vmem:[#allocation2 + $0x460] sm:$0xff]
          %v1407 = vld [vmem:[#allocation2 + $0x468] sm:$0xff]
          %v1408 = vld [vmem:[#allocation2 + $0x470] sm:$0xff]
          %v1409 = vld [vmem:[#allocation2 + $0x478] sm:$0xff]
          %v1410 = vld [vmem:[#allocation2 + $0x480] sm:$0xff]
          %v1411 = vld [vmem:[#allocation2 + $0x488] sm:$0xff]
          %v1412 = vld [vmem:[#allocation2 + $0x490] sm:$0xff]
          %v1413 = vld [vmem:[#allocation2 + $0x498] sm:$0xff]
          %v1414 = vld [vmem:[#allocation2 + $0x4a0] sm:$0xff]
          %v1415 = vld [vmem:[#allocation2 + $0x4a8] sm:$0xff]
          %v1416 = vld [vmem:[#allocation2 + $0x4b0] sm:$0xff]
          %v1417 = vld [vmem:[#allocation2 + $0x4b8] sm:$0xff]
          %v1418 = vld [vmem:[#allocation2 + $0x4c0] sm:$0xff]
          %v1419 = vld [vmem:[#allocation2 + $0x4c8] sm:$0xff]
          %v1420 = vld [vmem:[#allocation2 + $0x4d0] sm:$0xff]
          %v1421 = vld [vmem:[#allocation2 + $0x4d8] sm:$0xff]
          %v1422 = vld [vmem:[#allocation2 + $0x4e0] sm:$0xff]
          %v1423 = vld [vmem:[#allocation2 + $0x4e8] sm:$0xff]
          %v1424 = vld [vmem:[#allocation2 + $0x4f0] sm:$0xff]
          %v1425 = vld [vmem:[#allocation2 + $0x4f8] sm:$0xff]
          %v1426 = vld [vmem:[#allocation2 + $0x500] sm:$0xff]
          %v1427 = vld [vmem:[#allocation2 + $0x508] sm:$0xff]
          %v1428 = vld [vmem:[#allocation2 + $0x510] sm:$0xff]
          %v1429 = vld [vmem:[#allocation2 + $0x518] sm:$0xff]
          %v1430 = vld [vmem:[#allocation2 + $0x520] sm:$0xff]
          %v1431 = vld [vmem:[#allocation2 + $0x528] sm:$0xff]
          %v1432 = vld [vmem:[#allocation2 + $0x530] sm:$0xff]
          %v1433 = vld [vmem:[#allocation2 + $0x538] sm:$0xff]
          %v1434 = vld [vmem:[#allocation2 + $0x540] sm:$0xff]
          %v1435 = vld [vmem:[#allocation2 + $0x548] sm:$0xff]
          %v1436 = vld [vmem:[#allocation2 + $0x550] sm:$0xff]
          %v1437 = vld [vmem:[#allocation2 + $0x558] sm:$0xff]
          %v1438 = vld [vmem:[#allocation2 + $0x560] sm:$0xff]
          %v1439 = vld [vmem:[#allocation2 + $0x568] sm:$0xff]
          %v1440 = vld [vmem:[#allocation2 + $0x570] sm:$0xff]
          %v1441 = vld [vmem:[#allocation2 + $0x578] sm:$0xff]
          %v1442 = vld [vmem:[#allocation2 + $0x580] sm:$0xff]
          %v1443 = vld [vmem:[#allocation2 + $0x588] sm:$0xff]
          %v1444 = vld [vmem:[#allocation2 + $0x590] sm:$0xff]
          %v1445 = vld [vmem:[#allocation2 + $0x598] sm:$0xff]
          %v1446 = vld [vmem:[#allocation2 + $0x5a0] sm:$0xff]
          %v1447 = vld [vmem:[#allocation2 + $0x5a8] sm:$0xff]
          %v1448 = vld [vmem:[#allocation2 + $0x5b0] sm:$0xff]
          %v1449 = vld [vmem:[#allocation2 + $0x5b8] sm:$0xff]
          %v1450 = vld [vmem:[#allocation2 + $0x5c0] sm:$0xff]
          %v1451 = vld [vmem:[#allocation2 + $0x5c8] sm:$0xff]
          %v1452 = vld [vmem:[#allocation2 + $0x5d0] sm:$0xff]
          %v1453 = vld [vmem:[#allocation2 + $0x5d8] sm:$0xff]
          %v1454 = vld [vmem:[#allocation2 + $0x5e0] sm:$0xff]
          %v1455 = vld [vmem:[#allocation2 + $0x5e8] sm:$0xff]
          %v1456 = vld [vmem:[#allocation2 + $0x5f0] sm:$0xff]
          %v1457 = vld [vmem:[#allocation2 + $0x5f8] sm:$0xff]
          %v1458 = vld [vmem:[#allocation2 + $0x600] sm:$0xff]
          %v1459 = vld [vmem:[#allocation2 + $0x608] sm:$0xff]
          %v1460 = vld [vmem:[#allocation2 + $0x610] sm:$0xff]
          %v1461 = vld [vmem:[#allocation2 + $0x618] sm:$0xff]
          %v1462 = vld [vmem:[#allocation2 + $0x620] sm:$0xff]
          %v1463 = vld [vmem:[#allocation2 + $0x628] sm:$0xff]
          %v1464 = vld [vmem:[#allocation2 + $0x630] sm:$0xff]
          %v1465 = vld [vmem:[#allocation2 + $0x638] sm:$0xff]
          %v1466 = vld [vmem:[#allocation2 + $0x640] sm:$0xff]
          %v1467 = vld [vmem:[#allocation2 + $0x648] sm:$0xff]
          %v1468 = vld [vmem:[#allocation2 + $0x650] sm:$0xff]
          %v1469 = vld [vmem:[#allocation2 + $0x658] sm:$0xff]
          %v1470 = vld [vmem:[#allocation2 + $0x660] sm:$0xff]
          %v1471 = vld [vmem:[#allocation2 + $0x668] sm:$0xff]
          %v1472 = vld [vmem:[#allocation2 + $0x670] sm:$0xff]
          %v1473 = vld [vmem:[#allocation2 + $0x678] sm:$0xff]
          %v1474 = vld [vmem:[#allocation2 + $0x680] sm:$0xff]
          %v1475 = vld [vmem:[#allocation2 + $0x688] sm:$0xff]
          %v1476 = vld [vmem:[#allocation2 + $0x690] sm:$0xff]
          %v1477 = vld [vmem:[#allocation2 + $0x698] sm:$0xff]
          %v1478 = vld [vmem:[#allocation2 + $0x6a0] sm:$0xff]
          %v1479 = vld [vmem:[#allocation2 + $0x6a8] sm:$0xff]
          %v1480 = vld [vmem:[#allocation2 + $0x6b0] sm:$0xff]
          %v1481 = vld [vmem:[#allocation2 + $0x6b8] sm:$0xff]
          %v1482 = vld [vmem:[#allocation2 + $0x6c0] sm:$0xff]
          %v1483 = vld [vmem:[#allocation2 + $0x6c8] sm:$0xff]
          %v1484 = vld [vmem:[#allocation2 + $0x6d0] sm:$0xff]
          %v1485 = vld [vmem:[#allocation2 + $0x6d8] sm:$0xff]
          %v1486 = vld [vmem:[#allocation2 + $0x6e0] sm:$0xff]
          %v1487 = vld [vmem:[#allocation2 + $0x6e8] sm:$0xff]
          %v1488 = vld [vmem:[#allocation2 + $0x6f0] sm:$0xff]
          %v1489 = vld [vmem:[#allocation2 + $0x6f8] sm:$0xff]
          %v1490 = vld [vmem:[#allocation2 + $0x700] sm:$0xff]
          %v1491 = vld [vmem:[#allocation2 + $0x708] sm:$0xff]
          %v1492 = vld [vmem:[#allocation2 + $0x710] sm:$0xff]
          %v1493 = vld [vmem:[#allocation2 + $0x718] sm:$0xff]
          %v1494 = vld [vmem:[#allocation2 + $0x720] sm:$0xff]
          %v1495 = vld [vmem:[#allocation2 + $0x728] sm:$0xff]
          %v1496 = vld [vmem:[#allocation2 + $0x730] sm:$0xff]
          %v1497 = vld [vmem:[#allocation2 + $0x738] sm:$0xff]
          %v1498 = vld [vmem:[#allocation2 + $0x740] sm:$0xff]
          %v1499 = vld [vmem:[#allocation2 + $0x748] sm:$0xff]
          %v1500 = vld [vmem:[#allocation2 + $0x750] sm:$0xff]
          %v1501 = vld [vmem:[#allocation2 + $0x758] sm:$0xff]
          %v1502 = vld [vmem:[#allocation2 + $0x760] sm:$0xff]
          %v1503 = vld [vmem:[#allocation2 + $0x768] sm:$0xff]
          %v1504 = vld [vmem:[#allocation2 + $0x770] sm:$0xff]
          %v1505 = vld [vmem:[#allocation2 + $0x778] sm:$0xff]
          %v1506 = vld [vmem:[#allocation2 + $0x780] sm:$0xff]
          %v1507 = vld [vmem:[#allocation2 + $0x788] sm:$0xff]
          %v1508 = vld [vmem:[#allocation2 + $0x790] sm:$0xff]
          %v1509 = vld [vmem:[#allocation2 + $0x798] sm:$0xff]
          %v1510 = vld [vmem:[#allocation2 + $0x7a0] sm:$0xff]
          %v1511 = vld [vmem:[#allocation2 + $0x7a8] sm:$0xff]
          %v1512 = vld [vmem:[#allocation2 + $0x7b0] sm:$0xff]
          %v1513 = vld [vmem:[#allocation2 + $0x7b8] sm:$0xff]
          %v1514 = vld [vmem:[#allocation2 + $0x7c0] sm:$0xff]
          %v1515 = vld [vmem:[#allocation2 + $0x7c8] sm:$0xff]
          %v1516 = vld [vmem:[#allocation2 + $0x7d0] sm:$0xff]
          %v1517 = vld [vmem:[#allocation2 + $0x7d8] sm:$0xff]
          %v1518 = vld [vmem:[#allocation2 + $0x7e0] sm:$0xff]
          %v1519 = vld [vmem:[#allocation2 + $0x7e8] sm:$0xff]
          %v1520 = vld [vmem:[#allocation2 + $0x7f0] sm:$0xff]
          %v1521 = vld [vmem:[#allocation2 + $0x7f8] sm:$0xff]
          %v1522 = vadd.f32 %v1266, %v1267
          %v1523 = vadd.f32 %v1522, %v1268
          %v1524 = vadd.f32 %v1523, %v1269
          %1525 = vadd.xlane.f32.xlu0 %v1524
          %v1526 = vpop.xlane.xlu0 %1525
          %v1527 = vadd.f32 %v1270, %v1271
          %v1528 = vadd.f32 %v1527, %v1272
          %v1529 = vadd.f32 %v1528, %v1273
          %1530 = vadd.xlane.f32.xlu0 %v1529
          %v1531 = vpop.xlane.xlu0 %1530
          %v1532 = vadd.f32 %v1274, %v1275
          %v1533 = vadd.f32 %v1532, %v1276
          %v1534 = vadd.f32 %v1533, %v1277
          %1535 = vadd.xlane.f32.xlu0 %v1534
          %v1536 = vpop.xlane.xlu0 %1535
          %v1537 = vadd.f32 %v1278, %v1279
          %v1538 = vadd.f32 %v1537, %v1280
          %v1539 = vadd.f32 %v1538, %v1281
          %1540 = vadd.xlane.f32.xlu0 %v1539
          %v1541 = vpop.xlane.xlu0 %1540
          %v1542 = vadd.f32 %v1282, %v1283
          %v1543 = vadd.f32 %v1542, %v1284
          %v1544 = vadd.f32 %v1543, %v1285
          %1545 = vadd.xlane.f32.xlu0 %v1544
          %v1546 = vpop.xlane.xlu0 %1545
          %v1547 = vadd.f32 %v1286, %v1287
          %v1548 = vadd.f32 %v1547, %v1288
          %v1549 = vadd.f32 %v1548, %v1289
          %1550 = vadd.xlane.f32.xlu0 %v1549
          %v1551 = vpop.xlane.xlu0 %1550
          %v1552 = vadd.f32 %v1290, %v1291
          %v1553 = vadd.f32 %v1552, %v1292
          %v1554 = vadd.f32 %v1553, %v1293
          %1555 = vadd.xlane.f32.xlu0 %v1554
          %v1556 = vpop.xlane.xlu0 %1555
          %v1557 = vadd.f32 %v1294, %v1295
          %v1558 = vadd.f32 %v1557, %v1296
          %v1559 = vadd.f32 %v1558, %v1297
          %1560 = vadd.xlane.f32.xlu0 %v1559
          %v1561 = vpop.xlane.xlu0 %1560
          %v1562 = vadd.f32 %v1298, %v1299
          %v1563 = vadd.f32 %v1562, %v1300
          %v1564 = vadd.f32 %v1563, %v1301
          %1565 = vadd.xlane.f32.xlu0 %v1564
          %v1566 = vpop.xlane.xlu0 %1565
          %v1567 = vadd.f32 %v1302, %v1303
          %v1568 = vadd.f32 %v1567, %v1304
          %v1569 = vadd.f32 %v1568, %v1305
          %1570 = vadd.xlane.f32.xlu0 %v1569
          %v1571 = vpop.xlane.xlu0 %1570
          %v1572 = vadd.f32 %v1306, %v1307
          %v1573 = vadd.f32 %v1572, %v1308
          %v1574 = vadd.f32 %v1573, %v1309
          %1575 = vadd.xlane.f32.xlu0 %v1574
          %v1576 = vpop.xlane.xlu0 %1575
          %v1577 = vadd.f32 %v1310, %v1311
          %v1578 = vadd.f32 %v1577, %v1312
          %v1579 = vadd.f32 %v1578, %v1313
          %1580 = vadd.xlane.f32.xlu0 %v1579
          %v1581 = vpop.xlane.xlu0 %1580
          %v1582 = vadd.f32 %v1314, %v1315
          %v1583 = vadd.f32 %v1582, %v1316
          %v1584 = vadd.f32 %v1583, %v1317
          %1585 = vadd.xlane.f32.xlu0 %v1584
          %v1586 = vpop.xlane.xlu0 %1585
          %v1587 = vadd.f32 %v1318, %v1319
          %v1588 = vadd.f32 %v1587, %v1320
          %v1589 = vadd.f32 %v1588, %v1321
          %1590 = vadd.xlane.f32.xlu0 %v1589
          %v1591 = vpop.xlane.xlu0 %1590
          %v1592 = vadd.f32 %v1322, %v1323
          %v1593 = vadd.f32 %v1592, %v1324
          %v1594 = vadd.f32 %v1593, %v1325
          %1595 = vadd.xlane.f32.xlu0 %v1594
          %v1596 = vpop.xlane.xlu0 %1595
          %v1597 = vadd.f32 %v1326, %v1327
          %v1598 = vadd.f32 %v1597, %v1328
          %v1599 = vadd.f32 %v1598, %v1329
          %1600 = vadd.xlane.f32.xlu0 %v1599
          %v1601 = vpop.xlane.xlu0 %1600
          %v1602 = vadd.f32 %v1330, %v1331
          %v1603 = vadd.f32 %v1602, %v1332
          %v1604 = vadd.f32 %v1603, %v1333
          %1605 = vadd.xlane.f32.xlu0 %v1604
          %v1606 = vpop.xlane.xlu0 %1605
          %v1607 = vadd.f32 %v1334, %v1335
          %v1608 = vadd.f32 %v1607, %v1336
          %v1609 = vadd.f32 %v1608, %v1337
          %1610 = vadd.xlane.f32.xlu0 %v1609
          %v1611 = vpop.xlane.xlu0 %1610
          %v1612 = vadd.f32 %v1338, %v1339
          %v1613 = vadd.f32 %v1612, %v1340
          %v1614 = vadd.f32 %v1613, %v1341
          %1615 = vadd.xlane.f32.xlu0 %v1614
          %v1616 = vpop.xlane.xlu0 %1615
          %v1617 = vadd.f32 %v1342, %v1343
          %v1618 = vadd.f32 %v1617, %v1344
          %v1619 = vadd.f32 %v1618, %v1345
          %1620 = vadd.xlane.f32.xlu0 %v1619
          %v1621 = vpop.xlane.xlu0 %1620
          %v1622 = vadd.f32 %v1346, %v1347
          %v1623 = vadd.f32 %v1622, %v1348
          %v1624 = vadd.f32 %v1623, %v1349
          %1625 = vadd.xlane.f32.xlu0 %v1624
          %v1626 = vpop.xlane.xlu0 %1625
          %v1627 = vadd.f32 %v1350, %v1351
          %v1628 = vadd.f32 %v1627, %v1352
          %v1629 = vadd.f32 %v1628, %v1353
          %1630 = vadd.xlane.f32.xlu0 %v1629
          %v1631 = vpop.xlane.xlu0 %1630
          %v1632 = vadd.f32 %v1354, %v1355
          %v1633 = vadd.f32 %v1632, %v1356
          %v1634 = vadd.f32 %v1633, %v1357
          %1635 = vadd.xlane.f32.xlu0 %v1634
          %v1636 = vpop.xlane.xlu0 %1635
          %v1637 = vadd.f32 %v1358, %v1359
          %v1638 = vadd.f32 %v1637, %v1360
          %v1639 = vadd.f32 %v1638, %v1361
          %1640 = vadd.xlane.f32.xlu0 %v1639
          %v1641 = vpop.xlane.xlu0 %1640
          %v1642 = vadd.f32 %v1362, %v1363
          %v1643 = vadd.f32 %v1642, %v1364
          %v1644 = vadd.f32 %v1643, %v1365
          %1645 = vadd.xlane.f32.xlu0 %v1644
          %v1646 = vpop.xlane.xlu0 %1645
          %v1647 = vadd.f32 %v1366, %v1367
          %v1648 = vadd.f32 %v1647, %v1368
          %v1649 = vadd.f32 %v1648, %v1369
          %1650 = vadd.xlane.f32.xlu0 %v1649
          %v1651 = vpop.xlane.xlu0 %1650
          %v1652 = vadd.f32 %v1370, %v1371
          %v1653 = vadd.f32 %v1652, %v1372
          %v1654 = vadd.f32 %v1653, %v1373
          %1655 = vadd.xlane.f32.xlu0 %v1654
          %v1656 = vpop.xlane.xlu0 %1655
          %v1657 = vadd.f32 %v1374, %v1375
          %v1658 = vadd.f32 %v1657, %v1376
          %v1659 = vadd.f32 %v1658, %v1377
          %1660 = vadd.xlane.f32.xlu0 %v1659
          %v1661 = vpop.xlane.xlu0 %1660
          %v1662 = vadd.f32 %v1378, %v1379
          %v1663 = vadd.f32 %v1662, %v1380
          %v1664 = vadd.f32 %v1663, %v1381
          %1665 = vadd.xlane.f32.xlu0 %v1664
          %v1666 = vpop.xlane.xlu0 %1665
          %v1667 = vadd.f32 %v1382, %v1383
          %v1668 = vadd.f32 %v1667, %v1384
          %v1669 = vadd.f32 %v1668, %v1385
          %1670 = vadd.xlane.f32.xlu0 %v1669
          %v1671 = vpop.xlane.xlu0 %1670
          %v1672 = vadd.f32 %v1386, %v1387
          %v1673 = vadd.f32 %v1672, %v1388
          %v1674 = vadd.f32 %v1673, %v1389
          %1675 = vadd.xlane.f32.xlu0 %v1674
          %v1676 = vpop.xlane.xlu0 %1675
          %v1677 = vadd.f32 %v1390, %v1391
          %v1678 = vadd.f32 %v1677, %v1392
          %v1679 = vadd.f32 %v1678, %v1393
          %1680 = vadd.xlane.f32.xlu0 %v1679
          %v1681 = vpop.xlane.xlu0 %1680
          %v1682 = vadd.f32 %v1394, %v1395
          %v1683 = vadd.f32 %v1682, %v1396
          %v1684 = vadd.f32 %v1683, %v1397
          %1685 = vadd.xlane.f32.xlu0 %v1684
          %v1686 = vpop.xlane.xlu0 %1685
          %v1687 = vadd.f32 %v1398, %v1399
          %v1688 = vadd.f32 %v1687, %v1400
          %v1689 = vadd.f32 %v1688, %v1401
          %1690 = vadd.xlane.f32.xlu0 %v1689
          %v1691 = vpop.xlane.xlu0 %1690
          %v1692 = vadd.f32 %v1402, %v1403
          %v1693 = vadd.f32 %v1692, %v1404
          %v1694 = vadd.f32 %v1693, %v1405
          %1695 = vadd.xlane.f32.xlu0 %v1694
          %v1696 = vpop.xlane.xlu0 %1695
          %v1697 = vadd.f32 %v1406, %v1407
          %v1698 = vadd.f32 %v1697, %v1408
          %v1699 = vadd.f32 %v1698, %v1409
          %1700 = vadd.xlane.f32.xlu0 %v1699
          %v1701 = vpop.xlane.xlu0 %1700
          %v1702 = vadd.f32 %v1410, %v1411
          %v1703 = vadd.f32 %v1702, %v1412
          %v1704 = vadd.f32 %v1703, %v1413
          %1705 = vadd.xlane.f32.xlu0 %v1704
          %v1706 = vpop.xlane.xlu0 %1705
          %v1707 = vadd.f32 %v1414, %v1415
          %v1708 = vadd.f32 %v1707, %v1416
          %v1709 = vadd.f32 %v1708, %v1417
          %1710 = vadd.xlane.f32.xlu0 %v1709
          %v1711 = vpop.xlane.xlu0 %1710
          %v1712 = vadd.f32 %v1418, %v1419
          %v1713 = vadd.f32 %v1712, %v1420
          %v1714 = vadd.f32 %v1713, %v1421
          %1715 = vadd.xlane.f32.xlu0 %v1714
          %v1716 = vpop.xlane.xlu0 %1715
          %v1717 = vadd.f32 %v1422, %v1423
          %v1718 = vadd.f32 %v1717, %v1424
          %v1719 = vadd.f32 %v1718, %v1425
          %1720 = vadd.xlane.f32.xlu0 %v1719
          %v1721 = vpop.xlane.xlu0 %1720
          %v1722 = vadd.f32 %v1426, %v1427
          %v1723 = vadd.f32 %v1722, %v1428
          %v1724 = vadd.f32 %v1723, %v1429
          %1725 = vadd.xlane.f32.xlu0 %v1724
          %v1726 = vpop.xlane.xlu0 %1725
          %v1727 = vadd.f32 %v1430, %v1431
          %v1728 = vadd.f32 %v1727, %v1432
          %v1729 = vadd.f32 %v1728, %v1433
          %1730 = vadd.xlane.f32.xlu0 %v1729
          %v1731 = vpop.xlane.xlu0 %1730
          %v1732 = vadd.f32 %v1434, %v1435
          %v1733 = vadd.f32 %v1732, %v1436
          %v1734 = vadd.f32 %v1733, %v1437
          %1735 = vadd.xlane.f32.xlu0 %v1734
          %v1736 = vpop.xlane.xlu0 %1735
          %v1737 = vadd.f32 %v1438, %v1439
          %v1738 = vadd.f32 %v1737, %v1440
          %v1739 = vadd.f32 %v1738, %v1441
          %1740 = vadd.xlane.f32.xlu0 %v1739
          %v1741 = vpop.xlane.xlu0 %1740
          %v1742 = vadd.f32 %v1442, %v1443
          %v1743 = vadd.f32 %v1742, %v1444
          %v1744 = vadd.f32 %v1743, %v1445
          %1745 = vadd.xlane.f32.xlu0 %v1744
          %v1746 = vpop.xlane.xlu0 %1745
          %v1747 = vadd.f32 %v1446, %v1447
          %v1748 = vadd.f32 %v1747, %v1448
          %v1749 = vadd.f32 %v1748, %v1449
          %1750 = vadd.xlane.f32.xlu0 %v1749
          %v1751 = vpop.xlane.xlu0 %1750
          %v1752 = vadd.f32 %v1450, %v1451
          %v1753 = vadd.f32 %v1752, %v1452
          %v1754 = vadd.f32 %v1753, %v1453
          %1755 = vadd.xlane.f32.xlu0 %v1754
          %v1756 = vpop.xlane.xlu0 %1755
          %v1757 = vadd.f32 %v1454, %v1455
          %v1758 = vadd.f32 %v1757, %v1456
          %v1759 = vadd.f32 %v1758, %v1457
          %1760 = vadd.xlane.f32.xlu0 %v1759
          %v1761 = vpop.xlane.xlu0 %1760
          %v1762 = vadd.f32 %v1458, %v1459
          %v1763 = vadd.f32 %v1762, %v1460
          %v1764 = vadd.f32 %v1763, %v1461
          %1765 = vadd.xlane.f32.xlu0 %v1764
          %v1766 = vpop.xlane.xlu0 %1765
          %v1767 = vadd.f32 %v1462, %v1463
          %v1768 = vadd.f32 %v1767, %v1464
          %v1769 = vadd.f32 %v1768, %v1465
          %1770 = vadd.xlane.f32.xlu0 %v1769
          %v1771 = vpop.xlane.xlu0 %1770
          %v1772 = vadd.f32 %v1466, %v1467
          %v1773 = vadd.f32 %v1772, %v1468
          %v1774 = vadd.f32 %v1773, %v1469
          %1775 = vadd.xlane.f32.xlu0 %v1774
          %v1776 = vpop.xlane.xlu0 %1775
          %v1777 = vadd.f32 %v1470, %v1471
          %v1778 = vadd.f32 %v1777, %v1472
          %v1779 = vadd.f32 %v1778, %v1473
          %1780 = vadd.xlane.f32.xlu0 %v1779
          %v1781 = vpop.xlane.xlu0 %1780
          %v1782 = vadd.f32 %v1474, %v1475
          %v1783 = vadd.f32 %v1782, %v1476
          %v1784 = vadd.f32 %v1783, %v1477
          %1785 = vadd.xlane.f32.xlu0 %v1784
          %v1786 = vpop.xlane.xlu0 %1785
          %v1787 = vadd.f32 %v1478, %v1479
          %v1788 = vadd.f32 %v1787, %v1480
          %v1789 = vadd.f32 %v1788, %v1481
          %1790 = vadd.xlane.f32.xlu0 %v1789
          %v1791 = vpop.xlane.xlu0 %1790
          %v1792 = vadd.f32 %v1482, %v1483
          %v1793 = vadd.f32 %v1792, %v1484
          %v1794 = vadd.f32 %v1793, %v1485
          %1795 = vadd.xlane.f32.xlu0 %v1794
          %v1796 = vpop.xlane.xlu0 %1795
          %v1797 = vadd.f32 %v1486, %v1487
          %v1798 = vadd.f32 %v1797, %v1488
          %v1799 = vadd.f32 %v1798, %v1489
          %1800 = vadd.xlane.f32.xlu0 %v1799
          %v1801 = vpop.xlane.xlu0 %1800
          %v1802 = vadd.f32 %v1490, %v1491
          %v1803 = vadd.f32 %v1802, %v1492
          %v1804 = vadd.f32 %v1803, %v1493
          %1805 = vadd.xlane.f32.xlu0 %v1804
          %v1806 = vpop.xlane.xlu0 %1805
          %v1807 = vadd.f32 %v1494, %v1495
          %v1808 = vadd.f32 %v1807, %v1496
          %v1809 = vadd.f32 %v1808, %v1497
          %1810 = vadd.xlane.f32.xlu0 %v1809
          %v1811 = vpop.xlane.xlu0 %1810
          %v1812 = vadd.f32 %v1498, %v1499
          %v1813 = vadd.f32 %v1812, %v1500
          %v1814 = vadd.f32 %v1813, %v1501
          %1815 = vadd.xlane.f32.xlu0 %v1814
          %v1816 = vpop.xlane.xlu0 %1815
          %v1817 = vadd.f32 %v1502, %v1503
          %v1818 = vadd.f32 %v1817, %v1504
          %v1819 = vadd.f32 %v1818, %v1505
          %1820 = vadd.xlane.f32.xlu0 %v1819
          %v1821 = vpop.xlane.xlu0 %1820
          %v1822 = vadd.f32 %v1506, %v1507
          %v1823 = vadd.f32 %v1822, %v1508
          %v1824 = vadd.f32 %v1823, %v1509
          %1825 = vadd.xlane.f32.xlu0 %v1824
          %v1826 = vpop.xlane.xlu0 %1825
          %v1827 = vadd.f32 %v1510, %v1511
          %v1828 = vadd.f32 %v1827, %v1512
          %v1829 = vadd.f32 %v1828, %v1513
          %1830 = vadd.xlane.f32.xlu0 %v1829
          %v1831 = vpop.xlane.xlu0 %1830
          %v1832 = vadd.f32 %v1514, %v1515
          %v1833 = vadd.f32 %v1832, %v1516
          %v1834 = vadd.f32 %v1833, %v1517
          %1835 = vadd.xlane.f32.xlu0 %v1834
          %v1836 = vpop.xlane.xlu0 %1835
          %v1837 = vadd.f32 %v1518, %v1519
          %v1838 = vadd.f32 %v1837, %v1520
          %v1839 = vadd.f32 %v1838, %v1521
          %1840 = vadd.xlane.f32.xlu0 %v1839
          %v1841 = vpop.xlane.xlu0 %1840
          %v1842 = vld [vmem:[%s305] sm:$0x1]
          %v1843 = vld [vmem:[%s305 + $0x1] sm:$0x1]
          %v1844 = vld [vmem:[%s315] sm:$0x1]
          %v1845 = vld [vmem:[%s315 + $0x1] sm:$0x1]
          %v1846 = vlaneseq
          %v1847 = vand.u32 %v1846, 127
          %vm1848 = vcmp.eq.s32.totalorder %v1842, 0
          %vm1849 = vcmp.eq.s32.totalorder %v1843, 0
          %v1850 = vrot.slane %v1847, 1
          %v1851 = vsel %vm1848, %v1847, 128
          %v1852 = vsel %vm1849, %v1850, 128
          %1853 = vst [vmem:[#allocation1] ss:$9 sm:$0xff] %v1851
          %s1854 = scalar_lea.vmem [#allocation1], 1
          %1855 = vst [vmem:[%s1854] ss:$9 sm:$0xff] %v1852
          %v1856 = vld [vmem:[#allocation1] sm:$0xff]
          %vm1857 = vcmask 1041408
          %v1858 = vsel %vm1857, %v1856, 2147483647
          %v1859 = vand.u32 %v1858, 65535
          %v1860 = vshra.s32 %v1858, 16
          %v1861 = vcvt.s32.f32 %v1859
          %v1862 = vcvt.s32.f32 %v1860
          %1863 = vmin.xlane.f32.xlu0 %v1862
          %v1864 = vpop.xlane.xlu0 %1863
          %vm1865 = vcmp.eq.f32.partialorder %v1862, %v1864
          %v1866 = vsel %vm1865, %v1861, inf
          %1867 = vmin.xlane.f32.xlu0 %v1866
          %v1868 = vpop.xlane.xlu0 %1867
          %v1869 = vcvt.f32.s32 %v1868
          %v1870 = vcvt.f32.s32 %v1864
          %v1871 = vshll.u32 %v1870, 16
          %v1872 = vadd.s32 %v1871, %v1869
          %vm1873 = vcmp.eq.s32.totalorder %v1844, 0
          %vm1874 = vcmp.eq.s32.totalorder %v1845, 0
          %v1875 = vsel %vm1873, %v1847, 128
          %v1876 = vsel %vm1874, %v1850, 128
          %1877 = vst [vmem:[#allocation1] ss:$9 sm:$0xff] %v1875
          %s1878 = scalar_lea.vmem [#allocation1], 1
          %1879 = vst [vmem:[%s1878] ss:$9 sm:$0xff] %v1876
          %v1880 = vld [vmem:[#allocation1] sm:$0xff]
          %v1881 = vsel %vm1857, %v1880, 2147483647
          %v1882 = vand.u32 %v1881, 65535
          %v1883 = vshra.s32 %v1881, 16
          %v1884 = vcvt.s32.f32 %v1882
          %v1885 = vcvt.s32.f32 %v1883
          %1886 = vmin.xlane.f32.xlu0 %v1885
          %v1887 = vpop.xlane.xlu0 %1886
          %vm1888 = vcmp.eq.f32.partialorder %v1885, %v1887
          %v1889 = vsel %vm1888, %v1884, inf
          %1890 = vmin.xlane.f32.xlu0 %v1889
          %v1891 = vpop.xlane.xlu0 %1890
          %v1892 = vcvt.f32.s32 %v1891
          %v1893 = vcvt.f32.s32 %v1887
          %v1894 = vshll.u32 %v1893, 16
          %v1895 = vadd.s32 %v1894, %v1892
          %vm1896 = vcmp.ne.s32.totalorder %v1842, %v1844
          %vm1897 = vcmp.ne.s32.totalorder %v1843, %v1845
          %v1898 = vsel %vm1896, 1, 0
          %v1899 = vsel %vm1897, 1, 0
          %1900 = vst [vmem:[#allocation1] ss:$9 sm:$0xff] %v1898
          %s1901 = scalar_lea.vmem [#allocation1], 1
          %1902 = vst [vmem:[%s1901] ss:$9 sm:$0xff] %v1899
          %v1903 = vld [vmem:[#allocation1] sm:$0xff]
          %v1904 = vsel %vm1857, %v1903, 2147483648
          %v1905 = vand.u32 %v1904, 65535
          %v1906 = vshra.s32 %v1904, 16
          %v1907 = vcvt.s32.f32 %v1905
          %v1908 = vcvt.s32.f32 %v1906
          %1909 = vmax.xlane.f32.xlu0 %v1908
          %v1910 = vpop.xlane.xlu0 %1909
          %vm1911 = vcmp.eq.f32.partialorder %v1908, %v1910
          %v1912 = vsel %vm1911, %v1907, -inf
          %1913 = vmax.xlane.f32.xlu0 %v1912
          %v1914 = vpop.xlane.xlu0 %1913
          %v1915 = vcvt.f32.s32 %v1914
          %v1916 = vcvt.f32.s32 %v1910
          %v1917 = vshll.u32 %v1916, 16
          %v1918 = vadd.s32 %v1917, %v1915
          %vm1919 = vcmp.gt.s32.totalorder %v1918, 0
          %v1920 = vsel %vm1896, %v1847, 128
          %v1921 = vsel %vm1897, %v1850, 128
          %1922 = vst [vmem:[#allocation1] ss:$9 sm:$0xff] %v1920
          %s1923 = scalar_lea.vmem [#allocation1], 1
          %1924 = vst [vmem:[%s1923] ss:$9 sm:$0xff] %v1921
          %v1925 = vld [vmem:[#allocation1] sm:$0xff]
          %v1926 = vsel %vm1857, %v1925, 2147483647
          %v1927 = vand.u32 %v1926, 65535
          %v1928 = vshra.s32 %v1926, 16
          %v1929 = vcvt.s32.f32 %v1927
          %v1930 = vcvt.s32.f32 %v1928
          %1931 = vmin.xlane.f32.xlu0 %v1930
          %v1932 = vpop.xlane.xlu0 %1931
          %vm1933 = vcmp.eq.f32.partialorder %v1930, %v1932
          %v1934 = vsel %vm1933, %v1929, inf
          %1935 = vmin.xlane.f32.xlu0 %v1934
          %v1936 = vpop.xlane.xlu0 %1935
          %v1937 = vcvt.f32.s32 %v1936
          %v1938 = vcvt.f32.s32 %v1932
          %v1939 = vshll.u32 %v1938, 16
          %v1940 = vadd.s32 %v1939, %v1937
          %v1941 = vsel %vm1919, %v1895, %v1872
          %vm1942 = vcmp.gt.s32.totalorder %v1872, %v1895
          %v1943 = vsel %vm1942, %v1872, %v1895
          %v1944 = vsel %vm1919, %v1943, 128
          %v1945 = vsel %vm1919, %v1940, 127
          %v1946 = vsub.s32 %v1872, 1
          %vm1947 = vcmp.lt.s32.totalorder %v1946, 0
          %v1948 = vadd.s32 %v1946, 128
          %v1949 = vsel %vm1947, %v1948, %v1946
          %v1950 = vsub.s32 %v1941, 1
          %vm1951 = vcmp.lt.s32.totalorder %v1950, 0
          %v1952 = vadd.s32 %v1950, 128
          %v1953 = vsel %vm1951, %v1952, %v1950
          %vm1954 = vcmp.eq.s32.totalorder %v1847, %v1949
          %v1987 = vperm.slane %v1526, %v1847
          %v1988 = vadd.s32 %v1847, 4294967288
          %v1989 = vperm.slane %v1531, %v1988
          %vm1990 = vcmask 130112
          %v1991 = vsel %vm1990, %v1989, %v1987
          %v1992 = vadd.s32 %v1847, 4294967280
          %v1993 = vperm.slane %v1536, %v1992
          %vm1994 = vcmask 195712
          %v1995 = vsel %vm1994, %v1993, %v1991
          %v1996 = vadd.s32 %v1847, 4294967272
          %v1997 = vperm.slane %v1541, %v1996
          %vm1998 = vcmask 261312
          %v1999 = vsel %vm1998, %v1997, %v1995
          %v2000 = vadd.s32 %v1847, 4294967264
          %v2001 = vperm.slane %v1546, %v2000
          %vm2002 = vcmask 326912
          %v2003 = vsel %vm2002, %v2001, %v1999
          %v2004 = vadd.s32 %v1847, 4294967256
          %v2005 = vperm.slane %v1551, %v2004
          %vm2006 = vcmask 392512
          %v2007 = vsel %vm2006, %v2005, %v2003
          %v2008 = vadd.s32 %v1847, 4294967248
          %v2009 = vperm.slane %v1556, %v2008
          %vm2010 = vcmask 458112
          %v2011 = vsel %vm2010, %v2009, %v2007
          %v2012 = vadd.s32 %v1847, 4294967240
          %v2013 = vperm.slane %v1561, %v2012
          %vm2014 = vcmask 523712
          %v2015 = vsel %vm2014, %v2013, %v2011
          %v2016 = vadd.s32 %v1847, 4294967232
          %v2017 = vperm.slane %v1566, %v2016
          %vm2018 = vcmask 589312
          %v2019 = vsel %vm2018, %v2017, %v2015
          %v2020 = vadd.s32 %v1847, 4294967224
          %v2021 = vperm.slane %v1571, %v2020
          %vm2022 = vcmask 654912
          %v2023 = vsel %vm2022, %v2021, %v2019
          %v2024 = vadd.s32 %v1847, 4294967216
          %v2025 = vperm.slane %v1576, %v2024
          %vm2026 = vcmask 720512
          %v2027 = vsel %vm2026, %v2025, %v2023
          %v2028 = vadd.s32 %v1847, 4294967208
          %v2029 = vperm.slane %v1581, %v2028
          %vm2030 = vcmask 786112
          %v2031 = vsel %vm2030, %v2029, %v2027
          %v2032 = vadd.s32 %v1847, 4294967200
          %v2033 = vperm.slane %v1586, %v2032
          %vm2034 = vcmask 851712
          %v2035 = vsel %vm2034, %v2033, %v2031
          %v2036 = vadd.s32 %v1847, 4294967192
          %v2037 = vperm.slane %v1591, %v2036
          %vm2038 = vcmask 917312
          %v2039 = vsel %vm2038, %v2037, %v2035
          %v2040 = vadd.s32 %v1847, 4294967184
          %v2041 = vperm.slane %v1596, %v2040
          %vm2042 = vcmask 982912
          %v2043 = vsel %vm2042, %v2041, %v2039
          %v2044 = vadd.s32 %v1847, 4294967176
          %v2045 = vperm.slane %v1601, %v2044
          %vm2046 = vcmask 1048512
          %v2047 = vsel %vm2046, %v2045, %v2043
          %v2048 = vperm.slane %v1606, %v1847
          %v2049 = vperm.slane %v1611, %v1988
          %v2050 = vsel %vm1990, %v2049, %v2048
          %v2051 = vperm.slane %v1616, %v1992
          %v2052 = vsel %vm1994, %v2051, %v2050
          %v2053 = vperm.slane %v1621, %v1996
          %v2054 = vsel %vm1998, %v2053, %v2052
          %v2055 = vperm.slane %v1626, %v2000
          %v2056 = vsel %vm2002, %v2055, %v2054
          %v2057 = vperm.slane %v1631, %v2004
          %v2058 = vsel %vm2006, %v2057, %v2056
          %v2059 = vperm.slane %v1636, %v2008
          %v2060 = vsel %vm2010, %v2059, %v2058
          %v2061 = vperm.slane %v1641, %v2012
          %v2062 = vsel %vm2014, %v2061, %v2060
          %v2063 = vperm.slane %v1646, %v2016
          %v2064 = vsel %vm2018, %v2063, %v2062
          %v2065 = vperm.slane %v1651, %v2020
          %v2066 = vsel %vm2022, %v2065, %v2064
          %v2067 = vperm.slane %v1656, %v2024
          %v2068 = vsel %vm2026, %v2067, %v2066
          %v2069 = vperm.slane %v1661, %v2028
          %v2070 = vsel %vm2030, %v2069, %v2068
          %v2071 = vperm.slane %v1666, %v2032
          %v2072 = vsel %vm2034, %v2071, %v2070
          %v2073 = vperm.slane %v1671, %v2036
          %v2074 = vsel %vm2038, %v2073, %v2072
          %v2075 = vperm.slane %v1676, %v2040
          %v2076 = vsel %vm2042, %v2075, %v2074
          %v2077 = vperm.slane %v1681, %v2044
          %v2078 = vsel %vm2046, %v2077, %v2076
          %vm2079 = vcmask 1041409
          %v2080 = vsel %vm2079, %v2078, %v2047
          %v2082 = vsel %vm1954, %v2080, 0.0
          %v2083 = vsel %vm1857, %v2082, 0.0
          %2084 = vadd.xlane.f32.xlu0 %v2083
          %v2085 = vpop.xlane.xlu0 %2084
          %vm2086 = vcmp.eq.s32.totalorder %v1847, %v1953
          %v2119 = vperm.slane %v1686, %v1847
          %v2120 = vperm.slane %v1691, %v1988
          %v2121 = vsel %vm1990, %v2120, %v2119
          %v2122 = vperm.slane %v1696, %v1992
          %v2123 = vsel %vm1994, %v2122, %v2121
          %v2124 = vperm.slane %v1701, %v1996
          %v2125 = vsel %vm1998, %v2124, %v2123
          %v2126 = vperm.slane %v1706, %v2000
          %v2127 = vsel %vm2002, %v2126, %v2125
          %v2128 = vperm.slane %v1711, %v2004
          %v2129 = vsel %vm2006, %v2128, %v2127
          %v2130 = vperm.slane %v1716, %v2008
          %v2131 = vsel %vm2010, %v2130, %v2129
          %v2132 = vperm.slane %v1721, %v2012
          %v2133 = vsel %vm2014, %v2132, %v2131
          %v2134 = vperm.slane %v1726, %v2016
          %v2135 = vsel %vm2018, %v2134, %v2133
          %v2136 = vperm.slane %v1731, %v2020
          %v2137 = vsel %vm2022, %v2136, %v2135
          %v2138 = vperm.slane %v1736, %v2024
          %v2139 = vsel %vm2026, %v2138, %v2137
          %v2140 = vperm.slane %v1741, %v2028
          %v2141 = vsel %vm2030, %v2140, %v2139
          %v2142 = vperm.slane %v1746, %v2032
          %v2143 = vsel %vm2034, %v2142, %v2141
          %v2144 = vperm.slane %v1751, %v2036
          %v2145 = vsel %vm2038, %v2144, %v2143
          %v2146 = vperm.slane %v1756, %v2040
          %v2147 = vsel %vm2042, %v2146, %v2145
          %v2148 = vperm.slane %v1761, %v2044
          %v2149 = vsel %vm2046, %v2148, %v2147
          %v2150 = vperm.slane %v1766, %v1847
          %v2151 = vperm.slane %v1771, %v1988
          %v2152 = vsel %vm1990, %v2151, %v2150
          %v2153 = vperm.slane %v1776, %v1992
          %v2154 = vsel %vm1994, %v2153, %v2152
          %v2155 = vperm.slane %v1781, %v1996
          %v2156 = vsel %vm1998, %v2155, %v2154
          %v2157 = vperm.slane %v1786, %v2000
          %v2158 = vsel %vm2002, %v2157, %v2156
          %v2159 = vperm.slane %v1791, %v2004
          %v2160 = vsel %vm2006, %v2159, %v2158
          %v2161 = vperm.slane %v1796, %v2008
          %v2162 = vsel %vm2010, %v2161, %v2160
          %v2163 = vperm.slane %v1801, %v2012
          %v2164 = vsel %vm2014, %v2163, %v2162
          %v2165 = vperm.slane %v1806, %v2016
          %v2166 = vsel %vm2018, %v2165, %v2164
          %v2167 = vperm.slane %v1811, %v2020
          %v2168 = vsel %vm2022, %v2167, %v2166
          %v2169 = vperm.slane %v1816, %v2024
          %v2170 = vsel %vm2026, %v2169, %v2168
          %v2171 = vperm.slane %v1821, %v2028
          %v2172 = vsel %vm2030, %v2171, %v2170
          %v2173 = vperm.slane %v1826, %v2032
          %v2174 = vsel %vm2034, %v2173, %v2172
          %v2175 = vperm.slane %v1831, %v2036
          %v2176 = vsel %vm2038, %v2175, %v2174
          %v2177 = vperm.slane %v1836, %v2040
          %v2178 = vsel %vm2042, %v2177, %v2176
          %v2179 = vperm.slane %v1841, %v2044
          %v2180 = vsel %vm2046, %v2179, %v2178
          %v2181 = vsel %vm2079, %v2180, %v2149
          %v2183 = vsel %vm2086, %v2181, 0.0
          %v2184 = vsel %vm1857, %v2183, 0.0
          %2185 = vadd.xlane.f32.xlu0 %v2184
          %v2186 = vpop.xlane.xlu0 %2185
          %vm2187 = vcmp.ge.s32.totalorder %v1847, %v1945
          %vm2188 = vcmp.lt.s32.totalorder %v1847, %v1944
          %vm2189 = vmand %vm2187, %vm2188
          %v2190 = vsub.f32 %v1686, %v1526
          %v2191 = vsub.f32 %v1691, %v1531
          %v2192 = vsub.f32 %v1696, %v1536
          %v2193 = vsub.f32 %v1701, %v1541
          %v2194 = vsub.f32 %v1706, %v1546
          %v2195 = vsub.f32 %v1711, %v1551
          %v2196 = vsub.f32 %v1716, %v1556
          %v2197 = vsub.f32 %v1721, %v1561
          %v2198 = vsub.f32 %v1726, %v1566
          %v2199 = vsub.f32 %v1731, %v1571
          %v2200 = vsub.f32 %v1736, %v1576
          %v2201 = vsub.f32 %v1741, %v1581
          %v2202 = vsub.f32 %v1746, %v1586
          %v2203 = vsub.f32 %v1751, %v1591
          %v2204 = vsub.f32 %v1756, %v1596
          %v2205 = vsub.f32 %v1761, %v1601
          %v2206 = vsub.f32 %v1766, %v1606
          %v2207 = vsub.f32 %v1771, %v1611
          %v2208 = vsub.f32 %v1776, %v1616
          %v2209 = vsub.f32 %v1781, %v1621
          %v2210 = vsub.f32 %v1786, %v1626
          %v2211 = vsub.f32 %v1791, %v1631
          %v2212 = vsub.f32 %v1796, %v1636
          %v2213 = vsub.f32 %v1801, %v1641
          %v2214 = vsub.f32 %v1806, %v1646
          %v2215 = vsub.f32 %v1811, %v1651
          %v2216 = vsub.f32 %v1816, %v1656
          %v2217 = vsub.f32 %v1821, %v1661
          %v2218 = vsub.f32 %v1826, %v1666
          %v2219 = vsub.f32 %v1831, %v1671
          %v2220 = vsub.f32 %v1836, %v1676
          %v2221 = vsub.f32 %v1841, %v1681
          %vm2222 = vcmp.gt.f32.partialorder %v2190, 0.0
          %vm2223 = vcmp.gt.f32.partialorder %v2191, 0.0
          %vm2224 = vcmp.gt.f32.partialorder %v2192, 0.0
          %vm2225 = vcmp.gt.f32.partialorder %v2193, 0.0
          %vm2226 = vcmp.gt.f32.partialorder %v2194, 0.0
          %vm2227 = vcmp.gt.f32.partialorder %v2195, 0.0
          %vm2228 = vcmp.gt.f32.partialorder %v2196, 0.0
          %vm2229 = vcmp.gt.f32.partialorder %v2197, 0.0
          %vm2230 = vcmp.gt.f32.partialorder %v2198, 0.0
          %vm2231 = vcmp.gt.f32.partialorder %v2199, 0.0
          %vm2232 = vcmp.gt.f32.partialorder %v2200, 0.0
          %vm2233 = vcmp.gt.f32.partialorder %v2201, 0.0
          %vm2234 = vcmp.gt.f32.partialorder %v2202, 0.0
          %vm2235 = vcmp.gt.f32.partialorder %v2203, 0.0
          %vm2236 = vcmp.gt.f32.partialorder %v2204, 0.0
          %vm2237 = vcmp.gt.f32.partialorder %v2205, 0.0
          %vm2238 = vcmp.gt.f32.partialorder %v2206, 0.0
          %vm2239 = vcmp.gt.f32.partialorder %v2207, 0.0
          %vm2240 = vcmp.gt.f32.partialorder %v2208, 0.0
          %vm2241 = vcmp.gt.f32.partialorder %v2209, 0.0
          %vm2242 = vcmp.gt.f32.partialorder %v2210, 0.0
          %vm2243 = vcmp.gt.f32.partialorder %v2211, 0.0
          %vm2244 = vcmp.gt.f32.partialorder %v2212, 0.0
          %vm2245 = vcmp.gt.f32.partialorder %v2213, 0.0
          %vm2246 = vcmp.gt.f32.partialorder %v2214, 0.0
          %vm2247 = vcmp.gt.f32.partialorder %v2215, 0.0
          %vm2248 = vcmp.gt.f32.partialorder %v2216, 0.0
          %vm2249 = vcmp.gt.f32.partialorder %v2217, 0.0
          %vm2250 = vcmp.gt.f32.partialorder %v2218, 0.0
          %vm2251 = vcmp.gt.f32.partialorder %v2219, 0.0
          %vm2252 = vcmp.gt.f32.partialorder %v2220, 0.0
          %vm2253 = vcmp.gt.f32.partialorder %v2221, 0.0
          %v2254 = vsub.f32 0.0, %v2190
          %v2255 = vsub.f32 0.0, %v2191
          %v2256 = vsub.f32 0.0, %v2192
          %v2257 = vsub.f32 0.0, %v2193
          %v2258 = vsub.f32 0.0, %v2194
          %v2259 = vsub.f32 0.0, %v2195
          %v2260 = vsub.f32 0.0, %v2196
          %v2261 = vsub.f32 0.0, %v2197
          %v2262 = vsub.f32 0.0, %v2198
          %v2263 = vsub.f32 0.0, %v2199
          %v2264 = vsub.f32 0.0, %v2200
          %v2265 = vsub.f32 0.0, %v2201
          %v2266 = vsub.f32 0.0, %v2202
          %v2267 = vsub.f32 0.0, %v2203
          %v2268 = vsub.f32 0.0, %v2204
          %v2269 = vsub.f32 0.0, %v2205
          %v2270 = vsub.f32 0.0, %v2206
          %v2271 = vsub.f32 0.0, %v2207
          %v2272 = vsub.f32 0.0, %v2208
          %v2273 = vsub.f32 0.0, %v2209
          %v2274 = vsub.f32 0.0, %v2210
          %v2275 = vsub.f32 0.0, %v2211
          %v2276 = vsub.f32 0.0, %v2212
          %v2277 = vsub.f32 0.0, %v2213
          %v2278 = vsub.f32 0.0, %v2214
          %v2279 = vsub.f32 0.0, %v2215
          %v2280 = vsub.f32 0.0, %v2216
          %v2281 = vsub.f32 0.0, %v2217
          %v2282 = vsub.f32 0.0, %v2218
          %v2283 = vsub.f32 0.0, %v2219
          %v2284 = vsub.f32 0.0, %v2220
          %v2285 = vsub.f32 0.0, %v2221
          %v2286 = vmul.f32 %v2254, 1.442695
          %v2287 = vpow.pop %v2286
          %v2288 = vmul.f32 %v2255, 1.442695
          %v2289 = vpow.pop %v2288
          %v2290 = vmul.f32 %v2256, 1.442695
          %v2291 = vpow.pop %v2290
          %v2292 = vmul.f32 %v2257, 1.442695
          %v2293 = vpow.pop %v2292
          %v2294 = vmul.f32 %v2258, 1.442695
          %v2295 = vpow.pop %v2294
          %v2296 = vmul.f32 %v2259, 1.442695
          %v2297 = vpow.pop %v2296
          %v2298 = vmul.f32 %v2260, 1.442695
          %v2299 = vpow.pop %v2298
          %v2300 = vmul.f32 %v2261, 1.442695
          %v2301 = vpow.pop %v2300
          %v2302 = vmul.f32 %v2262, 1.442695
          %v2303 = vpow.pop %v2302
          %v2304 = vmul.f32 %v2263, 1.442695
          %v2305 = vpow.pop %v2304
          %v2306 = vmul.f32 %v2264, 1.442695
          %v2307 = vpow.pop %v2306
          %v2308 = vmul.f32 %v2265, 1.442695
          %v2309 = vpow.pop %v2308
          %v2310 = vmul.f32 %v2266, 1.442695
          %v2311 = vpow.pop %v2310
          %v2312 = vmul.f32 %v2267, 1.442695
          %v2313 = vpow.pop %v2312
          %v2314 = vmul.f32 %v2268, 1.442695
          %v2315 = vpow.pop %v2314
          %v2316 = vmul.f32 %v2269, 1.442695
          %v2317 = vpow.pop %v2316
          %v2318 = vmul.f32 %v2270, 1.442695
          %v2319 = vpow.pop %v2318
          %v2320 = vmul.f32 %v2271, 1.442695
          %v2321 = vpow.pop %v2320
          %v2322 = vmul.f32 %v2272, 1.442695
          %v2323 = vpow.pop %v2322
          %v2324 = vmul.f32 %v2273, 1.442695
          %v2325 = vpow.pop %v2324
          %v2326 = vmul.f32 %v2274, 1.442695
          %v2327 = vpow.pop %v2326
          %v2328 = vmul.f32 %v2275, 1.442695
          %v2329 = vpow.pop %v2328
          %v2330 = vmul.f32 %v2276, 1.442695
          %v2331 = vpow.pop %v2330
          %v2332 = vmul.f32 %v2277, 1.442695
          %v2333 = vpow.pop %v2332
          %v2334 = vmul.f32 %v2278, 1.442695
          %v2335 = vpow.pop %v2334
          %v2336 = vmul.f32 %v2279, 1.442695
          %v2337 = vpow.pop %v2336
          %v2338 = vmul.f32 %v2280, 1.442695
          %v2339 = vpow.pop %v2338
          %v2340 = vmul.f32 %v2281, 1.442695
          %v2341 = vpow.pop %v2340
          %v2342 = vmul.f32 %v2282, 1.442695
          %v2343 = vpow.pop %v2342
          %v2344 = vmul.f32 %v2283, 1.442695
          %v2345 = vpow.pop %v2344
          %v2346 = vmul.f32 %v2284, 1.442695
          %v2347 = vpow.pop %v2346
          %v2348 = vmul.f32 %v2285, 1.442695
          %v2349 = vpow.pop %v2348
          %v2350 = vadd.f32 %v2287, 1.0
          %v2351 = vlog2.pop %v2350
          %v2352 = vmul.f32 %v2351, 0.6931472
          %v2353 = vmul.f32 -0.5, %v2287
          %v2354 = vadd.f32 %v2353, 1.0
          %v2355 = vmul.f32 %v2354, %v2287
          %v2356 = vand.u32 2147483647, %v2287
          %vm2357 = vcmp.lt.f32.partialorder %v2356, 0.0004427343
          %v2358 = vsel %vm2357, %v2355, %v2352
          %v2359 = vadd.f32 %v2289, 1.0
          %v2360 = vlog2.pop %v2359
          %v2361 = vmul.f32 %v2360, 0.6931472
          %v2362 = vmul.f32 -0.5, %v2289
          %v2363 = vadd.f32 %v2362, 1.0
          %v2364 = vmul.f32 %v2363, %v2289
          %v2365 = vand.u32 2147483647, %v2289
          %vm2366 = vcmp.lt.f32.partialorder %v2365, 0.0004427343
          %v2367 = vsel %vm2366, %v2364, %v2361
          %v2368 = vadd.f32 %v2291, 1.0
          %v2369 = vlog2.pop %v2368
          %v2370 = vmul.f32 %v2369, 0.6931472
          %v2371 = vmul.f32 -0.5, %v2291
          %v2372 = vadd.f32 %v2371, 1.0
          %v2373 = vmul.f32 %v2372, %v2291
          %v2374 = vand.u32 2147483647, %v2291
          %vm2375 = vcmp.lt.f32.partialorder %v2374, 0.0004427343
          %v2376 = vsel %vm2375, %v2373, %v2370
          %v2377 = vadd.f32 %v2293, 1.0
          %v2378 = vlog2.pop %v2377
          %v2379 = vmul.f32 %v2378, 0.6931472
          %v2380 = vmul.f32 -0.5, %v2293
          %v2381 = vadd.f32 %v2380, 1.0
          %v2382 = vmul.f32 %v2381, %v2293
          %v2383 = vand.u32 2147483647, %v2293
          %vm2384 = vcmp.lt.f32.partialorder %v2383, 0.0004427343
          %v2385 = vsel %vm2384, %v2382, %v2379
          %v2386 = vadd.f32 %v2295, 1.0
          %v2387 = vlog2.pop %v2386
          %v2388 = vmul.f32 %v2387, 0.6931472
          %v2389 = vmul.f32 -0.5, %v2295
          %v2390 = vadd.f32 %v2389, 1.0
          %v2391 = vmul.f32 %v2390, %v2295
          %v2392 = vand.u32 2147483647, %v2295
          %vm2393 = vcmp.lt.f32.partialorder %v2392, 0.0004427343
          %v2394 = vsel %vm2393, %v2391, %v2388
          %v2395 = vadd.f32 %v2297, 1.0
          %v2396 = vlog2.pop %v2395
          %v2397 = vmul.f32 %v2396, 0.6931472
          %v2398 = vmul.f32 -0.5, %v2297
          %v2399 = vadd.f32 %v2398, 1.0
          %v2400 = vmul.f32 %v2399, %v2297
          %v2401 = vand.u32 2147483647, %v2297
          %vm2402 = vcmp.lt.f32.partialorder %v2401, 0.0004427343
          %v2403 = vsel %vm2402, %v2400, %v2397
          %v2404 = vadd.f32 %v2299, 1.0
          %v2405 = vlog2.pop %v2404
          %v2406 = vmul.f32 %v2405, 0.6931472
          %v2407 = vmul.f32 -0.5, %v2299
          %v2408 = vadd.f32 %v2407, 1.0
          %v2409 = vmul.f32 %v2408, %v2299
          %v2410 = vand.u32 2147483647, %v2299
          %vm2411 = vcmp.lt.f32.partialorder %v2410, 0.0004427343
          %v2412 = vsel %vm2411, %v2409, %v2406
          %v2413 = vadd.f32 %v2301, 1.0
          %v2414 = vlog2.pop %v2413
          %v2415 = vmul.f32 %v2414, 0.6931472
          %v2416 = vmul.f32 -0.5, %v2301
          %v2417 = vadd.f32 %v2416, 1.0
          %v2418 = vmul.f32 %v2417, %v2301
          %v2419 = vand.u32 2147483647, %v2301
          %vm2420 = vcmp.lt.f32.partialorder %v2419, 0.0004427343
          %v2421 = vsel %vm2420, %v2418, %v2415
          %v2422 = vadd.f32 %v2303, 1.0
          %v2423 = vlog2.pop %v2422
          %v2424 = vmul.f32 %v2423, 0.6931472
          %v2425 = vmul.f32 -0.5, %v2303
          %v2426 = vadd.f32 %v2425, 1.0
          %v2427 = vmul.f32 %v2426, %v2303
          %v2428 = vand.u32 2147483647, %v2303
          %vm2429 = vcmp.lt.f32.partialorder %v2428, 0.0004427343
          %v2430 = vsel %vm2429, %v2427, %v2424
          %v2431 = vadd.f32 %v2305, 1.0
          %v2432 = vlog2.pop %v2431
          %v2433 = vmul.f32 %v2432, 0.6931472
          %v2434 = vmul.f32 -0.5, %v2305
          %v2435 = vadd.f32 %v2434, 1.0
          %v2436 = vmul.f32 %v2435, %v2305
          %v2437 = vand.u32 2147483647, %v2305
          %vm2438 = vcmp.lt.f32.partialorder %v2437, 0.0004427343
          %v2439 = vsel %vm2438, %v2436, %v2433
          %v2440 = vadd.f32 %v2307, 1.0
          %v2441 = vlog2.pop %v2440
          %v2442 = vmul.f32 %v2441, 0.6931472
          %v2443 = vmul.f32 -0.5, %v2307
          %v2444 = vadd.f32 %v2443, 1.0
          %v2445 = vmul.f32 %v2444, %v2307
          %v2446 = vand.u32 2147483647, %v2307
          %vm2447 = vcmp.lt.f32.partialorder %v2446, 0.0004427343
          %v2448 = vsel %vm2447, %v2445, %v2442
          %v2449 = vadd.f32 %v2309, 1.0
          %v2450 = vlog2.pop %v2449
          %v2451 = vmul.f32 %v2450, 0.6931472
          %v2452 = vmul.f32 -0.5, %v2309
          %v2453 = vadd.f32 %v2452, 1.0
          %v2454 = vmul.f32 %v2453, %v2309
          %v2455 = vand.u32 2147483647, %v2309
          %vm2456 = vcmp.lt.f32.partialorder %v2455, 0.0004427343
          %v2457 = vsel %vm2456, %v2454, %v2451
          %v2458 = vadd.f32 %v2311, 1.0
          %v2459 = vlog2.pop %v2458
          %v2460 = vmul.f32 %v2459, 0.6931472
          %v2461 = vmul.f32 -0.5, %v2311
          %v2462 = vadd.f32 %v2461, 1.0
          %v2463 = vmul.f32 %v2462, %v2311
          %v2464 = vand.u32 2147483647, %v2311
          %vm2465 = vcmp.lt.f32.partialorder %v2464, 0.0004427343
          %v2466 = vsel %vm2465, %v2463, %v2460
          %v2467 = vadd.f32 %v2313, 1.0
          %v2468 = vlog2.pop %v2467
          %v2469 = vmul.f32 %v2468, 0.6931472
          %v2470 = vmul.f32 -0.5, %v2313
          %v2471 = vadd.f32 %v2470, 1.0
          %v2472 = vmul.f32 %v2471, %v2313
          %v2473 = vand.u32 2147483647, %v2313
          %vm2474 = vcmp.lt.f32.partialorder %v2473, 0.0004427343
          %v2475 = vsel %vm2474, %v2472, %v2469
          %v2476 = vadd.f32 %v2315, 1.0
          %v2477 = vlog2.pop %v2476
          %v2478 = vmul.f32 %v2477, 0.6931472
          %v2479 = vmul.f32 -0.5, %v2315
          %v2480 = vadd.f32 %v2479, 1.0
          %v2481 = vmul.f32 %v2480, %v2315
          %v2482 = vand.u32 2147483647, %v2315
          %vm2483 = vcmp.lt.f32.partialorder %v2482, 0.0004427343
          %v2484 = vsel %vm2483, %v2481, %v2478
          %v2485 = vadd.f32 %v2317, 1.0
          %v2486 = vlog2.pop %v2485
          %v2487 = vmul.f32 %v2486, 0.6931472
          %v2488 = vmul.f32 -0.5, %v2317
          %v2489 = vadd.f32 %v2488, 1.0
          %v2490 = vmul.f32 %v2489, %v2317
          %v2491 = vand.u32 2147483647, %v2317
          %vm2492 = vcmp.lt.f32.partialorder %v2491, 0.0004427343
          %v2493 = vsel %vm2492, %v2490, %v2487
          %v2494 = vadd.f32 %v2319, 1.0
          %v2495 = vlog2.pop %v2494
          %v2496 = vmul.f32 %v2495, 0.6931472
          %v2497 = vmul.f32 -0.5, %v2319
          %v2498 = vadd.f32 %v2497, 1.0
          %v2499 = vmul.f32 %v2498, %v2319
          %v2500 = vand.u32 2147483647, %v2319
          %vm2501 = vcmp.lt.f32.partialorder %v2500, 0.0004427343
          %v2502 = vsel %vm2501, %v2499, %v2496
          %v2503 = vadd.f32 %v2321, 1.0
          %v2504 = vlog2.pop %v2503
          %v2505 = vmul.f32 %v2504, 0.6931472
          %v2506 = vmul.f32 -0.5, %v2321
          %v2507 = vadd.f32 %v2506, 1.0
          %v2508 = vmul.f32 %v2507, %v2321
          %v2509 = vand.u32 2147483647, %v2321
          %vm2510 = vcmp.lt.f32.partialorder %v2509, 0.0004427343
          %v2511 = vsel %vm2510, %v2508, %v2505
          %v2512 = vadd.f32 %v2323, 1.0
          %v2513 = vlog2.pop %v2512
          %v2514 = vmul.f32 %v2513, 0.6931472
          %v2515 = vmul.f32 -0.5, %v2323
          %v2516 = vadd.f32 %v2515, 1.0
          %v2517 = vmul.f32 %v2516, %v2323
          %v2518 = vand.u32 2147483647, %v2323
          %vm2519 = vcmp.lt.f32.partialorder %v2518, 0.0004427343
          %v2520 = vsel %vm2519, %v2517, %v2514
          %v2521 = vadd.f32 %v2325, 1.0
          %v2522 = vlog2.pop %v2521
          %v2523 = vmul.f32 %v2522, 0.6931472
          %v2524 = vmul.f32 -0.5, %v2325
          %v2525 = vadd.f32 %v2524, 1.0
          %v2526 = vmul.f32 %v2525, %v2325
          %v2527 = vand.u32 2147483647, %v2325
          %vm2528 = vcmp.lt.f32.partialorder %v2527, 0.0004427343
          %v2529 = vsel %vm2528, %v2526, %v2523
          %v2530 = vadd.f32 %v2327, 1.0
          %v2531 = vlog2.pop %v2530
          %v2532 = vmul.f32 %v2531, 0.6931472
          %v2533 = vmul.f32 -0.5, %v2327
          %v2534 = vadd.f32 %v2533, 1.0
          %v2535 = vmul.f32 %v2534, %v2327
          %v2536 = vand.u32 2147483647, %v2327
          %vm2537 = vcmp.lt.f32.partialorder %v2536, 0.0004427343
          %v2538 = vsel %vm2537, %v2535, %v2532
          %v2539 = vadd.f32 %v2329, 1.0
          %v2540 = vlog2.pop %v2539
          %v2541 = vmul.f32 %v2540, 0.6931472
          %v2542 = vmul.f32 -0.5, %v2329
          %v2543 = vadd.f32 %v2542, 1.0
          %v2544 = vmul.f32 %v2543, %v2329
          %v2545 = vand.u32 2147483647, %v2329
          %vm2546 = vcmp.lt.f32.partialorder %v2545, 0.0004427343
          %v2547 = vsel %vm2546, %v2544, %v2541
          %v2548 = vadd.f32 %v2331, 1.0
          %v2549 = vlog2.pop %v2548
          %v2550 = vmul.f32 %v2549, 0.6931472
          %v2551 = vmul.f32 -0.5, %v2331
          %v2552 = vadd.f32 %v2551, 1.0
          %v2553 = vmul.f32 %v2552, %v2331
          %v2554 = vand.u32 2147483647, %v2331
          %vm2555 = vcmp.lt.f32.partialorder %v2554, 0.0004427343
          %v2556 = vsel %vm2555, %v2553, %v2550
          %v2557 = vadd.f32 %v2333, 1.0
          %v2558 = vlog2.pop %v2557
          %v2559 = vmul.f32 %v2558, 0.6931472
          %v2560 = vmul.f32 -0.5, %v2333
          %v2561 = vadd.f32 %v2560, 1.0
          %v2562 = vmul.f32 %v2561, %v2333
          %v2563 = vand.u32 2147483647, %v2333
          %vm2564 = vcmp.lt.f32.partialorder %v2563, 0.0004427343
          %v2565 = vsel %vm2564, %v2562, %v2559
          %v2566 = vadd.f32 %v2335, 1.0
          %v2567 = vlog2.pop %v2566
          %v2568 = vmul.f32 %v2567, 0.6931472
          %v2569 = vmul.f32 -0.5, %v2335
          %v2570 = vadd.f32 %v2569, 1.0
          %v2571 = vmul.f32 %v2570, %v2335
          %v2572 = vand.u32 2147483647, %v2335
          %vm2573 = vcmp.lt.f32.partialorder %v2572, 0.0004427343
          %v2574 = vsel %vm2573, %v2571, %v2568
          %v2575 = vadd.f32 %v2337, 1.0
          %v2576 = vlog2.pop %v2575
          %v2577 = vmul.f32 %v2576, 0.6931472
          %v2578 = vmul.f32 -0.5, %v2337
          %v2579 = vadd.f32 %v2578, 1.0
          %v2580 = vmul.f32 %v2579, %v2337
          %v2581 = vand.u32 2147483647, %v2337
          %vm2582 = vcmp.lt.f32.partialorder %v2581, 0.0004427343
          %v2583 = vsel %vm2582, %v2580, %v2577
          %v2584 = vadd.f32 %v2339, 1.0
          %v2585 = vlog2.pop %v2584
          %v2586 = vmul.f32 %v2585, 0.6931472
          %v2587 = vmul.f32 -0.5, %v2339
          %v2588 = vadd.f32 %v2587, 1.0
          %v2589 = vmul.f32 %v2588, %v2339
          %v2590 = vand.u32 2147483647, %v2339
          %vm2591 = vcmp.lt.f32.partialorder %v2590, 0.0004427343
          %v2592 = vsel %vm2591, %v2589, %v2586
          %v2593 = vadd.f32 %v2341, 1.0
          %v2594 = vlog2.pop %v2593
          %v2595 = vmul.f32 %v2594, 0.6931472
          %v2596 = vmul.f32 -0.5, %v2341
          %v2597 = vadd.f32 %v2596, 1.0
          %v2598 = vmul.f32 %v2597, %v2341
          %v2599 = vand.u32 2147483647, %v2341
          %vm2600 = vcmp.lt.f32.partialorder %v2599, 0.0004427343
          %v2601 = vsel %vm2600, %v2598, %v2595
          %v2602 = vadd.f32 %v2343, 1.0
          %v2603 = vlog2.pop %v2602
          %v2604 = vmul.f32 %v2603, 0.6931472
          %v2605 = vmul.f32 -0.5, %v2343
          %v2606 = vadd.f32 %v2605, 1.0
          %v2607 = vmul.f32 %v2606, %v2343
          %v2608 = vand.u32 2147483647, %v2343
          %vm2609 = vcmp.lt.f32.partialorder %v2608, 0.0004427343
          %v2610 = vsel %vm2609, %v2607, %v2604
          %v2611 = vadd.f32 %v2345, 1.0
          %v2612 = vlog2.pop %v2611
          %v2613 = vmul.f32 %v2612, 0.6931472
          %v2614 = vmul.f32 -0.5, %v2345
          %v2615 = vadd.f32 %v2614, 1.0
          %v2616 = vmul.f32 %v2615, %v2345
          %v2617 = vand.u32 2147483647, %v2345
          %vm2618 = vcmp.lt.f32.partialorder %v2617, 0.0004427343
          %v2619 = vsel %vm2618, %v2616, %v2613
          %v2620 = vadd.f32 %v2347, 1.0
          %v2621 = vlog2.pop %v2620
          %v2622 = vmul.f32 %v2621, 0.6931472
          %v2623 = vmul.f32 -0.5, %v2347
          %v2624 = vadd.f32 %v2623, 1.0
          %v2625 = vmul.f32 %v2624, %v2347
          %v2626 = vand.u32 2147483647, %v2347
          %vm2627 = vcmp.lt.f32.partialorder %v2626, 0.0004427343
          %v2628 = vsel %vm2627, %v2625, %v2622
          %v2629 = vadd.f32 %v2349, 1.0
          %v2630 = vlog2.pop %v2629
          %v2631 = vmul.f32 %v2630, 0.6931472
          %v2632 = vmul.f32 -0.5, %v2349
          %v2633 = vadd.f32 %v2632, 1.0
          %v2634 = vmul.f32 %v2633, %v2349
          %v2635 = vand.u32 2147483647, %v2349
          %vm2636 = vcmp.lt.f32.partialorder %v2635, 0.0004427343
          %v2637 = vsel %vm2636, %v2634, %v2631
          %v2638 = vadd.f32 %v2190, %v2358
          %v2639 = vadd.f32 %v2191, %v2367
          %v2640 = vadd.f32 %v2192, %v2376
          %v2641 = vadd.f32 %v2193, %v2385
          %v2642 = vadd.f32 %v2194, %v2394
          %v2643 = vadd.f32 %v2195, %v2403
          %v2644 = vadd.f32 %v2196, %v2412
          %v2645 = vadd.f32 %v2197, %v2421
          %v2646 = vadd.f32 %v2198, %v2430
          %v2647 = vadd.f32 %v2199, %v2439
          %v2648 = vadd.f32 %v2200, %v2448
          %v2649 = vadd.f32 %v2201, %v2457
          %v2650 = vadd.f32 %v2202, %v2466
          %v2651 = vadd.f32 %v2203, %v2475
          %v2652 = vadd.f32 %v2204, %v2484
          %v2653 = vadd.f32 %v2205, %v2493
          %v2654 = vadd.f32 %v2206, %v2502
          %v2655 = vadd.f32 %v2207, %v2511
          %v2656 = vadd.f32 %v2208, %v2520
          %v2657 = vadd.f32 %v2209, %v2529
          %v2658 = vadd.f32 %v2210, %v2538
          %v2659 = vadd.f32 %v2211, %v2547
          %v2660 = vadd.f32 %v2212, %v2556
          %v2661 = vadd.f32 %v2213, %v2565
          %v2662 = vadd.f32 %v2214, %v2574
          %v2663 = vadd.f32 %v2215, %v2583
          %v2664 = vadd.f32 %v2216, %v2592
          %v2665 = vadd.f32 %v2217, %v2601
          %v2666 = vadd.f32 %v2218, %v2610
          %v2667 = vadd.f32 %v2219, %v2619
          %v2668 = vadd.f32 %v2220, %v2628
          %v2669 = vadd.f32 %v2221, %v2637
          %v2670 = vmul.f32 %v2190, 1.442695
          %v2671 = vpow.pop %v2670
          %v2672 = vmul.f32 %v2191, 1.442695
          %v2673 = vpow.pop %v2672
          %v2674 = vmul.f32 %v2192, 1.442695
          %v2675 = vpow.pop %v2674
          %v2676 = vmul.f32 %v2193, 1.442695
          %v2677 = vpow.pop %v2676
          %v2678 = vmul.f32 %v2194, 1.442695
          %v2679 = vpow.pop %v2678
          %v2680 = vmul.f32 %v2195, 1.442695
          %v2681 = vpow.pop %v2680
          %v2682 = vmul.f32 %v2196, 1.442695
          %v2683 = vpow.pop %v2682
          %v2684 = vmul.f32 %v2197, 1.442695
          %v2685 = vpow.pop %v2684
          %v2686 = vmul.f32 %v2198, 1.442695
          %v2687 = vpow.pop %v2686
          %v2688 = vmul.f32 %v2199, 1.442695
          %v2689 = vpow.pop %v2688
          %v2690 = vmul.f32 %v2200, 1.442695
          %v2691 = vpow.pop %v2690
          %v2692 = vmul.f32 %v2201, 1.442695
          %v2693 = vpow.pop %v2692
          %v2694 = vmul.f32 %v2202, 1.442695
          %v2695 = vpow.pop %v2694
          %v2696 = vmul.f32 %v2203, 1.442695
          %v2697 = vpow.pop %v2696
          %v2698 = vmul.f32 %v2204, 1.442695
          %v2699 = vpow.pop %v2698
          %v2700 = vmul.f32 %v2205, 1.442695
          %v2701 = vpow.pop %v2700
          %v2702 = vmul.f32 %v2206, 1.442695
          %v2703 = vpow.pop %v2702
          %v2704 = vmul.f32 %v2207, 1.442695
          %v2705 = vpow.pop %v2704
          %v2706 = vmul.f32 %v2208, 1.442695
          %v2707 = vpow.pop %v2706
          %v2708 = vmul.f32 %v2209, 1.442695
          %v2709 = vpow.pop %v2708
          %v2710 = vmul.f32 %v2210, 1.442695
          %v2711 = vpow.pop %v2710
          %v2712 = vmul.f32 %v2211, 1.442695
          %v2713 = vpow.pop %v2712
          %v2714 = vmul.f32 %v2212, 1.442695
          %v2715 = vpow.pop %v2714
          %v2716 = vmul.f32 %v2213, 1.442695
          %v2717 = vpow.pop %v2716
          %v2718 = vmul.f32 %v2214, 1.442695
          %v2719 = vpow.pop %v2718
          %v2720 = vmul.f32 %v2215, 1.442695
          %v2721 = vpow.pop %v2720
          %v2722 = vmul.f32 %v2216, 1.442695
          %v2723 = vpow.pop %v2722
          %v2724 = vmul.f32 %v2217, 1.442695
          %v2725 = vpow.pop %v2724
          %v2726 = vmul.f32 %v2218, 1.442695
          %v2727 = vpow.pop %v2726
          %v2728 = vmul.f32 %v2219, 1.442695
          %v2729 = vpow.pop %v2728
          %v2730 = vmul.f32 %v2220, 1.442695
          %v2731 = vpow.pop %v2730
          %v2732 = vmul.f32 %v2221, 1.442695
          %v2733 = vpow.pop %v2732
          %v2734 = vadd.f32 %v2671, 1.0
          %v2735 = vlog2.pop %v2734
          %v2736 = vmul.f32 %v2735, 0.6931472
          %v2737 = vmul.f32 -0.5, %v2671
          %v2738 = vadd.f32 %v2737, 1.0
          %v2739 = vmul.f32 %v2738, %v2671
          %v2740 = vand.u32 2147483647, %v2671
          %vm2741 = vcmp.lt.f32.partialorder %v2740, 0.0004427343
          %v2742 = vsel %vm2741, %v2739, %v2736
          %v2743 = vadd.f32 %v2673, 1.0
          %v2744 = vlog2.pop %v2743
          %v2745 = vmul.f32 %v2744, 0.6931472
          %v2746 = vmul.f32 -0.5, %v2673
          %v2747 = vadd.f32 %v2746, 1.0
          %v2748 = vmul.f32 %v2747, %v2673
          %v2749 = vand.u32 2147483647, %v2673
          %vm2750 = vcmp.lt.f32.partialorder %v2749, 0.0004427343
          %v2751 = vsel %vm2750, %v2748, %v2745
          %v2752 = vadd.f32 %v2675, 1.0
          %v2753 = vlog2.pop %v2752
          %v2754 = vmul.f32 %v2753, 0.6931472
          %v2755 = vmul.f32 -0.5, %v2675
          %v2756 = vadd.f32 %v2755, 1.0
          %v2757 = vmul.f32 %v2756, %v2675
          %v2758 = vand.u32 2147483647, %v2675
          %vm2759 = vcmp.lt.f32.partialorder %v2758, 0.0004427343
          %v2760 = vsel %vm2759, %v2757, %v2754
          %v2761 = vadd.f32 %v2677, 1.0
          %v2762 = vlog2.pop %v2761
          %v2763 = vmul.f32 %v2762, 0.6931472
          %v2764 = vmul.f32 -0.5, %v2677
          %v2765 = vadd.f32 %v2764, 1.0
          %v2766 = vmul.f32 %v2765, %v2677
          %v2767 = vand.u32 2147483647, %v2677
          %vm2768 = vcmp.lt.f32.partialorder %v2767, 0.0004427343
          %v2769 = vsel %vm2768, %v2766, %v2763
          %v2770 = vadd.f32 %v2679, 1.0
          %v2771 = vlog2.pop %v2770
          %v2772 = vmul.f32 %v2771, 0.6931472
          %v2773 = vmul.f32 -0.5, %v2679
          %v2774 = vadd.f32 %v2773, 1.0
          %v2775 = vmul.f32 %v2774, %v2679
          %v2776 = vand.u32 2147483647, %v2679
          %vm2777 = vcmp.lt.f32.partialorder %v2776, 0.0004427343
          %v2778 = vsel %vm2777, %v2775, %v2772
          %v2779 = vadd.f32 %v2681, 1.0
          %v2780 = vlog2.pop %v2779
          %v2781 = vmul.f32 %v2780, 0.6931472
          %v2782 = vmul.f32 -0.5, %v2681
          %v2783 = vadd.f32 %v2782, 1.0
          %v2784 = vmul.f32 %v2783, %v2681
          %v2785 = vand.u32 2147483647, %v2681
          %vm2786 = vcmp.lt.f32.partialorder %v2785, 0.0004427343
          %v2787 = vsel %vm2786, %v2784, %v2781
          %v2788 = vadd.f32 %v2683, 1.0
          %v2789 = vlog2.pop %v2788
          %v2790 = vmul.f32 %v2789, 0.6931472
          %v2791 = vmul.f32 -0.5, %v2683
          %v2792 = vadd.f32 %v2791, 1.0
          %v2793 = vmul.f32 %v2792, %v2683
          %v2794 = vand.u32 2147483647, %v2683
          %vm2795 = vcmp.lt.f32.partialorder %v2794, 0.0004427343
          %v2796 = vsel %vm2795, %v2793, %v2790
          %v2797 = vadd.f32 %v2685, 1.0
          %v2798 = vlog2.pop %v2797
          %v2799 = vmul.f32 %v2798, 0.6931472
          %v2800 = vmul.f32 -0.5, %v2685
          %v2801 = vadd.f32 %v2800, 1.0
          %v2802 = vmul.f32 %v2801, %v2685
          %v2803 = vand.u32 2147483647, %v2685
          %vm2804 = vcmp.lt.f32.partialorder %v2803, 0.0004427343
          %v2805 = vsel %vm2804, %v2802, %v2799
          %v2806 = vadd.f32 %v2687, 1.0
          %v2807 = vlog2.pop %v2806
          %v2808 = vmul.f32 %v2807, 0.6931472
          %v2809 = vmul.f32 -0.5, %v2687
          %v2810 = vadd.f32 %v2809, 1.0
          %v2811 = vmul.f32 %v2810, %v2687
          %v2812 = vand.u32 2147483647, %v2687
          %vm2813 = vcmp.lt.f32.partialorder %v2812, 0.0004427343
          %v2814 = vsel %vm2813, %v2811, %v2808
          %v2815 = vadd.f32 %v2689, 1.0
          %v2816 = vlog2.pop %v2815
          %v2817 = vmul.f32 %v2816, 0.6931472
          %v2818 = vmul.f32 -0.5, %v2689
          %v2819 = vadd.f32 %v2818, 1.0
          %v2820 = vmul.f32 %v2819, %v2689
          %v2821 = vand.u32 2147483647, %v2689
          %vm2822 = vcmp.lt.f32.partialorder %v2821, 0.0004427343
          %v2823 = vsel %vm2822, %v2820, %v2817
          %v2824 = vadd.f32 %v2691, 1.0
          %v2825 = vlog2.pop %v2824
          %v2826 = vmul.f32 %v2825, 0.6931472
          %v2827 = vmul.f32 -0.5, %v2691
          %v2828 = vadd.f32 %v2827, 1.0
          %v2829 = vmul.f32 %v2828, %v2691
          %v2830 = vand.u32 2147483647, %v2691
          %vm2831 = vcmp.lt.f32.partialorder %v2830, 0.0004427343
          %v2832 = vsel %vm2831, %v2829, %v2826
          %v2833 = vadd.f32 %v2693, 1.0
          %v2834 = vlog2.pop %v2833
          %v2835 = vmul.f32 %v2834, 0.6931472
          %v2836 = vmul.f32 -0.5, %v2693
          %v2837 = vadd.f32 %v2836, 1.0
          %v2838 = vmul.f32 %v2837, %v2693
          %v2839 = vand.u32 2147483647, %v2693
          %vm2840 = vcmp.lt.f32.partialorder %v2839, 0.0004427343
          %v2841 = vsel %vm2840, %v2838, %v2835
          %v2842 = vadd.f32 %v2695, 1.0
          %v2843 = vlog2.pop %v2842
          %v2844 = vmul.f32 %v2843, 0.6931472
          %v2845 = vmul.f32 -0.5, %v2695
          %v2846 = vadd.f32 %v2845, 1.0
          %v2847 = vmul.f32 %v2846, %v2695
          %v2848 = vand.u32 2147483647, %v2695
          %vm2849 = vcmp.lt.f32.partialorder %v2848, 0.0004427343
          %v2850 = vsel %vm2849, %v2847, %v2844
          %v2851 = vadd.f32 %v2697, 1.0
          %v2852 = vlog2.pop %v2851
          %v2853 = vmul.f32 %v2852, 0.6931472
          %v2854 = vmul.f32 -0.5, %v2697
          %v2855 = vadd.f32 %v2854, 1.0
          %v2856 = vmul.f32 %v2855, %v2697
          %v2857 = vand.u32 2147483647, %v2697
          %vm2858 = vcmp.lt.f32.partialorder %v2857, 0.0004427343
          %v2859 = vsel %vm2858, %v2856, %v2853
          %v2860 = vadd.f32 %v2699, 1.0
          %v2861 = vlog2.pop %v2860
          %v2862 = vmul.f32 %v2861, 0.6931472
          %v2863 = vmul.f32 -0.5, %v2699
          %v2864 = vadd.f32 %v2863, 1.0
          %v2865 = vmul.f32 %v2864, %v2699
          %v2866 = vand.u32 2147483647, %v2699
          %vm2867 = vcmp.lt.f32.partialorder %v2866, 0.0004427343
          %v2868 = vsel %vm2867, %v2865, %v2862
          %v2869 = vadd.f32 %v2701, 1.0
          %v2870 = vlog2.pop %v2869
          %v2871 = vmul.f32 %v2870, 0.6931472
          %v2872 = vmul.f32 -0.5, %v2701
          %v2873 = vadd.f32 %v2872, 1.0
          %v2874 = vmul.f32 %v2873, %v2701
          %v2875 = vand.u32 2147483647, %v2701
          %vm2876 = vcmp.lt.f32.partialorder %v2875, 0.0004427343
          %v2877 = vsel %vm2876, %v2874, %v2871
          %v2878 = vadd.f32 %v2703, 1.0
          %v2879 = vlog2.pop %v2878
          %v2880 = vmul.f32 %v2879, 0.6931472
          %v2881 = vmul.f32 -0.5, %v2703
          %v2882 = vadd.f32 %v2881, 1.0
          %v2883 = vmul.f32 %v2882, %v2703
          %v2884 = vand.u32 2147483647, %v2703
          %vm2885 = vcmp.lt.f32.partialorder %v2884, 0.0004427343
          %v2886 = vsel %vm2885, %v2883, %v2880
          %v2887 = vadd.f32 %v2705, 1.0
          %v2888 = vlog2.pop %v2887
          %v2889 = vmul.f32 %v2888, 0.6931472
          %v2890 = vmul.f32 -0.5, %v2705
          %v2891 = vadd.f32 %v2890, 1.0
          %v2892 = vmul.f32 %v2891, %v2705
          %v2893 = vand.u32 2147483647, %v2705
          %vm2894 = vcmp.lt.f32.partialorder %v2893, 0.0004427343
          %v2895 = vsel %vm2894, %v2892, %v2889
          %v2896 = vadd.f32 %v2707, 1.0
          %v2897 = vlog2.pop %v2896
          %v2898 = vmul.f32 %v2897, 0.6931472
          %v2899 = vmul.f32 -0.5, %v2707
          %v2900 = vadd.f32 %v2899, 1.0
          %v2901 = vmul.f32 %v2900, %v2707
          %v2902 = vand.u32 2147483647, %v2707
          %vm2903 = vcmp.lt.f32.partialorder %v2902, 0.0004427343
          %v2904 = vsel %vm2903, %v2901, %v2898
          %v2905 = vadd.f32 %v2709, 1.0
          %v2906 = vlog2.pop %v2905
          %v2907 = vmul.f32 %v2906, 0.6931472
          %v2908 = vmul.f32 -0.5, %v2709
          %v2909 = vadd.f32 %v2908, 1.0
          %v2910 = vmul.f32 %v2909, %v2709
          %v2911 = vand.u32 2147483647, %v2709
          %vm2912 = vcmp.lt.f32.partialorder %v2911, 0.0004427343
          %v2913 = vsel %vm2912, %v2910, %v2907
          %v2914 = vadd.f32 %v2711, 1.0
          %v2915 = vlog2.pop %v2914
          %v2916 = vmul.f32 %v2915, 0.6931472
          %v2917 = vmul.f32 -0.5, %v2711
          %v2918 = vadd.f32 %v2917, 1.0
          %v2919 = vmul.f32 %v2918, %v2711
          %v2920 = vand.u32 2147483647, %v2711
          %vm2921 = vcmp.lt.f32.partialorder %v2920, 0.0004427343
          %v2922 = vsel %vm2921, %v2919, %v2916
          %v2923 = vadd.f32 %v2713, 1.0
          %v2924 = vlog2.pop %v2923
          %v2925 = vmul.f32 %v2924, 0.6931472
          %v2926 = vmul.f32 -0.5, %v2713
          %v2927 = vadd.f32 %v2926, 1.0
          %v2928 = vmul.f32 %v2927, %v2713
          %v2929 = vand.u32 2147483647, %v2713
          %vm2930 = vcmp.lt.f32.partialorder %v2929, 0.0004427343
          %v2931 = vsel %vm2930, %v2928, %v2925
          %v2932 = vadd.f32 %v2715, 1.0
          %v2933 = vlog2.pop %v2932
          %v2934 = vmul.f32 %v2933, 0.6931472
          %v2935 = vmul.f32 -0.5, %v2715
          %v2936 = vadd.f32 %v2935, 1.0
          %v2937 = vmul.f32 %v2936, %v2715
          %v2938 = vand.u32 2147483647, %v2715
          %vm2939 = vcmp.lt.f32.partialorder %v2938, 0.0004427343
          %v2940 = vsel %vm2939, %v2937, %v2934
          %v2941 = vadd.f32 %v2717, 1.0
          %v2942 = vlog2.pop %v2941
          %v2943 = vmul.f32 %v2942, 0.6931472
          %v2944 = vmul.f32 -0.5, %v2717
          %v2945 = vadd.f32 %v2944, 1.0
          %v2946 = vmul.f32 %v2945, %v2717
          %v2947 = vand.u32 2147483647, %v2717
          %vm2948 = vcmp.lt.f32.partialorder %v2947, 0.0004427343
          %v2949 = vsel %vm2948, %v2946, %v2943
          %v2950 = vadd.f32 %v2719, 1.0
          %v2951 = vlog2.pop %v2950
          %v2952 = vmul.f32 %v2951, 0.6931472
          %v2953 = vmul.f32 -0.5, %v2719
          %v2954 = vadd.f32 %v2953, 1.0
          %v2955 = vmul.f32 %v2954, %v2719
          %v2956 = vand.u32 2147483647, %v2719
          %vm2957 = vcmp.lt.f32.partialorder %v2956, 0.0004427343
          %v2958 = vsel %vm2957, %v2955, %v2952
          %v2959 = vadd.f32 %v2721, 1.0
          %v2960 = vlog2.pop %v2959
          %v2961 = vmul.f32 %v2960, 0.6931472
          %v2962 = vmul.f32 -0.5, %v2721
          %v2963 = vadd.f32 %v2962, 1.0
          %v2964 = vmul.f32 %v2963, %v2721
          %v2965 = vand.u32 2147483647, %v2721
          %vm2966 = vcmp.lt.f32.partialorder %v2965, 0.0004427343
          %v2967 = vsel %vm2966, %v2964, %v2961
          %v2968 = vadd.f32 %v2723, 1.0
          %v2969 = vlog2.pop %v2968
          %v2970 = vmul.f32 %v2969, 0.6931472
          %v2971 = vmul.f32 -0.5, %v2723
          %v2972 = vadd.f32 %v2971, 1.0
          %v2973 = vmul.f32 %v2972, %v2723
          %v2974 = vand.u32 2147483647, %v2723
          %vm2975 = vcmp.lt.f32.partialorder %v2974, 0.0004427343
          %v2976 = vsel %vm2975, %v2973, %v2970
          %v2977 = vadd.f32 %v2725, 1.0
          %v2978 = vlog2.pop %v2977
          %v2979 = vmul.f32 %v2978, 0.6931472
          %v2980 = vmul.f32 -0.5, %v2725
          %v2981 = vadd.f32 %v2980, 1.0
          %v2982 = vmul.f32 %v2981, %v2725
          %v2983 = vand.u32 2147483647, %v2725
          %vm2984 = vcmp.lt.f32.partialorder %v2983, 0.0004427343
          %v2985 = vsel %vm2984, %v2982, %v2979
          %v2986 = vadd.f32 %v2727, 1.0
          %v2987 = vlog2.pop %v2986
          %v2988 = vmul.f32 %v2987, 0.6931472
          %v2989 = vmul.f32 -0.5, %v2727
          %v2990 = vadd.f32 %v2989, 1.0
          %v2991 = vmul.f32 %v2990, %v2727
          %v2992 = vand.u32 2147483647, %v2727
          %vm2993 = vcmp.lt.f32.partialorder %v2992, 0.0004427343
          %v2994 = vsel %vm2993, %v2991, %v2988
          %v2995 = vadd.f32 %v2729, 1.0
          %v2996 = vlog2.pop %v2995
          %v2997 = vmul.f32 %v2996, 0.6931472
          %v2998 = vmul.f32 -0.5, %v2729
          %v2999 = vadd.f32 %v2998, 1.0
          %v3000 = vmul.f32 %v2999, %v2729
          %v3001 = vand.u32 2147483647, %v2729
          %vm3002 = vcmp.lt.f32.partialorder %v3001, 0.0004427343
          %v3003 = vsel %vm3002, %v3000, %v2997
          %v3004 = vadd.f32 %v2731, 1.0
          %v3005 = vlog2.pop %v3004
          %v3006 = vmul.f32 %v3005, 0.6931472
          %v3007 = vmul.f32 -0.5, %v2731
          %v3008 = vadd.f32 %v3007, 1.0
          %v3009 = vmul.f32 %v3008, %v2731
          %v3010 = vand.u32 2147483647, %v2731
          %vm3011 = vcmp.lt.f32.partialorder %v3010, 0.0004427343
          %v3012 = vsel %vm3011, %v3009, %v3006
          %v3013 = vadd.f32 %v2733, 1.0
          %v3014 = vlog2.pop %v3013
          %v3015 = vmul.f32 %v3014, 0.6931472
          %v3016 = vmul.f32 -0.5, %v2733
          %v3017 = vadd.f32 %v3016, 1.0
          %v3018 = vmul.f32 %v3017, %v2733
          %v3019 = vand.u32 2147483647, %v2733
          %vm3020 = vcmp.lt.f32.partialorder %v3019, 0.0004427343
          %v3021 = vsel %vm3020, %v3018, %v3015
          %v3022 = vsel %vm2222, %v2638, %v2742
          %v3023 = vsel %vm2223, %v2639, %v2751
          %v3024 = vsel %vm2224, %v2640, %v2760
          %v3025 = vsel %vm2225, %v2641, %v2769
          %v3026 = vsel %vm2226, %v2642, %v2778
          %v3027 = vsel %vm2227, %v2643, %v2787
          %v3028 = vsel %vm2228, %v2644, %v2796
          %v3029 = vsel %vm2229, %v2645, %v2805
          %v3030 = vsel %vm2230, %v2646, %v2814
          %v3031 = vsel %vm2231, %v2647, %v2823
          %v3032 = vsel %vm2232, %v2648, %v2832
          %v3033 = vsel %vm2233, %v2649, %v2841
          %v3034 = vsel %vm2234, %v2650, %v2850
          %v3035 = vsel %vm2235, %v2651, %v2859
          %v3036 = vsel %vm2236, %v2652, %v2868
          %v3037 = vsel %vm2237, %v2653, %v2877
          %v3038 = vsel %vm2238, %v2654, %v2886
          %v3039 = vsel %vm2239, %v2655, %v2895
          %v3040 = vsel %vm2240, %v2656, %v2904
          %v3041 = vsel %vm2241, %v2657, %v2913
          %v3042 = vsel %vm2242, %v2658, %v2922
          %v3043 = vsel %vm2243, %v2659, %v2931
          %v3044 = vsel %vm2244, %v2660, %v2940
          %v3045 = vsel %vm2245, %v2661, %v2949
          %v3046 = vsel %vm2246, %v2662, %v2958
          %v3047 = vsel %vm2247, %v2663, %v2967
          %v3048 = vsel %vm2248, %v2664, %v2976
          %v3049 = vsel %vm2249, %v2665, %v2985
          %v3050 = vsel %vm2250, %v2666, %v2994
          %v3051 = vsel %vm2251, %v2667, %v3003
          %v3052 = vsel %vm2252, %v2668, %v3012
          %v3053 = vsel %vm2253, %v2669, %v3021
          %v3054 = vsel %vm2189, 1, 0
          %v3055 = vcvt.s32.f32 %v3054
          %v3056 = vsel %vm1857, %v3055, 0.0
          %3057 = vadd.xlane.f32.xlu0 %v3056
          %v3058 = vpop.xlane.xlu0 %3057
          %v3091 = vperm.slane %v3022, %v1847
          %v3092 = vperm.slane %v3023, %v1988
          %v3093 = vsel %vm1990, %v3092, %v3091
          %v3094 = vperm.slane %v3024, %v1992
          %v3095 = vsel %vm1994, %v3094, %v3093
          %v3096 = vperm.slane %v3025, %v1996
          %v3097 = vsel %vm1998, %v3096, %v3095
          %v3098 = vperm.slane %v3026, %v2000
          %v3099 = vsel %vm2002, %v3098, %v3097
          %v3100 = vperm.slane %v3027, %v2004
          %v3101 = vsel %vm2006, %v3100, %v3099
          %v3102 = vperm.slane %v3028, %v2008
          %v3103 = vsel %vm2010, %v3102, %v3101
          %v3104 = vperm.slane %v3029, %v2012
          %v3105 = vsel %vm2014, %v3104, %v3103
          %v3106 = vperm.slane %v3030, %v2016
          %v3107 = vsel %vm2018, %v3106, %v3105
          %v3108 = vperm.slane %v3031, %v2020
          %v3109 = vsel %vm2022, %v3108, %v3107
          %v3110 = vperm.slane %v3032, %v2024
          %v3111 = vsel %vm2026, %v3110, %v3109
          %v3112 = vperm.slane %v3033, %v2028
          %v3113 = vsel %vm2030, %v3112, %v3111
          %v3114 = vperm.slane %v3034, %v2032
          %v3115 = vsel %vm2034, %v3114, %v3113
          %v3116 = vperm.slane %v3035, %v2036
          %v3117 = vsel %vm2038, %v3116, %v3115
          %v3118 = vperm.slane %v3036, %v2040
          %v3119 = vsel %vm2042, %v3118, %v3117
          %v3120 = vperm.slane %v3037, %v2044
          %v3121 = vsel %vm2046, %v3120, %v3119
          %v3122 = vperm.slane %v3038, %v1847
          %v3123 = vperm.slane %v3039, %v1988
          %v3124 = vsel %vm1990, %v3123, %v3122
          %v3125 = vperm.slane %v3040, %v1992
          %v3126 = vsel %vm1994, %v3125, %v3124
          %v3127 = vperm.slane %v3041, %v1996
          %v3128 = vsel %vm1998, %v3127, %v3126
          %v3129 = vperm.slane %v3042, %v2000
          %v3130 = vsel %vm2002, %v3129, %v3128
          %v3131 = vperm.slane %v3043, %v2004
          %v3132 = vsel %vm2006, %v3131, %v3130
          %v3133 = vperm.slane %v3044, %v2008
          %v3134 = vsel %vm2010, %v3133, %v3132
          %v3135 = vperm.slane %v3045, %v2012
          %v3136 = vsel %vm2014, %v3135, %v3134
          %v3137 = vperm.slane %v3046, %v2016
          %v3138 = vsel %vm2018, %v3137, %v3136
          %v3139 = vperm.slane %v3047, %v2020
          %v3140 = vsel %vm2022, %v3139, %v3138
          %v3141 = vperm.slane %v3048, %v2024
          %v3142 = vsel %vm2026, %v3141, %v3140
          %v3143 = vperm.slane %v3049, %v2028
          %v3144 = vsel %vm2030, %v3143, %v3142
          %v3145 = vperm.slane %v3050, %v2032
          %v3146 = vsel %vm2034, %v3145, %v3144
          %v3147 = vperm.slane %v3051, %v2036
          %v3148 = vsel %vm2038, %v3147, %v3146
          %v3149 = vperm.slane %v3052, %v2040
          %v3150 = vsel %vm2042, %v3149, %v3148
          %v3151 = vperm.slane %v3053, %v2044
          %v3152 = vsel %vm2046, %v3151, %v3150
          %v3153 = vsel %vm2079, %v3152, %v3121
          %v3155 = vsel %vm2189, %v3153, 0.0
          %v3156 = vsel %vm1857, %v3155, 0.0
          %3157 = vadd.xlane.f32.xlu0 %v3156
          %v3158 = vpop.xlane.xlu0 %3157
          %v3159 = vrcp.pop %v3058
          %v3160 = vmul.f32 %v3058, %v3159
          %v3161 = vsub.f32 1.0, %v3160
          %v3162 = vmul.f32 %v3159, %v3161
          %v3163 = vadd.f32 %v3159, %v3162
          %vm3164 = vweird.f32 %v3058
          %vm3165 = vweird.f32 %v3159
          %vm3166 = vmor %vm3164, %vm3165
          %v3167 = vsel %vm3166, %v3159, %v3163
          %v3168 = vand.u32 2147483647, %v3058
          %vm3169 = vcmp.eq.f32.partialorder %v3168, 8.507059e+37
          %v3170 = vand.u32 %v3058, 2147483648
          %v3171 = vor.u32 1.1754944e-38, %v3170
          %v3172 = vsel %vm3169, %v3171, %v3167
          %v3173 = vmul.f32 %v3158, %v3172
          %v3174 = vlaneseq
          %v3175 = vshrl.u32 %v3174, 7
          %vm3176 = vcmp.eq.s32.totalorder %v3175, 0
          %vm3177 = vcmp.eq.s32.totalorder %v1847, 0
          %vm3178 = vmand %vm3176, %vm3177
          %v3180 = vperm.slane %v3173, 0
          %v3181 = vperm.slane %v3173, 1
          %v3184 = vsel %vm3178, %v3180, 0.0
          %v3185 = vsel %vm3178, %v3181, 0.0
          %vm3186 = vcmp.eq.s32.totalorder %v1847, 1
          %vm3187 = vmand %vm3176, %vm3186
          %v3189 = vperm.slane %v2085, 0
          %v3190 = vperm.slane %v2085, 1
          %v3193 = vsel %vm3187, %v3189, 0.0
          %v3194 = vsel %vm3187, %v3190, 0.0
          %v3195 = vadd.f32 %v3184, %v3193
          %v3196 = vadd.f32 %v3185, %v3194
          %vm3197 = vcmp.eq.s32.totalorder %v1847, 2
          %vm3198 = vmand %vm3176, %vm3197
          %v3200 = vperm.slane %v2186, 0
          %v3201 = vperm.slane %v2186, 1
          %v3204 = vsel %vm3198, %v3200, 0.0
          %v3205 = vsel %vm3198, %v3201, 0.0
          %v3206 = vadd.f32 %v3195, %v3204
          %v3207 = vadd.f32 %v3196, %v3205
          %3208 = vst [vmem:[%s350] sm:$0xff] %v3206
          %3209 = vst [vmem:[%s350 + $0x8] sm:$0xff] %v3207
        $region56: #{tpu_custom_call.1} parent=35 // pred_fallthru
          _
        %s3210 = sand.u32 %s143, 1
        %s3211 = scalar_lea.sflag [#allocation5], %s3210
        %s3212 = sand.u32 %s143, 1
        %s3213 = smul.addr %s3212, 16
        %s3214 = scalar_lea.vmem [#allocation10], %s3213
        // Predicated region
        $region57: #{tpu_custom_call.1} parent=35 // pred_check
          %p3215 = pneg %p153
        $region58: #{tpu_custom_call.1} parent=35 // pred_check_branch
          %3217 = sbr.rel (%p3215) target = $region60
        $region59: #{tpu_custom_call.1} parent=35 // pred_region
          %s3218 = smul.u32 2, %s26
          %3220 = vsyncadd %s3211, 0
          %s3221 = smul.addr %s3218, 8
          %s3222 = scalar_lea.hbm %s4, %s3221
          %s3223 = sshll.u32 %s3214, 4
          %s3224 = int_to_ptr.vmem [resolvable:$true] %s3223
          %s3225 = sshll.u32 %s3222, 4
          %s3226 = int_to_ptr.hbm [resolvable:$true] %s3225
          %3231 = dma.vmem_to_hbm [thread:$0]  %s3224, 256, %s3226, %s3211, 128, 128, 8
        $region60: #{tpu_custom_call.1} parent=35 // pred_fallthru
          _
      $region36: #{tpu_custom_call.1} parent=5 // pred_fallthru
        _
      %p3232 = scmp.le.s32.totalorder 2, %s17
      // Predicated region
      $region61: #{tpu_custom_call.1} parent=5 // pred_check
        %p3233 = pneg %p3232
      $region62: #{tpu_custom_call.1} parent=5 // pred_check_branch
        %3235 = sbr.rel (%p3233) target = $region64
      $region63: #{tpu_custom_call.1} parent=5 // pred_region
        %s3236 = ssub.s32 %s17, 2
        // Predicated region
        $region65: #{tpu_custom_call.1} parent=63 // pred_check
          %p3237 = pneg %p159
        $region66: #{tpu_custom_call.1} parent=63 // pred_check_branch
          %3239 = sbr.rel (%p3237) target = $region68
        $region67: #{tpu_custom_call.1} parent=63 // pred_region
          %s3240 = sand.u32 %s144, 1
          %s3241 = scalar_lea.sflag [#allocation5], %s3240
          %s3242 = sand.u32 %s144, 1
          %s3243 = smul.addr %s3242, 16
          %s3244 = scalar_lea.vmem [#allocation10], %s3243
          %3246 = dma.done %s3241, 256
        $region68: #{tpu_custom_call.1} parent=63 // pred_fallthru
          _
      $region64: #{tpu_custom_call.1} parent=5 // pred_fallthru
        _
    $region6: #{tpu_custom_call.1} parent=1 // loop_footer
      %s21 = sadd.s32 1, %s17
    $region7: #{tpu_custom_call.1} parent=1 // loop_footer_branch
      %16 = sbr.rel target = $region3
    $region8: #{tpu_custom_call.1} parent=1 // loop_exit
      _
    %3247 = vsyncpa [#allocation4], 1
    %s3248 = scalar_lea.sflag [#allocation4], 1
    %3249 = vsyncpa %s3248, 1
    %3250 = vsyncpa [#allocation7], 1
    %3251 = vsyncpa [#allocation5], 1
    %s3252 = scalar_lea.sflag [#allocation5], 1
    %3253 = vsyncpa %s3252, 1

</llo_original>
